<compile_context>
chip_gen: v7x
topology: tpu7x:2x2x1
jax: 0.10.0
libtpu: 0.0.40
codegen_flags: <defaults>
</compile_context>

<pallas_src>
import math

import numpy as np
import jax
import jax.numpy as jnp
from jax.experimental import pallas as pl
from jax.experimental.pallas import tpu as pltpu

NUM_HEADS = 4
NUM_LAYERS = 2
LN_EPS = 1e-5


# ---------------------------------------------------------------------------
# slab packing helpers (shared by init_params and the kernel)
# ---------------------------------------------------------------------------
def _pad128(n):
    return ((n + 127) // 128) * 128


def _slab_offsets(widths):
    """128-lane-aligned slot offsets for a list of segment widths."""
    offs, o = [], 0
    for w in widths:
        offs.append(o)
        o += _pad128(w)
    return offs, o


def _pack_slab(parts):
    """Concat along the last axis, padding each part's last dim to a 128 multiple."""
    padded = []
    for p in parts:
        pw = _pad128(p.shape[-1])
        if pw != p.shape[-1]:
            cfg = [(0, 0)] * (p.ndim - 1) + [(0, pw - p.shape[-1])]
            p = jnp.pad(p, cfg)
        padded.append(p)
    return jnp.concatenate(padded, axis=-1)


def _layer_norm(y, g, b):
    """y: (B,S,E), g/b: (1,E) f32."""
    mu = jnp.mean(y, axis=-1, keepdims=True)
    var = jnp.mean((y - mu) ** 2, axis=-1, keepdims=True)
    return (y - mu) * jax.lax.rsqrt(var + LN_EPS) * g[None] + b[None]


# ---------------------------------------------------------------------------
# kernel
# ---------------------------------------------------------------------------
def pop_embedder_kernel(x_in_ref, w_in_ref, b_in_ref, pe_ref, mask_ref,
                        w_slab_ref, w2_ref, p_slab_ref, out_ref):
    """One grid step == one post-norm TransformerEncoderLayer (layer = program_id(0))."""
    l = pl.program_id(0)
    B, S, T = x_in_ref.shape
    E = pe_ref.shape[1]
    F = w2_ref.shape[0]
    H = NUM_HEADS
    Dh = E // H

    # static (trace-time) slab offsets, must match init_params() packing order
    (O_WQKV, O_WO, O_W1), _ = _slab_offsets([3 * E, E, F])
    (O_BQKV, O_BO, O_G1, O_BE1, O_B1, O_B2, O_G2, O_BE2), _ = \
        _slab_offsets([3 * E, E, E, E, F, E, E, E])

    def wdot(x_bf16, w_bf16, b_f32):
        """bf16 activations @ bf16 weights (f32 accumulate) + f32 bias."""
        return jnp.dot(x_bf16, w_bf16, preferred_element_type=jnp.float32) + b_f32

    # ---- layer-0 prologue: TimeDistributed(Linear(T -> E)) + positional encoding ----
    @pl.when(l == 0)
    def _embed():
        # TimeDistributed semantics: view (B, S, T) as (B*S, T), apply Linear, view back.
        x0 = wdot(x_in_ref[...].reshape(B * S, T).astype(jnp.bfloat16),
                  w_in_ref[...], b_in_ref[...]).reshape(B, S, E)
        out_ref[...] = x0 + pe_ref[...][None]          # dropout == identity at eval

    x = out_ref[...]                                   # (B,S,E), resident across layer steps
    x2 = x.reshape(B * S, E).astype(jnp.bfloat16)

    # ---- multi-head self attention (fused QKV; 1/sqrt(Dh) folded into Wq/bq) ----
    qkv = wdot(x2, w_slab_ref[:, O_WQKV:O_WQKV + 3 * E],
               p_slab_ref[:, O_BQKV:O_BQKV + 3 * E])          # (B*S, 3E) f32
    qkv = qkv.astype(jnp.bfloat16).reshape(B, S, 3 * E)

    # head fold -> (H*B, S, Dh); single-batch-dim 3-D einsums (proven Mosaic path)
    qh = jnp.concatenate([qkv[:, :,          h * Dh:          (h + 1) * Dh] for h in range(H)], axis=0)
    kh = jnp.concatenate([qkv[:, :,     E + h * Dh:     E + (h + 1) * Dh] for h in range(H)], axis=0)
    vh = jnp.concatenate([qkv[:, :, 2 * E + h * Dh: 2 * E + (h + 1) * Dh] for h in range(H)], axis=0)

    s = jnp.einsum('bqd,bkd->bqk', qh, kh, preferred_element_type=jnp.float32)
    s = s + mask_ref[...][None]                        # (S,S) -> (H*B,S,S) broadcast, once
    s = s - jnp.max(s, axis=-1, keepdims=True)
    p = jnp.exp(s)
    p = p * pl.reciprocal(jnp.sum(p, axis=-1, keepdims=True), approx=True)
    ctx = jnp.einsum('bqk,bkd->bqd', p.astype(jnp.bfloat16), vh,
                     preferred_element_type=jnp.float32)      # (H*B, S, Dh)

    # concat heads back along features, single out-projection matmul
    ctx_cat = jnp.concatenate([ctx[h * B:(h + 1) * B] for h in range(H)], axis=-1)  # (B,S,E)
    attn = wdot(ctx_cat.reshape(B * S, E).astype(jnp.bfloat16),
                w_slab_ref[:, O_WO:O_WO + E],
                p_slab_ref[:, O_BO:O_BO + E]).reshape(B, S, E)

    x = _layer_norm(x + attn,
                    p_slab_ref[:, O_G1:O_G1 + E], p_slab_ref[:, O_BE1:O_BE1 + E])

    # ---- feed-forward: Linear -> ReLU -> Linear ----
    h1 = wdot(x.reshape(B * S, E).astype(jnp.bfloat16),
              w_slab_ref[:, O_W1:O_W1 + F], p_slab_ref[:, O_B1:O_B1 + F])
    h1 = jnp.maximum(h1, 0.0)
    ff = wdot(h1.astype(jnp.bfloat16), w2_ref[...],
              p_slab_ref[:, O_B2:O_B2 + E]).reshape(B, S, E)

    x = _layer_norm(x + ff,
                    p_slab_ref[:, O_G2:O_G2 + E], p_slab_ref[:, O_BE2:O_BE2 + E])

    out_ref[...] = x                                    # carried to next layer / final output


# ---------------------------------------------------------------------------
# host-side constants & params
# ---------------------------------------------------------------------------
def positional_encoding(S, E):
    pos = jnp.arange(S, dtype=jnp.float32)[:, None]
    div = jnp.exp(jnp.arange(0, E, 2, dtype=jnp.float32) * (-math.log(10000.0) / E))
    pe = jnp.zeros((S, E), jnp.float32)
    pe = pe.at[:, 0::2].set(jnp.sin(pos * div))
    pe = pe.at[:, 1::2].set(jnp.cos(pos * div))
    return pe


def encoder_mask(S, forecast_horizon):
    split = math.gcd(S, forecast_horizon)
    m = np.full((S, S), -1e30, dtype=np.float32)   # -inf semantics (softmax weight -> 0)
    for i in range(0, S, split):
        m[i:i + split, i:i + split] = 0.0
    # guard: every row keeps at least one unmasked entry (softmax stays well-defined)
    assert np.all(np.any(m == 0.0, axis=-1)), "fully-masked row in encoder mask"
    return jnp.asarray(m)


def init_params(key, num_trends, embedding_dim, dim_ff):
    E, T, F, L, H = embedding_dim, num_trends, dim_ff, NUM_LAYERS, NUM_HEADS
    scale = 1.0 / math.sqrt(E // H)
    ks = jax.random.split(key, 12)

    def w(k, shape, s=0.02):
        return (s * jax.random.normal(k, shape)).astype(jnp.float32)

    # 1/sqrt(Dh) folded into the query projection (weights AND bias) at init time.
    wq, bq = w(ks[2], (L, E, E)) * scale, w(ks[3], (L, 1, E)) * scale
    wk, bk = w(ks[4], (L, E, E)), w(ks[5], (L, 1, E))
    wv, bv = w(ks[6], (L, E, E)), w(ks[7], (L, 1, E))
    wqkv = jnp.concatenate([wq, wk, wv], axis=-1)          # (L, E, 3E)
    bqkv = jnp.concatenate([bq, bk, bv], axis=-1)          # (L, 1, 3E)

    wo, bo = w(ks[8], (L, E, E)), w(ks[9], (L, 1, E))
    w1, b1 = w(ks[10], (L, E, F)), jnp.zeros((L, 1, F), jnp.float32)
    w2, b2 = w(ks[11], (L, F, E)), jnp.zeros((L, 1, E), jnp.float32)
    ln_g = jnp.ones((L, 1, E), jnp.float32)
    ln_b = jnp.zeros((L, 1, E), jnp.float32)

    return dict(
        # matmul weights stored pre-transposed (Din, Dout) and bf16 (halves HBM traffic);
        # biases / layernorm params stay f32 (VPU math stays f32, incl. on v5e).
        w_in=w(ks[0], (T, E)).astype(jnp.bfloat16),
        b_in=w(ks[1], (1, E)),
        # one bf16 weight slab per layer: [ Wqkv | Wo | W1 ], 128-lane-aligned slots
        w_slab=_pack_slab([wqkv, wo, w1]).astype(jnp.bfloat16),                 # (L, E, WTOT)
        w2=w2.astype(jnp.bfloat16),                                             # (L, F, E)
        # one f32 param slab per layer: [bqkv|bo|ln1_g|ln1_b|b1|b2|ln2_g|ln2_b]
        p_slab=_pack_slab([bqkv, bo, ln_g, ln_b, b1, b2, ln_g, ln_b]),          # (L, 1, PTOT)
    )


# ---------------------------------------------------------------------------
# forward wrapper
# ---------------------------------------------------------------------------
def pop_embedder_forward(trend, params, forecast_horizon):
    # glue: trend.permute(0, 2, 1): (B, num_trends, trend_len) -> (B, S, T).
    # Kept in the wrapper: the input is ~256 B, folding the permute in-kernel buys nothing.
    x = jnp.transpose(trend, (0, 2, 1)).astype(jnp.float32)
    B, S, T = x.shape
    F = params['w2'].shape[1]
    E = params['w2'].shape[2]
    WTOT = params['w_slab'].shape[2]
    PTOT = params['p_slab'].shape[2]

    pe = positional_encoding(S, E)
    mask = encoder_mask(S, forecast_horizon)

    operands = (x, params['w_in'], params['b_in'], pe, mask,
                params['w_slab'], params['w2'], params['p_slab'])

    def full(shape):
        # whole array, same block every layer step (DMA'd once, stays resident)
        return pl.BlockSpec(shape, lambda l: (0,) * len(shape))

    def per_layer(shape):
        # leading layer axis squeezed out; block l fetched (and pipelined) per grid step
        return pl.BlockSpec((None,) + shape, lambda l: (l,) + (0,) * len(shape))

    in_specs = [
        full((B, S, T)),            # permuted trend input
        full((T, E)), full((1, E)), # w_in, b_in (TimeDistributed Linear)
        full((S, E)),               # positional encoding
        full((S, S)),               # additive block-diagonal mask
        per_layer((E, WTOT)),       # packed bf16 [Wqkv | Wo | W1]
        per_layer((F, E)),          # FFN W2 (bf16)
        per_layer((1, PTOT)),       # packed f32 biases + layernorm params
    ]

    out = pl.pallas_call(
        pop_embedder_kernel,
        out_shape=jax.ShapeDtypeStruct((B, S, E), jnp.float32),
        grid=(NUM_LAYERS,),                               # layer axis: double-buffers next layer's weights
        in_specs=in_specs,
        out_specs=pl.BlockSpec((B, S, E), lambda l: (0, 0, 0)),   # resident; also the activation carry
        compiler_params=pltpu.CompilerParams(
            dimension_semantics=("arbitrary",)),
    )(*operands)

    # match PyTorch nn.TransformerEncoder output layout: (S, B, E)
    return jnp.transpose(out, (1, 0, 2)), None


if __name__ == "__main__":
    B = 2
    num_trends = 4          # channels of the `trend` input (Linear in_features)
    trend_len = 8           # sequence length S (PositionalEncoding max_len)
    embedding_dim = 32      # d_model, nhead=4 -> head_dim=8
    dim_ff = 2048           # nn.TransformerEncoderLayer default dim_feedforward
    forecast_horizon = 4    # gcd(8, 4) = 4 -> 4x4 block-diagonal encoder mask

    key = jax.random.PRNGKey(0)
    kp, kx = jax.random.split(key)
    params = init_params(kp, num_trends, embedding_dim, dim_ff)
    trend = jax.random.normal(kx, (B, num_trends, trend_len), dtype=jnp.float32)

    pop_emb, none_out = pop_embedder_forward(trend, params, forecast_horizon)
    jax.block_until_ready(pop_emb)

    assert pop_emb.shape == (trend_len, B, embedding_dim)
    assert none_out is None
    assert bool(jnp.all(jnp.isfinite(pop_emb)))
    print("KERNEL_OK")
</pallas_src>

<mosaic_0001>
module attributes {stable_mosaic.version = 11 : i64} {
  func.func @pop_embedder_kernel(%arg0: i32, %arg1: memref<2x8x4xf32, #tpu.memory_space<vmem>>, %arg2: memref<4x32xbf16, #tpu.memory_space<vmem>>, %arg3: memref<1x32xf32, #tpu.memory_space<vmem>>, %arg4: memref<8x32xf32, #tpu.memory_space<vmem>>, %arg5: memref<8x8xf32, #tpu.memory_space<vmem>>, %arg6: memref<1x32x2304xbf16, #tpu.memory_space<vmem>>, %arg7: memref<1x2048x32xbf16, #tpu.memory_space<vmem>>, %arg8: memref<1x1x2944xf32, #tpu.memory_space<vmem>>, %arg9: memref<2x8x32xf32, #tpu.memory_space<vmem>>) attributes {dimension_semantics = [#tpu.dimension_semantics<arbitrary>], iteration_bounds = array<i64: 2>, scalar_prefetch = 0 : i64, scratch_operands = 0 : i64, tpu.core_type = #tpu.core_type<tc>, window_params = [{pipeline_mode = #tpu.pipeline_mode<synchronous>, transform_indices = @transform_0, window_bounds = array<i64: 2, 8, 4>}, {pipeline_mode = #tpu.pipeline_mode<synchronous>, transform_indices = @transform_1, window_bounds = array<i64: 4, 32>}, {pipeline_mode = #tpu.pipeline_mode<synchronous>, transform_indices = @transform_2, window_bounds = array<i64: 1, 32>}, {pipeline_mode = #tpu.pipeline_mode<synchronous>, transform_indices = @transform_3, window_bounds = array<i64: 8, 32>}, {pipeline_mode = #tpu.pipeline_mode<synchronous>, transform_indices = @transform_4, window_bounds = array<i64: 8, 8>}, {transform_indices = @transform_5, window_bounds = array<i64: 1, 32, 2304>}, {transform_indices = @transform_6, window_bounds = array<i64: 1, 2048, 32>}, {transform_indices = @transform_7, window_bounds = array<i64: 1, 1, 2944>}, {pipeline_mode = #tpu.pipeline_mode<synchronous>, transform_indices = @transform_8, window_bounds = array<i64: 2, 8, 32>}]} {
    %c0_i32 = arith.constant 0 : i32
    %0 = arith.cmpi eq, %arg0, %c0_i32 : i32
    %1 = arith.extui %0 : i1 to i32
    %c0_i32_0 = arith.constant 0 : i32
    %2 = arith.cmpi ne, %1, %c0_i32_0 : i32
    scf.if %2 {
      %c0_55 = arith.constant 0 : index
      %c0_56 = arith.constant 0 : index
      %c0_57 = arith.constant 0 : index
      %141 = vector.load %arg1[%c0_55, %c0_56, %c0_57] : memref<2x8x4xf32, #tpu.memory_space<vmem>>, vector<2x8x4xf32>
      %142 = vector.shape_cast %141 : vector<2x8x4xf32> to vector<16x4xf32>
      %143 = arith.truncf %142 : vector<16x4xf32> to vector<16x4xbf16>
      %c0_58 = arith.constant 0 : index
      %c0_59 = arith.constant 0 : index
      %144 = vector.load %arg2[%c0_58, %c0_59] : memref<4x32xbf16, #tpu.memory_space<vmem>>, vector<4x32xbf16>
      %c0_60 = arith.constant 0 : index
      %c0_61 = arith.constant 0 : index
      %145 = vector.load %arg3[%c0_60, %c0_61] : memref<1x32xf32, #tpu.memory_space<vmem>>, vector<1x32xf32>
      %cst_62 = arith.constant dense<0.000000e+00> : vector<16x32xf32>
      %146 = tpu.matmul %143, %144, %cst_62 {dimension_numbers = #tpu.dot_dimension_numbers<[1], [0], [0], [1], [0, 0, 1, 1], [], []>} : vector<16x4xbf16>, vector<4x32xbf16>, vector<16x32xf32> -> vector<16x32xf32>
      %147 = vector.broadcast %145 : vector<1x32xf32> to vector<16x32xf32>
      %148 = arith.addf %146, %147 : vector<16x32xf32>
      %149 = vector.shape_cast %148 : vector<16x32xf32> to vector<2x8x32xf32>
      %c0_63 = arith.constant 0 : index
      %c0_64 = arith.constant 0 : index
      %150 = vector.load %arg4[%c0_63, %c0_64] : memref<8x32xf32, #tpu.memory_space<vmem>>, vector<8x32xf32>
      %151 = vector.shape_cast %150 : vector<8x32xf32> to vector<1x8x32xf32>
      %152 = vector.broadcast %151 : vector<1x8x32xf32> to vector<2x8x32xf32>
      %153 = arith.addf %149, %152 : vector<2x8x32xf32>
      %c0_65 = arith.constant 0 : index
      %c0_66 = arith.constant 0 : index
      %c0_67 = arith.constant 0 : index
      %154 = vector.load %arg9[%c0_65, %c0_66, %c0_67] : memref<2x8x32xf32, #tpu.memory_space<vmem>>, vector<2x8x32xf32>
      tpu.vector_store %arg9[%c0_65, %c0_66, %c0_67], %153 {strides = array<i32>} : memref<2x8x32xf32, #tpu.memory_space<vmem>>, vector<2x8x32xf32>,
    } else {
    }
    %c0 = arith.constant 0 : index
    %c0_1 = arith.constant 0 : index
    %c0_2 = arith.constant 0 : index
    %3 = vector.load %arg9[%c0, %c0_1, %c0_2] : memref<2x8x32xf32, #tpu.memory_space<vmem>>, vector<2x8x32xf32>
    %4 = vector.shape_cast %3 : vector<2x8x32xf32> to vector<16x32xf32>
    %5 = arith.truncf %4 : vector<16x32xf32> to vector<16x32xbf16>
    %c0_3 = arith.constant 0 : index
    %c0_4 = arith.constant 0 : index
    %c0_5 = arith.constant 0 : index
    %6 = vector.load %arg6[%c0_3, %c0_4, %c0_5] : memref<1x32x2304xbf16, #tpu.memory_space<vmem>>, vector<1x32x96xbf16>
    %7 = vector.shape_cast %6 : vector<1x32x96xbf16> to vector<32x96xbf16>
    %c0_6 = arith.constant 0 : index
    %c0_7 = arith.constant 0 : index
    %c0_8 = arith.constant 0 : index
    %8 = vector.load %arg8[%c0_6, %c0_7, %c0_8] : memref<1x1x2944xf32, #tpu.memory_space<vmem>>, vector<1x1x96xf32>
    %9 = vector.shape_cast %8 : vector<1x1x96xf32> to vector<1x96xf32>
    %cst = arith.constant dense<0.000000e+00> : vector<16x96xf32>
    %10 = tpu.matmul %5, %7, %cst {dimension_numbers = #tpu.dot_dimension_numbers<[1], [0], [0], [1], [0, 0, 1, 1], [], []>} : vector<16x32xbf16>, vector<32x96xbf16>, vector<16x96xf32> -> vector<16x96xf32>
    %11 = vector.broadcast %9 : vector<1x96xf32> to vector<16x96xf32>
    %12 = arith.addf %10, %11 : vector<16x96xf32>
    %13 = arith.truncf %12 : vector<16x96xf32> to vector<16x96xbf16>
    %14 = vector.shape_cast %13 : vector<16x96xbf16> to vector<2x8x96xbf16>
    %15 = vector.extract_strided_slice %14 {offsets = [0, 0, 0], sizes = [2, 8, 8], strides = [1, 1, 1]} : vector<2x8x96xbf16> to vector<2x8x8xbf16>
    %16 = vector.extract_strided_slice %14 {offsets = [0, 0, 8], sizes = [2, 8, 8], strides = [1, 1, 1]} : vector<2x8x96xbf16> to vector<2x8x8xbf16>
    %17 = vector.extract_strided_slice %14 {offsets = [0, 0, 16], sizes = [2, 8, 8], strides = [1, 1, 1]} : vector<2x8x96xbf16> to vector<2x8x8xbf16>
    %18 = vector.extract_strided_slice %14 {offsets = [0, 0, 24], sizes = [2, 8, 8], strides = [1, 1, 1]} : vector<2x8x96xbf16> to vector<2x8x8xbf16>
    %19 = tpu.concatenate %15, %16, %17, %18 in 0 : vector<2x8x8xbf16>, vector<2x8x8xbf16>, vector<2x8x8xbf16>, vector<2x8x8xbf16> -> vector<8x8x8xbf16>
    %20 = vector.extract_strided_slice %14 {offsets = [0, 0, 32], sizes = [2, 8, 8], strides = [1, 1, 1]} : vector<2x8x96xbf16> to vector<2x8x8xbf16>
    %21 = vector.extract_strided_slice %14 {offsets = [0, 0, 40], sizes = [2, 8, 8], strides = [1, 1, 1]} : vector<2x8x96xbf16> to vector<2x8x8xbf16>
    %22 = vector.extract_strided_slice %14 {offsets = [0, 0, 48], sizes = [2, 8, 8], strides = [1, 1, 1]} : vector<2x8x96xbf16> to vector<2x8x8xbf16>
    %23 = vector.extract_strided_slice %14 {offsets = [0, 0, 56], sizes = [2, 8, 8], strides = [1, 1, 1]} : vector<2x8x96xbf16> to vector<2x8x8xbf16>
    %24 = tpu.concatenate %20, %21, %22, %23 in 0 : vector<2x8x8xbf16>, vector<2x8x8xbf16>, vector<2x8x8xbf16>, vector<2x8x8xbf16> -> vector<8x8x8xbf16>
    %25 = vector.extract_strided_slice %14 {offsets = [0, 0, 64], sizes = [2, 8, 8], strides = [1, 1, 1]} : vector<2x8x96xbf16> to vector<2x8x8xbf16>
    %26 = vector.extract_strided_slice %14 {offsets = [0, 0, 72], sizes = [2, 8, 8], strides = [1, 1, 1]} : vector<2x8x96xbf16> to vector<2x8x8xbf16>
    %27 = vector.extract_strided_slice %14 {offsets = [0, 0, 80], sizes = [2, 8, 8], strides = [1, 1, 1]} : vector<2x8x96xbf16> to vector<2x8x8xbf16>
    %28 = vector.extract_strided_slice %14 {offsets = [0, 0, 88], sizes = [2, 8, 8], strides = [1, 1, 1]} : vector<2x8x96xbf16> to vector<2x8x8xbf16>
    %29 = tpu.concatenate %25, %26, %27, %28 in 0 : vector<2x8x8xbf16>, vector<2x8x8xbf16>, vector<2x8x8xbf16>, vector<2x8x8xbf16> -> vector<8x8x8xbf16>
    "tpu.trace_start"() <{level = 10 : i32, message = "bqd,bkd->bqk"}> : () -> ()
    %cst_9 = arith.constant dense<0.000000e+00> : vector<8x8x8xf32>
    %30 = tpu.matmul %19, %24, %cst_9 {dimension_numbers = #tpu.dot_dimension_numbers<[2], [2], [1], [1], [0, 0, 0, 1, 1, 1], [0], [0]>} : vector<8x8x8xbf16>, vector<8x8x8xbf16>, vector<8x8x8xf32> -> vector<8x8x8xf32>
    "tpu.trace_stop"() : () -> ()
    %c0_10 = arith.constant 0 : index
    %c0_11 = arith.constant 0 : index
    %31 = vector.load %arg5[%c0_10, %c0_11] : memref<8x8xf32, #tpu.memory_space<vmem>>, vector<8x8xf32>
    %32 = vector.shape_cast %31 : vector<8x8xf32> to vector<1x8x8xf32>
    %33 = vector.broadcast %32 : vector<1x8x8xf32> to vector<8x8x8xf32>
    %34 = arith.addf %30, %33 : vector<8x8x8xf32>
    %cst_12 = arith.constant dense<0xFF800000> : vector<8x8xf32>
    %35 = vector.multi_reduction <maximumf>, %34, %cst_12 [2] : vector<8x8x8xf32> to vector<8x8xf32>
    %36 = vector.shape_cast %35 : vector<8x8xf32> to vector<8x8x1xf32>
    %37 = vector.broadcast %36 : vector<8x8x1xf32> to vector<8x8x8xf32>
    %38 = arith.subf %34, %37 : vector<8x8x8xf32>
    %39 = math.exp %38 : vector<8x8x8xf32>
    %cst_13 = arith.constant dense<0.000000e+00> : vector<8x8xf32>
    %40 = vector.multi_reduction <add>, %39, %cst_13 [2] : vector<8x8x8xf32> to vector<8x8xf32>
    %41 = vector.shape_cast %40 : vector<8x8xf32> to vector<8x8x1xf32>
    %42 = tpu.reciprocal %41 {approx = true} : vector<8x8x1xf32> -> vector<8x8x1xf32>
    %43 = vector.broadcast %42 : vector<8x8x1xf32> to vector<8x8x8xf32>
    %44 = arith.mulf %39, %43 : vector<8x8x8xf32>
    %45 = arith.truncf %44 : vector<8x8x8xf32> to vector<8x8x8xbf16>
    "tpu.trace_start"() <{level = 10 : i32, message = "bqk,bkd->bqd"}> : () -> ()
    %cst_14 = arith.constant dense<0.000000e+00> : vector<8x8x8xf32>
    %46 = tpu.matmul %45, %29, %cst_14 {dimension_numbers = #tpu.dot_dimension_numbers<[2], [1], [1], [2], [0, 0, 0, 1, 1, 2], [0], [0]>} : vector<8x8x8xbf16>, vector<8x8x8xbf16>, vector<8x8x8xf32> -> vector<8x8x8xf32>
    "tpu.trace_stop"() : () -> ()
    %47 = vector.extract_strided_slice %46 {offsets = [0, 0, 0], sizes = [2, 8, 8], strides = [1, 1, 1]} : vector<8x8x8xf32> to vector<2x8x8xf32>
    %48 = vector.extract_strided_slice %46 {offsets = [2, 0, 0], sizes = [2, 8, 8], strides = [1, 1, 1]} : vector<8x8x8xf32> to vector<2x8x8xf32>
    %49 = vector.extract_strided_slice %46 {offsets = [4, 0, 0], sizes = [2, 8, 8], strides = [1, 1, 1]} : vector<8x8x8xf32> to vector<2x8x8xf32>
    %50 = vector.extract_strided_slice %46 {offsets = [6, 0, 0], sizes = [2, 8, 8], strides = [1, 1, 1]} : vector<8x8x8xf32> to vector<2x8x8xf32>
    %51 = tpu.concatenate %47, %48, %49, %50 in 2 : vector<2x8x8xf32>, vector<2x8x8xf32>, vector<2x8x8xf32>, vector<2x8x8xf32> -> vector<2x8x32xf32>
    %52 = vector.shape_cast %51 : vector<2x8x32xf32> to vector<16x32xf32>
    %53 = arith.truncf %52 : vector<16x32xf32> to vector<16x32xbf16>
    %c0_15 = arith.constant 0 : index
    %c0_16 = arith.constant 0 : index
    %c128 = arith.constant 128 : index
    %54 = vector.load %arg6[%c0_15, %c0_16, %c128] : memref<1x32x2304xbf16, #tpu.memory_space<vmem>>, vector<1x32x32xbf16>
    %55 = vector.shape_cast %54 : vector<1x32x32xbf16> to vector<32x32xbf16>
    %c0_17 = arith.constant 0 : index
    %c0_18 = arith.constant 0 : index
    %c128_19 = arith.constant 128 : index
    %56 = vector.load %arg8[%c0_17, %c0_18, %c128_19] : memref<1x1x2944xf32, #tpu.memory_space<vmem>>, vector<1x1x32xf32>
    %57 = vector.shape_cast %56 : vector<1x1x32xf32> to vector<1x32xf32>
    %cst_20 = arith.constant dense<0.000000e+00> : vector<16x32xf32>
    %58 = tpu.matmul %53, %55, %cst_20 {dimension_numbers = #tpu.dot_dimension_numbers<[1], [0], [0], [1], [0, 0, 1, 1], [], []>} : vector<16x32xbf16>, vector<32x32xbf16>, vector<16x32xf32> -> vector<16x32xf32>
    %59 = vector.broadcast %57 : vector<1x32xf32> to vector<16x32xf32>
    %60 = arith.addf %58, %59 : vector<16x32xf32>
    %61 = vector.shape_cast %60 : vector<16x32xf32> to vector<2x8x32xf32>
    %62 = arith.addf %3, %61 : vector<2x8x32xf32>
    %c0_21 = arith.constant 0 : index
    %c0_22 = arith.constant 0 : index
    %c256 = arith.constant 256 : index
    %63 = vector.load %arg8[%c0_21, %c0_22, %c256] : memref<1x1x2944xf32, #tpu.memory_space<vmem>>, vector<1x1x32xf32>
    %64 = vector.shape_cast %63 : vector<1x1x32xf32> to vector<1x32xf32>
    %c0_23 = arith.constant 0 : index
    %c0_24 = arith.constant 0 : index
    %c384 = arith.constant 384 : index
    %65 = vector.load %arg8[%c0_23, %c0_24, %c384] : memref<1x1x2944xf32, #tpu.memory_space<vmem>>, vector<1x1x32xf32>
    %66 = vector.shape_cast %65 : vector<1x1x32xf32> to vector<1x32xf32>
    %cst_25 = arith.constant dense<0.000000e+00> : vector<2x8xf32>
    %67 = vector.multi_reduction <add>, %62, %cst_25 [2] : vector<2x8x32xf32> to vector<2x8xf32>
    %68 = vector.shape_cast %67 : vector<2x8xf32> to vector<2x8x1xf32>
    %cst_26 = arith.constant 3.200000e+01 : f32
    %69 = vector.broadcast %cst_26 : f32 to vector<2x8x1xf32>
    %70 = arith.divf %68, %69 : vector<2x8x1xf32>
    %71 = vector.broadcast %70 : vector<2x8x1xf32> to vector<2x8x32xf32>
    %72 = arith.subf %62, %71 : vector<2x8x32xf32>
    %73 = arith.mulf %72, %72 : vector<2x8x32xf32>
    %cst_27 = arith.constant dense<0.000000e+00> : vector<2x8xf32>
    %74 = vector.multi_reduction <add>, %73, %cst_27 [2] : vector<2x8x32xf32> to vector<2x8xf32>
    %75 = vector.shape_cast %74 : vector<2x8xf32> to vector<2x8x1xf32>
    %cst_28 = arith.constant 3.200000e+01 : f32
    %76 = vector.broadcast %cst_28 : f32 to vector<2x8x1xf32>
    %77 = arith.divf %75, %76 : vector<2x8x1xf32>
    %78 = vector.broadcast %70 : vector<2x8x1xf32> to vector<2x8x32xf32>
    %79 = arith.subf %62, %78 : vector<2x8x32xf32>
    %cst_29 = arith.constant 9.99999974E-6 : f32
    %80 = vector.broadcast %cst_29 : f32 to vector<2x8x1xf32>
    %81 = arith.addf %77, %80 : vector<2x8x1xf32>
    %82 = math.rsqrt %81 : vector<2x8x1xf32>
    %83 = vector.broadcast %82 : vector<2x8x1xf32> to vector<2x8x32xf32>
    %84 = arith.mulf %79, %83 : vector<2x8x32xf32>
    %85 = vector.shape_cast %64 : vector<1x32xf32> to vector<1x1x32xf32>
    %86 = vector.broadcast %85 : vector<1x1x32xf32> to vector<2x8x32xf32>
    %87 = arith.mulf %84, %86 : vector<2x8x32xf32>
    %88 = vector.shape_cast %66 : vector<1x32xf32> to vector<1x1x32xf32>
    %89 = vector.broadcast %88 : vector<1x1x32xf32> to vector<2x8x32xf32>
    %90 = arith.addf %87, %89 : vector<2x8x32xf32>
    %91 = vector.shape_cast %90 : vector<2x8x32xf32> to vector<16x32xf32>
    %92 = arith.truncf %91 : vector<16x32xf32> to vector<16x32xbf16>
    %c0_30 = arith.constant 0 : index
    %c0_31 = arith.constant 0 : index
    %c256_32 = arith.constant 256 : index
    %93 = vector.load %arg6[%c0_30, %c0_31, %c256_32] : memref<1x32x2304xbf16, #tpu.memory_space<vmem>>, vector<1x32x2048xbf16>
    %94 = vector.shape_cast %93 : vector<1x32x2048xbf16> to vector<32x2048xbf16>
    %c0_33 = arith.constant 0 : index
    %c0_34 = arith.constant 0 : index
    %c512 = arith.constant 512 : index
    %95 = vector.load %arg8[%c0_33, %c0_34, %c512] : memref<1x1x2944xf32, #tpu.memory_space<vmem>>, vector<1x1x2048xf32>
    %96 = vector.shape_cast %95 : vector<1x1x2048xf32> to vector<1x2048xf32>
    %cst_35 = arith.constant dense<0.000000e+00> : vector<16x2048xf32>
    %97 = tpu.matmul %92, %94, %cst_35 {dimension_numbers = #tpu.dot_dimension_numbers<[1], [0], [0], [1], [0, 0, 1, 1], [], []>} : vector<16x32xbf16>, vector<32x2048xbf16>, vector<16x2048xf32> -> vector<16x2048xf32>
    %98 = vector.broadcast %96 : vector<1x2048xf32> to vector<16x2048xf32>
    %99 = arith.addf %97, %98 : vector<16x2048xf32>
    %cst_36 = arith.constant 0.000000e+00 : f32
    %100 = vector.broadcast %cst_36 : f32 to vector<16x2048xf32>
    %101 = arith.maximumf %99, %100 : vector<16x2048xf32>
    %102 = arith.truncf %101 : vector<16x2048xf32> to vector<16x2048xbf16>
    %c0_37 = arith.constant 0 : index
    %c0_38 = arith.constant 0 : index
    %c0_39 = arith.constant 0 : index
    %103 = vector.load %arg7[%c0_37, %c0_38, %c0_39] : memref<1x2048x32xbf16, #tpu.memory_space<vmem>>, vector<1x2048x32xbf16>
    %104 = vector.shape_cast %103 : vector<1x2048x32xbf16> to vector<2048x32xbf16>
    %c0_40 = arith.constant 0 : index
    %c0_41 = arith.constant 0 : index
    %c2560 = arith.constant 2560 : index
    %105 = vector.load %arg8[%c0_40, %c0_41, %c2560] : memref<1x1x2944xf32, #tpu.memory_space<vmem>>, vector<1x1x32xf32>
    %106 = vector.shape_cast %105 : vector<1x1x32xf32> to vector<1x32xf32>
    %cst_42 = arith.constant dense<0.000000e+00> : vector<16x32xf32>
    %107 = tpu.matmul %102, %104, %cst_42 {dimension_numbers = #tpu.dot_dimension_numbers<[1], [0], [0], [1], [0, 0, 1, 1], [], []>} : vector<16x2048xbf16>, vector<2048x32xbf16>, vector<16x32xf32> -> vector<16x32xf32>
    %108 = vector.broadcast %106 : vector<1x32xf32> to vector<16x32xf32>
    %109 = arith.addf %107, %108 : vector<16x32xf32>
    %110 = vector.shape_cast %109 : vector<16x32xf32> to vector<2x8x32xf32>
    %111 = arith.addf %90, %110 : vector<2x8x32xf32>
    %c0_43 = arith.constant 0 : index
    %c0_44 = arith.constant 0 : index
    %c2688 = arith.constant 2688 : index
    %112 = vector.load %arg8[%c0_43, %c0_44, %c2688] : memref<1x1x2944xf32, #tpu.memory_space<vmem>>, vector<1x1x32xf32>
    %113 = vector.shape_cast %112 : vector<1x1x32xf32> to vector<1x32xf32>
    %c0_45 = arith.constant 0 : index
    %c0_46 = arith.constant 0 : index
    %c2816 = arith.constant 2816 : index
    %114 = vector.load %arg8[%c0_45, %c0_46, %c2816] : memref<1x1x2944xf32, #tpu.memory_space<vmem>>, vector<1x1x32xf32>
    %115 = vector.shape_cast %114 : vector<1x1x32xf32> to vector<1x32xf32>
    %cst_47 = arith.constant dense<0.000000e+00> : vector<2x8xf32>
    %116 = vector.multi_reduction <add>, %111, %cst_47 [2] : vector<2x8x32xf32> to vector<2x8xf32>
    %117 = vector.shape_cast %116 : vector<2x8xf32> to vector<2x8x1xf32>
    %cst_48 = arith.constant 3.200000e+01 : f32
    %118 = vector.broadcast %cst_48 : f32 to vector<2x8x1xf32>
    %119 = arith.divf %117, %118 : vector<2x8x1xf32>
    %120 = vector.broadcast %119 : vector<2x8x1xf32> to vector<2x8x32xf32>
    %121 = arith.subf %111, %120 : vector<2x8x32xf32>
    %122 = arith.mulf %121, %121 : vector<2x8x32xf32>
    %cst_49 = arith.constant dense<0.000000e+00> : vector<2x8xf32>
    %123 = vector.multi_reduction <add>, %122, %cst_49 [2] : vector<2x8x32xf32> to vector<2x8xf32>
    %124 = vector.shape_cast %123 : vector<2x8xf32> to vector<2x8x1xf32>
    %cst_50 = arith.constant 3.200000e+01 : f32
    %125 = vector.broadcast %cst_50 : f32 to vector<2x8x1xf32>
    %126 = arith.divf %124, %125 : vector<2x8x1xf32>
    %127 = vector.broadcast %119 : vector<2x8x1xf32> to vector<2x8x32xf32>
    %128 = arith.subf %111, %127 : vector<2x8x32xf32>
    %cst_51 = arith.constant 9.99999974E-6 : f32
    %129 = vector.broadcast %cst_51 : f32 to vector<2x8x1xf32>
    %130 = arith.addf %126, %129 : vector<2x8x1xf32>
    %131 = math.rsqrt %130 : vector<2x8x1xf32>
    %132 = vector.broadcast %131 : vector<2x8x1xf32> to vector<2x8x32xf32>
    %133 = arith.mulf %128, %132 : vector<2x8x32xf32>
    %134 = vector.shape_cast %113 : vector<1x32xf32> to vector<1x1x32xf32>
    %135 = vector.broadcast %134 : vector<1x1x32xf32> to vector<2x8x32xf32>
    %136 = arith.mulf %133, %135 : vector<2x8x32xf32>
    %137 = vector.shape_cast %115 : vector<1x32xf32> to vector<1x1x32xf32>
    %138 = vector.broadcast %137 : vector<1x1x32xf32> to vector<2x8x32xf32>
    %139 = arith.addf %136, %138 : vector<2x8x32xf32>
    %c0_52 = arith.constant 0 : index
    %c0_53 = arith.constant 0 : index
    %c0_54 = arith.constant 0 : index
    %140 = vector.load %arg9[%c0_52, %c0_53, %c0_54] : memref<2x8x32xf32, #tpu.memory_space<vmem>>, vector<2x8x32xf32>
    tpu.vector_store %arg9[%c0_52, %c0_53, %c0_54], %139 {strides = array<i32>} : memref<2x8x32xf32, #tpu.memory_space<vmem>>, vector<2x8x32xf32>,
    return
  }
  func.func @transform_0(%arg0: i32) -> (i32, i32, i32) {
    %c0_i32 = arith.constant 0 : i32
    %c0_i32_0 = arith.constant 0 : i32
    %c0_i32_1 = arith.constant 0 : i32
    %c0_i32_2 = arith.constant 0 : i32
    return %c0_i32, %c0_i32_0, %c0_i32_1 : i32, i32, i32
  }
  func.func @transform_1(%arg0: i32) -> (i32, i32) {
    %c0_i32 = arith.constant 0 : i32
    %c0_i32_0 = arith.constant 0 : i32
    %c0_i32_1 = arith.constant 0 : i32
    return %c0_i32, %c0_i32_0 : i32, i32
  }
  func.func @transform_2(%arg0: i32) -> (i32, i32) {
    %c0_i32 = arith.constant 0 : i32
    %c0_i32_0 = arith.constant 0 : i32
    %c0_i32_1 = arith.constant 0 : i32
    return %c0_i32, %c0_i32_0 : i32, i32
  }
  func.func @transform_3(%arg0: i32) -> (i32, i32) {
    %c0_i32 = arith.constant 0 : i32
    %c0_i32_0 = arith.constant 0 : i32
    %c0_i32_1 = arith.constant 0 : i32
    return %c0_i32, %c0_i32_0 : i32, i32
  }
  func.func @transform_4(%arg0: i32) -> (i32, i32) {
    %c0_i32 = arith.constant 0 : i32
    %c0_i32_0 = arith.constant 0 : i32
    %c0_i32_1 = arith.constant 0 : i32
    return %c0_i32, %c0_i32_0 : i32, i32
  }
  func.func @transform_5(%arg0: i32) -> (i32, i32, i32) {
    %c0_i32 = arith.constant 0 : i32
    %c0_i32_0 = arith.constant 0 : i32
    %c0_i32_1 = arith.constant 0 : i32
    return %arg0, %c0_i32, %c0_i32_0 : i32, i32, i32
  }
  func.func @transform_6(%arg0: i32) -> (i32, i32, i32) {
    %c0_i32 = arith.constant 0 : i32
    %c0_i32_0 = arith.constant 0 : i32
    %c0_i32_1 = arith.constant 0 : i32
    return %arg0, %c0_i32, %c0_i32_0 : i32, i32, i32
  }
  func.func @transform_7(%arg0: i32) -> (i32, i32, i32) {
    %c0_i32 = arith.constant 0 : i32
    %c0_i32_0 = arith.constant 0 : i32
    %c0_i32_1 = arith.constant 0 : i32
    return %arg0, %c0_i32, %c0_i32_0 : i32, i32, i32
  }
  func.func @transform_8(%arg0: i32) -> (i32, i32, i32) {
    %c0_i32 = arith.constant 0 : i32
    %c0_i32_0 = arith.constant 0 : i32
    %c0_i32_1 = arith.constant 0 : i32
    %c0_i32_2 = arith.constant 0 : i32
    return %c0_i32, %c0_i32_0, %c0_i32_1 : i32, i32, i32
  }
}

</mosaic_0001>

<llo_original>
// kernel: tpu_custom_call.1
$region0: #{tpu_custom_call.1}
  #allocation0 [shape = 'u32[]', space=smem, size = 0x4, offset = 0x4, fixed_abs, tag = 'smem constant byte address 0x4 - core index']
  #allocation1 [shape = 'u32[144,128]{1,0:T(1,128)}', space=vmem, size = 0x12000, scoped, tag = 'internal scratch']
  %s0 = inlined_call_operand.vmem [shape: f32[2,8,4], index: 0, kind: input, shape index: {}]
  %s1 = inlined_call_operand.vmem [shape: bf16[4,32], index: 1, kind: input, shape index: {}]
  %s2 = inlined_call_operand.vmem [shape: f32[1,32], index: 2, kind: input, shape index: {}]
  %s3 = inlined_call_operand.vmem [shape: f32[8,32], index: 3, kind: input, shape index: {}]
  %s4 = inlined_call_operand.vmem [shape: f32[8,8], index: 4, kind: input, shape index: {}]
  %s5 = inlined_call_operand.vmem [shape: bf16[2,32,2304], index: 5, kind: input, shape index: {}]
  %s6 = inlined_call_operand.vmem [shape: bf16[2,2048,32], index: 6, kind: input, shape index: {}]
  %s7 = inlined_call_operand.vmem [shape: f32[2,1,2944], index: 7, kind: input, shape index: {}]
  %s8 = inlined_call_operand.hbm [shape: f32[2,8,32], index: 8, kind: output, shape index: {}]
  %s9 = sld [smem:[#allocation0]]
  $region69: #{tpu_custom_call.1} parent=0
    _
  %s11 = ssub.s32 1, %s9
  %s12 = scalar_select 0, %s11, %s9
  $region1: #{tpu_custom_call.1} parent=0
    #allocation2 [shape = 'u8[8192]{0}', space=vmem, size = 0x2000, scoped, tag = 'output window, operand 0, single buffered']
    #allocation3 [shape = 's32[2]{0}', space=sflag, size = 0x8, scoped, tag = 'scoped memory for tpu_custom_call.1']
    %13 = vsyncpa [#allocation3], 0
    loop: start=0, step=1, limit=4
    $region2: #{tpu_custom_call.1} parent=1 // loop_pre_header
      _
    $region3: #{tpu_custom_call.1} parent=1 // loop_header
      %s15 = sphi 0, %s19
      %p16 = scmp.ge.s32.totalorder %s15, 4
      %s23 = sphi 0, %s23
      %s25 = sphi 0, %s23
      %s26 = sphi 0, %s25
      %s40 = sphi 0, %s26
      %s44 = sphi 0, %s44
      %s46 = sphi 0, %s44
      %s47 = sphi 0, %s46
      %s61 = sphi 0, %s47
      %s65 = sphi 0, %s65
      %s67 = sphi 0, %s65
      %s68 = sphi 0, %s67
      %s82 = sphi 0, %s68
      %s86 = sphi 0, %s86
      %s88 = sphi 0, %s86
      %s89 = sphi 0, %s88
      %s103 = sphi 0, %s89
      %s107 = sphi 0, %s107
      %s109 = sphi 0, %s107
      %s110 = sphi 0, %s109
      %s124 = sphi 0, %s110
      %s130 = sphi 0, %s132
      %s133 = sphi 0, %s130
      %s134 = sphi 0, %s133
      %s150 = sphi 0, %s134
      %s156 = sphi 0, %s158
      %s159 = sphi 0, %s156
      %s160 = sphi 0, %s159
      %s176 = sphi 0, %s160
      %s182 = sphi 0, %s184
      %s185 = sphi 0, %s182
      %s186 = sphi 0, %s185
      %s202 = sphi 0, %s186
      %s206 = sphi 0, %s206
      %s208 = sphi 0, %s206
      %s209 = sphi 0, %s208
      %s223 = sphi 0, %s209
    $region4: #{tpu_custom_call.1} parent=1 // loop_header_branch
      %18 = sbr.rel (%p16) target = $region8
    $region5: #{tpu_custom_call.1} parent=1 // loop_body
      %s20 = ssub.s32 %s15, 1
      %s21 = ssub.s32 %s15, 2
      %s22 = sadd.s32 %s15, 1
      %s24 = sadd.s32 %s23, 1
      %p27 = scmp.eq.s32.totalorder %s15, 1
      %p28 = scmp.ne.s32.totalorder %s23, %s25
      %p29 = scmp.eq.s32.totalorder %s15, 0
      %p30 = por %p28, %p29
      %p31 = scmp.ne.s32.totalorder %s23, %s25
      %p32 = scmp.eq.s32.totalorder %s20, 1
      %p33 = por %p31, %p32
      %p34 = scmp.ne.s32.totalorder %s25, %s26
      %p35 = scmp.eq.s32.totalorder %s20, 0
      %p36 = por %p34, %p35
      %p37 = scmp.ne.s32.totalorder %s25, %s26
      %p38 = scmp.eq.s32.totalorder %s21, 1
      %p39 = por %p37, %p38
      %p41 = scmp.ne.s32.totalorder %s26, %s40
      %p42 = scmp.eq.s32.totalorder %s21, 0
      %p43 = por %p41, %p42
      %s45 = sadd.s32 %s44, 1
      %p48 = scmp.eq.s32.totalorder %s15, 1
      %p49 = scmp.ne.s32.totalorder %s44, %s46
      %p50 = scmp.eq.s32.totalorder %s15, 0
      %p51 = por %p49, %p50
      %p52 = scmp.ne.s32.totalorder %s44, %s46
      %p53 = scmp.eq.s32.totalorder %s20, 1
      %p54 = por %p52, %p53
      %p55 = scmp.ne.s32.totalorder %s46, %s47
      %p56 = scmp.eq.s32.totalorder %s20, 0
      %p57 = por %p55, %p56
      %p58 = scmp.ne.s32.totalorder %s46, %s47
      %p59 = scmp.eq.s32.totalorder %s21, 1
      %p60 = por %p58, %p59
      %p62 = scmp.ne.s32.totalorder %s47, %s61
      %p63 = scmp.eq.s32.totalorder %s21, 0
      %p64 = por %p62, %p63
      %s66 = sadd.s32 %s65, 1
      %p69 = scmp.eq.s32.totalorder %s15, 1
      %p70 = scmp.ne.s32.totalorder %s65, %s67
      %p71 = scmp.eq.s32.totalorder %s15, 0
      %p72 = por %p70, %p71
      %p73 = scmp.ne.s32.totalorder %s65, %s67
      %p74 = scmp.eq.s32.totalorder %s20, 1
      %p75 = por %p73, %p74
      %p76 = scmp.ne.s32.totalorder %s67, %s68
      %p77 = scmp.eq.s32.totalorder %s20, 0
      %p78 = por %p76, %p77
      %p79 = scmp.ne.s32.totalorder %s67, %s68
      %p80 = scmp.eq.s32.totalorder %s21, 1
      %p81 = por %p79, %p80
      %p83 = scmp.ne.s32.totalorder %s68, %s82
      %p84 = scmp.eq.s32.totalorder %s21, 0
      %p85 = por %p83, %p84
      %s87 = sadd.s32 %s86, 1
      %p90 = scmp.eq.s32.totalorder %s15, 1
      %p91 = scmp.ne.s32.totalorder %s86, %s88
      %p92 = scmp.eq.s32.totalorder %s15, 0
      %p93 = por %p91, %p92
      %p94 = scmp.ne.s32.totalorder %s86, %s88
      %p95 = scmp.eq.s32.totalorder %s20, 1
      %p96 = por %p94, %p95
      %p97 = scmp.ne.s32.totalorder %s88, %s89
      %p98 = scmp.eq.s32.totalorder %s20, 0
      %p99 = por %p97, %p98
      %p100 = scmp.ne.s32.totalorder %s88, %s89
      %p101 = scmp.eq.s32.totalorder %s21, 1
      %p102 = por %p100, %p101
      %p104 = scmp.ne.s32.totalorder %s89, %s103
      %p105 = scmp.eq.s32.totalorder %s21, 0
      %p106 = por %p104, %p105
      %s108 = sadd.s32 %s107, 1
      %p111 = scmp.eq.s32.totalorder %s15, 1
      %p112 = scmp.ne.s32.totalorder %s107, %s109
      %p113 = scmp.eq.s32.totalorder %s15, 0
      %p114 = por %p112, %p113
      %p115 = scmp.ne.s32.totalorder %s107, %s109
      %p116 = scmp.eq.s32.totalorder %s20, 1
      %p117 = por %p115, %p116
      %p118 = scmp.ne.s32.totalorder %s109, %s110
      %p119 = scmp.eq.s32.totalorder %s20, 0
      %p120 = por %p118, %p119
      %p121 = scmp.ne.s32.totalorder %s109, %s110
      %p122 = scmp.eq.s32.totalorder %s21, 1
      %p123 = por %p121, %p122
      %p125 = scmp.ne.s32.totalorder %s110, %s124
      %p126 = scmp.eq.s32.totalorder %s21, 0
      %p127 = por %p125, %p126
      %s128 = ssub.s32 %s15, %s22
      %p129 = scmp.eq.s32.totalorder %s128, 0
      %s131 = sadd.s32 %s130, 1
      %s132 = scalar_select %p129, %s130, %s131
      %p135 = pneg %p129
      %p136 = scmp.eq.s32.totalorder %s15, 1
      %p137 = por %p135, %p136
      %p138 = scmp.ne.s32.totalorder %s130, %s133
      %p139 = scmp.eq.s32.totalorder %s15, 0
      %p140 = por %p138, %p139
      %p141 = scmp.ne.s32.totalorder %s130, %s133
      %p142 = scmp.eq.s32.totalorder %s20, 1
      %p143 = por %p141, %p142
      %p144 = scmp.ne.s32.totalorder %s133, %s134
      %p145 = scmp.eq.s32.totalorder %s20, 0
      %p146 = por %p144, %p145
      %p147 = scmp.ne.s32.totalorder %s133, %s134
      %p148 = scmp.eq.s32.totalorder %s21, 1
      %p149 = por %p147, %p148
      %p151 = scmp.ne.s32.totalorder %s134, %s150
      %p152 = scmp.eq.s32.totalorder %s21, 0
      %p153 = por %p151, %p152
      %s154 = ssub.s32 %s15, %s22
      %p155 = scmp.eq.s32.totalorder %s154, 0
      %s157 = sadd.s32 %s156, 1
      %s158 = scalar_select %p155, %s156, %s157
      %p161 = pneg %p155
      %p162 = scmp.eq.s32.totalorder %s15, 1
      %p163 = por %p161, %p162
      %p164 = scmp.ne.s32.totalorder %s156, %s159
      %p165 = scmp.eq.s32.totalorder %s15, 0
      %p166 = por %p164, %p165
      %p167 = scmp.ne.s32.totalorder %s156, %s159
      %p168 = scmp.eq.s32.totalorder %s20, 1
      %p169 = por %p167, %p168
      %p170 = scmp.ne.s32.totalorder %s159, %s160
      %p171 = scmp.eq.s32.totalorder %s20, 0
      %p172 = por %p170, %p171
      %p173 = scmp.ne.s32.totalorder %s159, %s160
      %p174 = scmp.eq.s32.totalorder %s21, 1
      %p175 = por %p173, %p174
      %p177 = scmp.ne.s32.totalorder %s160, %s176
      %p178 = scmp.eq.s32.totalorder %s21, 0
      %p179 = por %p177, %p178
      %s180 = ssub.s32 %s15, %s22
      %p181 = scmp.eq.s32.totalorder %s180, 0
      %s183 = sadd.s32 %s182, 1
      %s184 = scalar_select %p181, %s182, %s183
      %p187 = pneg %p181
      %p188 = scmp.eq.s32.totalorder %s15, 1
      %p189 = por %p187, %p188
      %p190 = scmp.ne.s32.totalorder %s182, %s185
      %p191 = scmp.eq.s32.totalorder %s15, 0
      %p192 = por %p190, %p191
      %p193 = scmp.ne.s32.totalorder %s182, %s185
      %p194 = scmp.eq.s32.totalorder %s20, 1
      %p195 = por %p193, %p194
      %p196 = scmp.ne.s32.totalorder %s185, %s186
      %p197 = scmp.eq.s32.totalorder %s20, 0
      %p198 = por %p196, %p197
      %p199 = scmp.ne.s32.totalorder %s185, %s186
      %p200 = scmp.eq.s32.totalorder %s21, 1
      %p201 = por %p199, %p200
      %p203 = scmp.ne.s32.totalorder %s186, %s202
      %p204 = scmp.eq.s32.totalorder %s21, 0
      %p205 = por %p203, %p204
      %s207 = sadd.s32 %s206, 1
      %p210 = scmp.eq.s32.totalorder %s15, 1
      %p211 = scmp.ne.s32.totalorder %s206, %s208
      %p212 = scmp.eq.s32.totalorder %s15, 0
      %p213 = por %p211, %p212
      %p214 = scmp.ne.s32.totalorder %s206, %s208
      %p215 = scmp.eq.s32.totalorder %s20, 1
      %p216 = por %p214, %p215
      %p217 = scmp.ne.s32.totalorder %s208, %s209
      %p218 = scmp.eq.s32.totalorder %s20, 0
      %p219 = por %p217, %p218
      %p220 = scmp.ne.s32.totalorder %s208, %s209
      %p221 = scmp.eq.s32.totalorder %s21, 1
      %p222 = por %p220, %p221
      %p224 = scmp.ne.s32.totalorder %s209, %s223
      %p225 = scmp.eq.s32.totalorder %s21, 0
      %p226 = por %p224, %p225
      %p227 = scmp.le.s32.totalorder 1, %s15
      %p228 = scmp.lt.s32.totalorder %s15, 3
      %p229 = pnand %p227, %p228
      %p230 = pneg %p229
      // Predicated region
      $region9: #{tpu_custom_call.1} parent=5 // pred_check
        _
      $region10: #{tpu_custom_call.1} parent=5 // pred_check_branch
        %232 = sbr.rel (%p229) target = $region12
      $region11: #{tpu_custom_call.1} parent=5 // pred_region
        %s233 = ssub.s32 %s15, 1
        // Predicated region
        $region13: #{tpu_custom_call.1} parent=11 // pred_check
          %p234 = pneg %p36
        $region14: #{tpu_custom_call.1} parent=11 // pred_check_branch
          %236 = sbr.rel (%p234) target = $region16
        $region15: #{tpu_custom_call.1} parent=11 // pred_region
          _
        $region16: #{tpu_custom_call.1} parent=11 // pred_fallthru
          _
        // Predicated region
        $region17: #{tpu_custom_call.1} parent=11 // pred_check
          %p237 = pneg %p57
        $region18: #{tpu_custom_call.1} parent=11 // pred_check_branch
          %239 = sbr.rel (%p237) target = $region20
        $region19: #{tpu_custom_call.1} parent=11 // pred_region
          _
        $region20: #{tpu_custom_call.1} parent=11 // pred_fallthru
          _
        // Predicated region
        $region21: #{tpu_custom_call.1} parent=11 // pred_check
          %p240 = pneg %p78
        $region22: #{tpu_custom_call.1} parent=11 // pred_check_branch
          %242 = sbr.rel (%p240) target = $region24
        $region23: #{tpu_custom_call.1} parent=11 // pred_region
          _
        $region24: #{tpu_custom_call.1} parent=11 // pred_fallthru
          _
        // Predicated region
        $region25: #{tpu_custom_call.1} parent=11 // pred_check
          %p243 = pneg %p99
        $region26: #{tpu_custom_call.1} parent=11 // pred_check_branch
          %245 = sbr.rel (%p243) target = $region28
        $region27: #{tpu_custom_call.1} parent=11 // pred_region
          _
        $region28: #{tpu_custom_call.1} parent=11 // pred_fallthru
          _
        // Predicated region
        $region29: #{tpu_custom_call.1} parent=11 // pred_check
          %p246 = pneg %p120
        $region30: #{tpu_custom_call.1} parent=11 // pred_check_branch
          %248 = sbr.rel (%p246) target = $region32
        $region31: #{tpu_custom_call.1} parent=11 // pred_region
          _
        $region32: #{tpu_custom_call.1} parent=11 // pred_fallthru
          _
      $region12: #{tpu_custom_call.1} parent=5 // pred_fallthru
        _
      %p249 = scmp.lt.s32.totalorder %s15, 2
      // Predicated region
      $region33: #{tpu_custom_call.1} parent=5 // pred_check
        %p250 = pneg %p249
      $region34: #{tpu_custom_call.1} parent=5 // pred_check_branch
        %252 = sbr.rel (%p250) target = $region36
      $region35: #{tpu_custom_call.1} parent=5 // pred_region
        // Predicated region
        $region37: #{tpu_custom_call.1} parent=35 // pred_check
          %p253 = pneg %p140
        $region38: #{tpu_custom_call.1} parent=35 // pred_check_branch
          %255 = sbr.rel (%p253) target = $region40
        $region39: #{tpu_custom_call.1} parent=35 // pred_region
          %p256 = scmp.lt.s32.totalorder %s15, 1
          %s257 = scalar_select %p256, %s15, 1
          %s258 = smul.addr %s257, 72
          %s259 = smul.addr %s258, 4
          %s260 = scalar_lea.vmem %s5, %s259
        $region40: #{tpu_custom_call.1} parent=35 // pred_fallthru
          _
        // Predicated region
        $region41: #{tpu_custom_call.1} parent=35 // pred_check
          %p261 = pneg %p166
        $region42: #{tpu_custom_call.1} parent=35 // pred_check_branch
          %263 = sbr.rel (%p261) target = $region44
        $region43: #{tpu_custom_call.1} parent=35 // pred_region
          %p264 = scmp.lt.s32.totalorder %s15, 1
          %s265 = scalar_select %p264, %s15, 1
          %s266 = smul.addr %s265, 256
          %s267 = smul.addr %s266, 4
          %s268 = scalar_lea.vmem %s6, %s267
        $region44: #{tpu_custom_call.1} parent=35 // pred_fallthru
          _
        // Predicated region
        $region45: #{tpu_custom_call.1} parent=35 // pred_check
          %p269 = pneg %p192
        $region46: #{tpu_custom_call.1} parent=35 // pred_check_branch
          %271 = sbr.rel (%p269) target = $region48
        $region47: #{tpu_custom_call.1} parent=35 // pred_region
          %p272 = scmp.lt.s32.totalorder %s15, 1
          %s273 = scalar_select %p272, %s15, 1
          %s274 = smul.addr %s273, 23
          %s275 = scalar_lea.vmem %s7, %s274
        $region48: #{tpu_custom_call.1} parent=35 // pred_fallthru
          _
      $region36: #{tpu_custom_call.1} parent=5 // pred_fallthru
        _
      %p276 = scmp.le.s32.totalorder 1, %s15
      %p277 = scmp.lt.s32.totalorder %s15, 3
      %p278 = pnand %p276, %p277
      %p279 = pneg %p278
      // Predicated region
      $region49: #{tpu_custom_call.1} parent=5 // pred_check
        _
      $region50: #{tpu_custom_call.1} parent=5 // pred_check_branch
        %281 = sbr.rel (%p278) target = $region52
      $region51: #{tpu_custom_call.1} parent=5 // pred_region
        %s282 = ssub.s32 %s15, 1
        %p283 = pneg %p36
        %p284 = pneg %p33
        %p285 = pneg %p57
        %p286 = pneg %p54
        %p287 = pneg %p78
        %p288 = pneg %p75
        %p289 = pneg %p99
        %p290 = pneg %p96
        %p291 = pneg %p120
        %p292 = pneg %p117
        %p293 = scmp.lt.s32.totalorder %s20, 1
        %s294 = scalar_select %p293, %s20, 1
        %s295 = smul.addr %s294, 72
        %s296 = smul.addr %s295, 4
        %s297 = scalar_lea.vmem %s5, %s296
        %p298 = pneg %p146
        %p299 = pneg %p143
        %p300 = scmp.lt.s32.totalorder %s20, 1
        %s301 = scalar_select %p300, %s20, 1
        %s302 = smul.addr %s301, 256
        %s303 = smul.addr %s302, 4
        %s304 = scalar_lea.vmem %s6, %s303
        %p305 = pneg %p172
        %p306 = pneg %p169
        %p307 = scmp.lt.s32.totalorder %s20, 1
        %s308 = scalar_select %p307, %s20, 1
        %s309 = smul.addr %s308, 23
        %s310 = scalar_lea.vmem %s7, %s309
        %p311 = pneg %p198
        %p312 = pneg %p195
        %p313 = pneg %p219
        %p314 = pneg %p216
        %p315 = scmp.lt.s32.totalorder %s20, 1
        %s316 = scalar_select %p315, %s20, 1
        %s317 = smul.addr %s316, 72
        %s318 = smul.addr %s317, 4
        %s319 = scalar_lea.vmem %s5, %s318
        %p320 = scmp.lt.s32.totalorder %s20, 1
        %s321 = scalar_select %p320, %s20, 1
        %s322 = smul.addr %s321, 256
        %s323 = smul.addr %s322, 4
        %s324 = scalar_lea.vmem %s6, %s323
        %p325 = scmp.lt.s32.totalorder %s20, 1
        %s326 = scalar_select %p325, %s20, 1
        %s327 = smul.addr %s326, 23
        %s328 = scalar_lea.vmem %s7, %s327
        %p330 = scmp.eq.s32.totalorder %s20, 0
        // Predicated region
        $region53: #{tpu_custom_call.1} parent=51 // pred_check
          %p331 = pneg %p330
        $region54: #{tpu_custom_call.1} parent=51 // pred_check_branch
          %333 = sbr.rel (%p331) target = $region56
        $region55: #{tpu_custom_call.1} parent=51 // pred_region
          %v334 = vld [vmem:[%s0] sm:$0xff]
          %v335 = vld [vmem:[%s0 + $0x8] sm:$0xff]
          %v336 = vpack.c.bf16 %v335, %v334
          %v337 = vld [vmem:[%s1] sm:$0x3]
          %v338 = vld [vmem:[%s2] sm:$0x1]
          %v340 = vlaneseq
          %v341 = vshrl.u32 %v340, 7
          %v342 = vsub.s32 0, %v341
          %v343 = vrot.slane %v338, %v342
          %vm345 = vcmask 31744
          %v347 = vsel %vm345, %v336, 0
          %vm349 = vcmask 1041408
          %v351 = vsel %vm349, %v337, 0
          %353 = vmatprep.subr.bf16.mxu0 0
          %354 = vmatpush1.bf16.msra.mxu0 %v351
          %355 = vmatprep.subr.bf16.mxu0 0
          %356 = vmatpush1.bf16.msra.mxu0 0
          %357 = vmatprep.subr.bf16.mxu0 0
          %358 = vmatpush1.bf16.msra.mxu0 0
          %359 = vmatprep.subr.bf16.mxu0 0
          %360 = vmatpush1.bf16.msra.mxu0 0
          %361 = vmatprep.subr.bf16.mxu0 0
          %362 = vmatpush1.bf16.msra.mxu0 0
          %363 = vmatprep.subr.bf16.mxu0 0
          %364 = vmatpush1.bf16.msra.mxu0 0
          %365 = vmatprep.subr.bf16.mxu0 0
          %366 = vmatpush1.bf16.msra.mxu0 0
          %367 = vmatprep.subr.bf16.mxu0 0
          %368 = vmatpush1.bf16.msra.mxu0 0
          %369 = vmatprep.subr.bf16.mxu0 0
          %370 = vmatpush1.bf16.msra.mxu0 0
          %371 = vmatprep.subr.bf16.mxu0 0
          %372 = vmatpush1.bf16.msra.mxu0 0
          %373 = vmatprep.subr.bf16.mxu0 0
          %374 = vmatpush1.bf16.msra.mxu0 0
          %375 = vmatprep.subr.bf16.mxu0 0
          %376 = vmatpush1.bf16.msra.mxu0 0
          %377 = vmatprep.subr.bf16.mxu0 0
          %378 = vmatpush1.bf16.msra.mxu0 0
          %379 = vmatprep.subr.bf16.mxu0 0
          %380 = vmatpush1.bf16.msra.mxu0 0
          %381 = vmatprep.subr.bf16.mxu0 0
          %382 = vmatpush1.bf16.msra.mxu0 0
          %383 = vmatprep.subr.bf16.mxu0 0
          %384 = vmatpush1.bf16.msra.mxu0 0
          %385 = vmatprep.mubr.bf16.mxu0 0
          %386 = vmatmul.mubr.bf16.gmra.mrb[0].mxu0 %v347
          %v387 = vpop.f32.mrb[0].mxu0
          %v388 = vadd.f32 %v343, %v387
          %v389 = vpop.f32.mrb[0].mxu0
          %v390 = vpop.f32.mrb[0].mxu0
          %v391 = vadd.f32 %v343, %v390
          %v392 = vpop.f32.mrb[0].mxu0
          %393 = vdwg.mxu0
          %v394 = vld [vmem:[%s3] sm:$0xff]
          %v395 = vadd.f32 %v388, %v394
          %v396 = vadd.f32 %v391, %v394
          %vm397 = vcmask 261120
          %398 = vst.msk [vmem:[#allocation2] sm:$0xff] %vm397, %v395
          %399 = vst.msk [vmem:[#allocation2 + $0x8] sm:$0xff] %vm397, %v396
        $region56: #{tpu_custom_call.1} parent=51 // pred_fallthru
          _
        %v400 = vld [vmem:[#allocation2] sm:$0xff]
        %v401 = vld [vmem:[#allocation2 + $0x8] sm:$0xff]
        %v402 = vpack.c.bf16 %v401, %v400
        %v403 = vld [vmem:[%s319] sm:$0xf]
        %v404 = vld [vmem:[%s319 + $0x48] sm:$0xf]
        %v405 = vld [vmem:[%s319 + $0x90] sm:$0xf]
        %v406 = vld [vmem:[%s319 + $0xd8] sm:$0xf]
        %v407 = vld [vmem:[%s328] sm:$0x1]
        %v409 = vlaneseq
        %v410 = vshrl.u32 %v409, 7
        %v411 = vsub.s32 0, %v410
        %v412 = vrot.slane %v407, %v411
        %v418 = vunpack.c.l.b16 %v403
        %v419 = vunpack.c.l.b16 %v404
        %v420 = vunpack.c.l.b16 %v405
        %v421 = vunpack.c.l.b16 %v406
        %v422 = vpack.c.b16 %v419, %v418
        %v423 = vpack.c.b16 %v421, %v420
        %vm426 = vcmask 261120
        %v428 = vsel %vm426, %v402, 0
        %430 = vmatprep.subr.bf16.mxu0 0
        %431 = vmatpush1.bf16.msra.mxu0 %v422
        %432 = vmatprep.subr.bf16.mxu0 0
        %433 = vmatpush1.bf16.msra.mxu0 %v423
        %434 = vmatprep.subr.bf16.mxu0 0
        %435 = vmatpush1.bf16.msra.mxu0 0
        %436 = vmatprep.subr.bf16.mxu0 0
        %437 = vmatpush1.bf16.msra.mxu0 0
        %438 = vmatprep.subr.bf16.mxu0 0
        %439 = vmatpush1.bf16.msra.mxu0 0
        %440 = vmatprep.subr.bf16.mxu0 0
        %441 = vmatpush1.bf16.msra.mxu0 0
        %442 = vmatprep.subr.bf16.mxu0 0
        %443 = vmatpush1.bf16.msra.mxu0 0
        %444 = vmatprep.subr.bf16.mxu0 0
        %445 = vmatpush1.bf16.msra.mxu0 0
        %446 = vmatprep.subr.bf16.mxu0 0
        %447 = vmatpush1.bf16.msra.mxu0 0
        %448 = vmatprep.subr.bf16.mxu0 0
        %449 = vmatpush1.bf16.msra.mxu0 0
        %450 = vmatprep.subr.bf16.mxu0 0
        %451 = vmatpush1.bf16.msra.mxu0 0
        %452 = vmatprep.subr.bf16.mxu0 0
        %453 = vmatpush1.bf16.msra.mxu0 0
        %454 = vmatprep.subr.bf16.mxu0 0
        %455 = vmatpush1.bf16.msra.mxu0 0
        %456 = vmatprep.subr.bf16.mxu0 0
        %457 = vmatpush1.bf16.msra.mxu0 0
        %458 = vmatprep.subr.bf16.mxu0 0
        %459 = vmatpush1.bf16.msra.mxu0 0
        %460 = vmatprep.subr.bf16.mxu0 0
        %461 = vmatpush1.bf16.msra.mxu0 0
        %462 = vmatprep.mubr.bf16.mxu0 0
        %463 = vmatmul.mubr.bf16.gmra.mrb[0].mxu0 %v428
        %v464 = vpop.f32.mrb[0].mxu0
        %v465 = vadd.f32 %v412, %v464
        %v466 = vpop.f32.mrb[0].mxu0
        %v467 = vpop.f32.mrb[0].mxu0
        %v468 = vadd.f32 %v412, %v467
        %v469 = vpop.f32.mrb[0].mxu0
        %470 = vdwg.mxu0
        %v471 = vpack.c.bf16 %v468, %v465
        %v473 = vunpack.c.l.b16 %v471
        %v474 = vunpack.c.h.b16 %v471
        %v475 = vpack.c.b16 %v473, %v473
        %v476 = vpack.c.b16 %v474, %v474
        %477 = vrot.lane.b32.xlu0 %v475, 120
        %v478 = vpop.permute.xlu0 %477
        %479 = vrot.lane.b32.xlu0 %v476, 120
        %v480 = vpop.permute.xlu0 %479
        %481 = vrot.lane.b32.xlu0 %v475, 112
        %v482 = vpop.permute.xlu0 %481
        %483 = vrot.lane.b32.xlu0 %v476, 112
        %v484 = vpop.permute.xlu0 %483
        %485 = vrot.lane.b32.xlu0 %v475, 104
        %v486 = vpop.permute.xlu0 %485
        %487 = vrot.lane.b32.xlu0 %v476, 104
        %v488 = vpop.permute.xlu0 %487
        %v489 = vld [vmem:[%s4] sm:$0xff]
        %490 = vrot.lane.b32.xlu0 %v475, 96
        %v491 = vpop.permute.xlu0 %490
        %vm492 = vcmask 64512
        %v494 = vsel %vm492, %v475, 0
        %v497 = vsel %vm492, %v491, 0
        %499 = vmatprep.subr.bf16.mxu0 0
        %500 = vmatpush1.bf16.xpose.msra.mxu0 %v497
        %501 = vmatprep.subr.bf16.mxu0 0
        %502 = vmatpush1.bf16.xpose.msra.mxu0 0
        %503 = vmatprep.subr.bf16.mxu0 0
        %504 = vmatpush1.bf16.xpose.msra.mxu0 0
        %505 = vmatprep.subr.bf16.mxu0 0
        %506 = vmatpush1.bf16.xpose.msra.mxu0 0
        %507 = vmatprep.subr.bf16.mxu0 0
        %508 = vmatpush1.bf16.xpose.msra.mxu0 0
        %509 = vmatprep.subr.bf16.mxu0 0
        %510 = vmatpush1.bf16.xpose.msra.mxu0 0
        %511 = vmatprep.subr.bf16.mxu0 0
        %512 = vmatpush1.bf16.xpose.msra.mxu0 0
        %513 = vmatprep.subr.bf16.mxu0 0
        %514 = vmatpush1.bf16.xpose.msra.mxu0 0
        %515 = vmatprep.subr.bf16.mxu0 0
        %516 = vmatpush1.bf16.xpose.msra.mxu0 0
        %517 = vmatprep.subr.bf16.mxu0 0
        %518 = vmatpush1.bf16.xpose.msra.mxu0 0
        %519 = vmatprep.subr.bf16.mxu0 0
        %520 = vmatpush1.bf16.xpose.msra.mxu0 0
        %521 = vmatprep.subr.bf16.mxu0 0
        %522 = vmatpush1.bf16.xpose.msra.mxu0 0
        %523 = vmatprep.subr.bf16.mxu0 0
        %524 = vmatpush1.bf16.xpose.msra.mxu0 0
        %525 = vmatprep.subr.bf16.mxu0 0
        %526 = vmatpush1.bf16.xpose.msra.mxu0 0
        %527 = vmatprep.subr.bf16.mxu0 0
        %528 = vmatpush1.bf16.xpose.msra.mxu0 0
        %529 = vmatprep.subr.bf16.mxu0 0
        %530 = vmatpush1.bf16.xpose.msra.mxu0 0
        %531 = vmatprep.mubr.bf16.mxu0 0
        %532 = vmatmul.mubr.bf16.gmra.mrb[0].mxu0 %v494
        %v533 = vpop.f32.mrb[0].mxu0
        %v534 = vadd.f32 %v489, %v533
        %v535 = vpop.f32.mrb[0].mxu0
        %v536 = vpop.f32.mrb[0].mxu0
        %v537 = vpop.f32.mrb[0].mxu0
        %538 = vdwg.mxu0
        %539 = vrot.lane.b32.xlu0 %v476, 96
        %v540 = vpop.permute.xlu0 %539
        %v542 = vsel %vm492, %v476, 0
        %v545 = vsel %vm492, %v540, 0
        %547 = vmatprep.subr.bf16.mxu0 0
        %548 = vmatpush1.bf16.xpose.msra.mxu0 %v545
        %549 = vmatprep.subr.bf16.mxu0 0
        %550 = vmatpush1.bf16.xpose.msra.mxu0 0
        %551 = vmatprep.subr.bf16.mxu0 0
        %552 = vmatpush1.bf16.xpose.msra.mxu0 0
        %553 = vmatprep.subr.bf16.mxu0 0
        %554 = vmatpush1.bf16.xpose.msra.mxu0 0
        %555 = vmatprep.subr.bf16.mxu0 0
        %556 = vmatpush1.bf16.xpose.msra.mxu0 0
        %557 = vmatprep.subr.bf16.mxu0 0
        %558 = vmatpush1.bf16.xpose.msra.mxu0 0
        %559 = vmatprep.subr.bf16.mxu0 0
        %560 = vmatpush1.bf16.xpose.msra.mxu0 0
        %561 = vmatprep.subr.bf16.mxu0 0
        %562 = vmatpush1.bf16.xpose.msra.mxu0 0
        %563 = vmatprep.subr.bf16.mxu0 0
        %564 = vmatpush1.bf16.xpose.msra.mxu0 0
        %565 = vmatprep.subr.bf16.mxu0 0
        %566 = vmatpush1.bf16.xpose.msra.mxu0 0
        %567 = vmatprep.subr.bf16.mxu0 0
        %568 = vmatpush1.bf16.xpose.msra.mxu0 0
        %569 = vmatprep.subr.bf16.mxu0 0
        %570 = vmatpush1.bf16.xpose.msra.mxu0 0
        %571 = vmatprep.subr.bf16.mxu0 0
        %572 = vmatpush1.bf16.xpose.msra.mxu0 0
        %573 = vmatprep.subr.bf16.mxu0 0
        %574 = vmatpush1.bf16.xpose.msra.mxu0 0
        %575 = vmatprep.subr.bf16.mxu0 0
        %576 = vmatpush1.bf16.xpose.msra.mxu0 0
        %577 = vmatprep.subr.bf16.mxu0 0
        %578 = vmatpush1.bf16.xpose.msra.mxu0 0
        %579 = vmatprep.mubr.bf16.mxu0 0
        %580 = vmatmul.mubr.bf16.gmra.mrb[0].mxu0 %v542
        %v581 = vpop.f32.mrb[0].mxu0
        %v582 = vadd.f32 %v489, %v581
        %v583 = vpop.f32.mrb[0].mxu0
        %v584 = vpop.f32.mrb[0].mxu0
        %v585 = vpop.f32.mrb[0].mxu0
        %586 = vdwg.mxu0
        %v587 = vunpack.c.l.b16 %v478
        %v588 = vpack.c.b16 %v587, %v587
        %589 = vrot.lane.b32.xlu0 %v588, 96
        %v590 = vpop.permute.xlu0 %589
        %v592 = vsel %vm492, %v478, 0
        %v595 = vsel %vm492, %v590, 0
        %597 = vmatprep.subr.bf16.mxu0 0
        %598 = vmatpush1.bf16.xpose.msra.mxu0 %v595
        %599 = vmatprep.subr.bf16.mxu0 0
        %600 = vmatpush1.bf16.xpose.msra.mxu0 0
        %601 = vmatprep.subr.bf16.mxu0 0
        %602 = vmatpush1.bf16.xpose.msra.mxu0 0
        %603 = vmatprep.subr.bf16.mxu0 0
        %604 = vmatpush1.bf16.xpose.msra.mxu0 0
        %605 = vmatprep.subr.bf16.mxu0 0
        %606 = vmatpush1.bf16.xpose.msra.mxu0 0
        %607 = vmatprep.subr.bf16.mxu0 0
        %608 = vmatpush1.bf16.xpose.msra.mxu0 0
        %609 = vmatprep.subr.bf16.mxu0 0
        %610 = vmatpush1.bf16.xpose.msra.mxu0 0
        %611 = vmatprep.subr.bf16.mxu0 0
        %612 = vmatpush1.bf16.xpose.msra.mxu0 0
        %613 = vmatprep.subr.bf16.mxu0 0
        %614 = vmatpush1.bf16.xpose.msra.mxu0 0
        %615 = vmatprep.subr.bf16.mxu0 0
        %616 = vmatpush1.bf16.xpose.msra.mxu0 0
        %617 = vmatprep.subr.bf16.mxu0 0
        %618 = vmatpush1.bf16.xpose.msra.mxu0 0
        %619 = vmatprep.subr.bf16.mxu0 0
        %620 = vmatpush1.bf16.xpose.msra.mxu0 0
        %621 = vmatprep.subr.bf16.mxu0 0
        %622 = vmatpush1.bf16.xpose.msra.mxu0 0
        %623 = vmatprep.subr.bf16.mxu0 0
        %624 = vmatpush1.bf16.xpose.msra.mxu0 0
        %625 = vmatprep.subr.bf16.mxu0 0
        %626 = vmatpush1.bf16.xpose.msra.mxu0 0
        %627 = vmatprep.subr.bf16.mxu0 0
        %628 = vmatpush1.bf16.xpose.msra.mxu0 0
        %629 = vmatprep.mubr.bf16.mxu0 0
        %630 = vmatmul.mubr.bf16.gmra.mrb[0].mxu0 %v592
        %v631 = vpop.f32.mrb[0].mxu0
        %v632 = vadd.f32 %v489, %v631
        %v633 = vpop.f32.mrb[0].mxu0
        %v634 = vpop.f32.mrb[0].mxu0
        %v635 = vpop.f32.mrb[0].mxu0
        %636 = vdwg.mxu0
        %v637 = vunpack.c.l.b16 %v480
        %v638 = vpack.c.b16 %v637, %v637
        %639 = vrot.lane.b32.xlu0 %v638, 96
        %v640 = vpop.permute.xlu0 %639
        %v642 = vsel %vm492, %v480, 0
        %v645 = vsel %vm492, %v640, 0
        %647 = vmatprep.subr.bf16.mxu0 0
        %648 = vmatpush1.bf16.xpose.msra.mxu0 %v645
        %649 = vmatprep.subr.bf16.mxu0 0
        %650 = vmatpush1.bf16.xpose.msra.mxu0 0
        %651 = vmatprep.subr.bf16.mxu0 0
        %652 = vmatpush1.bf16.xpose.msra.mxu0 0
        %653 = vmatprep.subr.bf16.mxu0 0
        %654 = vmatpush1.bf16.xpose.msra.mxu0 0
        %655 = vmatprep.subr.bf16.mxu0 0
        %656 = vmatpush1.bf16.xpose.msra.mxu0 0
        %657 = vmatprep.subr.bf16.mxu0 0
        %658 = vmatpush1.bf16.xpose.msra.mxu0 0
        %659 = vmatprep.subr.bf16.mxu0 0
        %660 = vmatpush1.bf16.xpose.msra.mxu0 0
        %661 = vmatprep.subr.bf16.mxu0 0
        %662 = vmatpush1.bf16.xpose.msra.mxu0 0
        %663 = vmatprep.subr.bf16.mxu0 0
        %664 = vmatpush1.bf16.xpose.msra.mxu0 0
        %665 = vmatprep.subr.bf16.mxu0 0
        %666 = vmatpush1.bf16.xpose.msra.mxu0 0
        %667 = vmatprep.subr.bf16.mxu0 0
        %668 = vmatpush1.bf16.xpose.msra.mxu0 0
        %669 = vmatprep.subr.bf16.mxu0 0
        %670 = vmatpush1.bf16.xpose.msra.mxu0 0
        %671 = vmatprep.subr.bf16.mxu0 0
        %672 = vmatpush1.bf16.xpose.msra.mxu0 0
        %673 = vmatprep.subr.bf16.mxu0 0
        %674 = vmatpush1.bf16.xpose.msra.mxu0 0
        %675 = vmatprep.subr.bf16.mxu0 0
        %676 = vmatpush1.bf16.xpose.msra.mxu0 0
        %677 = vmatprep.subr.bf16.mxu0 0
        %678 = vmatpush1.bf16.xpose.msra.mxu0 0
        %679 = vmatprep.mubr.bf16.mxu0 0
        %680 = vmatmul.mubr.bf16.gmra.mrb[0].mxu0 %v642
        %v681 = vpop.f32.mrb[0].mxu0
        %v682 = vadd.f32 %v489, %v681
        %v683 = vpop.f32.mrb[0].mxu0
        %v684 = vpop.f32.mrb[0].mxu0
        %v685 = vpop.f32.mrb[0].mxu0
        %686 = vdwg.mxu0
        %v687 = vunpack.c.l.b16 %v482
        %v688 = vpack.c.b16 %v687, %v687
        %689 = vrot.lane.b32.xlu0 %v688, 96
        %v690 = vpop.permute.xlu0 %689
        %v692 = vsel %vm492, %v482, 0
        %v695 = vsel %vm492, %v690, 0
        %697 = vmatprep.subr.bf16.mxu0 0
        %698 = vmatpush1.bf16.xpose.msra.mxu0 %v695
        %699 = vmatprep.subr.bf16.mxu0 0
        %700 = vmatpush1.bf16.xpose.msra.mxu0 0
        %701 = vmatprep.subr.bf16.mxu0 0
        %702 = vmatpush1.bf16.xpose.msra.mxu0 0
        %703 = vmatprep.subr.bf16.mxu0 0
        %704 = vmatpush1.bf16.xpose.msra.mxu0 0
        %705 = vmatprep.subr.bf16.mxu0 0
        %706 = vmatpush1.bf16.xpose.msra.mxu0 0
        %707 = vmatprep.subr.bf16.mxu0 0
        %708 = vmatpush1.bf16.xpose.msra.mxu0 0
        %709 = vmatprep.subr.bf16.mxu0 0
        %710 = vmatpush1.bf16.xpose.msra.mxu0 0
        %711 = vmatprep.subr.bf16.mxu0 0
        %712 = vmatpush1.bf16.xpose.msra.mxu0 0
        %713 = vmatprep.subr.bf16.mxu0 0
        %714 = vmatpush1.bf16.xpose.msra.mxu0 0
        %715 = vmatprep.subr.bf16.mxu0 0
        %716 = vmatpush1.bf16.xpose.msra.mxu0 0
        %717 = vmatprep.subr.bf16.mxu0 0
        %718 = vmatpush1.bf16.xpose.msra.mxu0 0
        %719 = vmatprep.subr.bf16.mxu0 0
        %720 = vmatpush1.bf16.xpose.msra.mxu0 0
        %721 = vmatprep.subr.bf16.mxu0 0
        %722 = vmatpush1.bf16.xpose.msra.mxu0 0
        %723 = vmatprep.subr.bf16.mxu0 0
        %724 = vmatpush1.bf16.xpose.msra.mxu0 0
        %725 = vmatprep.subr.bf16.mxu0 0
        %726 = vmatpush1.bf16.xpose.msra.mxu0 0
        %727 = vmatprep.subr.bf16.mxu0 0
        %728 = vmatpush1.bf16.xpose.msra.mxu0 0
        %729 = vmatprep.mubr.bf16.mxu0 0
        %730 = vmatmul.mubr.bf16.gmra.mrb[0].mxu0 %v692
        %v731 = vpop.f32.mrb[0].mxu0
        %v732 = vadd.f32 %v489, %v731
        %v733 = vpop.f32.mrb[0].mxu0
        %v734 = vpop.f32.mrb[0].mxu0
        %v735 = vpop.f32.mrb[0].mxu0
        %736 = vdwg.mxu0
        %v737 = vunpack.c.l.b16 %v484
        %v738 = vpack.c.b16 %v737, %v737
        %739 = vrot.lane.b32.xlu0 %v738, 96
        %v740 = vpop.permute.xlu0 %739
        %v742 = vsel %vm492, %v484, 0
        %v745 = vsel %vm492, %v740, 0
        %747 = vmatprep.subr.bf16.mxu0 0
        %748 = vmatpush1.bf16.xpose.msra.mxu0 %v745
        %749 = vmatprep.subr.bf16.mxu0 0
        %750 = vmatpush1.bf16.xpose.msra.mxu0 0
        %751 = vmatprep.subr.bf16.mxu0 0
        %752 = vmatpush1.bf16.xpose.msra.mxu0 0
        %753 = vmatprep.subr.bf16.mxu0 0
        %754 = vmatpush1.bf16.xpose.msra.mxu0 0
        %755 = vmatprep.subr.bf16.mxu0 0
        %756 = vmatpush1.bf16.xpose.msra.mxu0 0
        %757 = vmatprep.subr.bf16.mxu0 0
        %758 = vmatpush1.bf16.xpose.msra.mxu0 0
        %759 = vmatprep.subr.bf16.mxu0 0
        %760 = vmatpush1.bf16.xpose.msra.mxu0 0
        %761 = vmatprep.subr.bf16.mxu0 0
        %762 = vmatpush1.bf16.xpose.msra.mxu0 0
        %763 = vmatprep.subr.bf16.mxu0 0
        %764 = vmatpush1.bf16.xpose.msra.mxu0 0
        %765 = vmatprep.subr.bf16.mxu0 0
        %766 = vmatpush1.bf16.xpose.msra.mxu0 0
        %767 = vmatprep.subr.bf16.mxu0 0
        %768 = vmatpush1.bf16.xpose.msra.mxu0 0
        %769 = vmatprep.subr.bf16.mxu0 0
        %770 = vmatpush1.bf16.xpose.msra.mxu0 0
        %771 = vmatprep.subr.bf16.mxu0 0
        %772 = vmatpush1.bf16.xpose.msra.mxu0 0
        %773 = vmatprep.subr.bf16.mxu0 0
        %774 = vmatpush1.bf16.xpose.msra.mxu0 0
        %775 = vmatprep.subr.bf16.mxu0 0
        %776 = vmatpush1.bf16.xpose.msra.mxu0 0
        %777 = vmatprep.subr.bf16.mxu0 0
        %778 = vmatpush1.bf16.xpose.msra.mxu0 0
        %779 = vmatprep.mubr.bf16.mxu0 0
        %780 = vmatmul.mubr.bf16.gmra.mrb[0].mxu0 %v742
        %v781 = vpop.f32.mrb[0].mxu0
        %v782 = vadd.f32 %v489, %v781
        %v783 = vpop.f32.mrb[0].mxu0
        %v784 = vpop.f32.mrb[0].mxu0
        %v785 = vpop.f32.mrb[0].mxu0
        %786 = vdwg.mxu0
        %v787 = vunpack.c.l.b16 %v486
        %v788 = vpack.c.b16 %v787, %v787
        %789 = vrot.lane.b32.xlu0 %v788, 96
        %v790 = vpop.permute.xlu0 %789
        %v792 = vsel %vm492, %v486, 0
        %v795 = vsel %vm492, %v790, 0
        %797 = vmatprep.subr.bf16.mxu0 0
        %798 = vmatpush1.bf16.xpose.msra.mxu0 %v795
        %799 = vmatprep.subr.bf16.mxu0 0
        %800 = vmatpush1.bf16.xpose.msra.mxu0 0
        %801 = vmatprep.subr.bf16.mxu0 0
        %802 = vmatpush1.bf16.xpose.msra.mxu0 0
        %803 = vmatprep.subr.bf16.mxu0 0
        %804 = vmatpush1.bf16.xpose.msra.mxu0 0
        %805 = vmatprep.subr.bf16.mxu0 0
        %806 = vmatpush1.bf16.xpose.msra.mxu0 0
        %807 = vmatprep.subr.bf16.mxu0 0
        %808 = vmatpush1.bf16.xpose.msra.mxu0 0
        %809 = vmatprep.subr.bf16.mxu0 0
        %810 = vmatpush1.bf16.xpose.msra.mxu0 0
        %811 = vmatprep.subr.bf16.mxu0 0
        %812 = vmatpush1.bf16.xpose.msra.mxu0 0
        %813 = vmatprep.subr.bf16.mxu0 0
        %814 = vmatpush1.bf16.xpose.msra.mxu0 0
        %815 = vmatprep.subr.bf16.mxu0 0
        %816 = vmatpush1.bf16.xpose.msra.mxu0 0
        %817 = vmatprep.subr.bf16.mxu0 0
        %818 = vmatpush1.bf16.xpose.msra.mxu0 0
        %819 = vmatprep.subr.bf16.mxu0 0
        %820 = vmatpush1.bf16.xpose.msra.mxu0 0
        %821 = vmatprep.subr.bf16.mxu0 0
        %822 = vmatpush1.bf16.xpose.msra.mxu0 0
        %823 = vmatprep.subr.bf16.mxu0 0
        %824 = vmatpush1.bf16.xpose.msra.mxu0 0
        %825 = vmatprep.subr.bf16.mxu0 0
        %826 = vmatpush1.bf16.xpose.msra.mxu0 0
        %827 = vmatprep.subr.bf16.mxu0 0
        %828 = vmatpush1.bf16.xpose.msra.mxu0 0
        %829 = vmatprep.mubr.bf16.mxu0 0
        %830 = vmatmul.mubr.bf16.gmra.mrb[0].mxu0 %v792
        %v831 = vpop.f32.mrb[0].mxu0
        %v832 = vadd.f32 %v489, %v831
        %v833 = vpop.f32.mrb[0].mxu0
        %v834 = vpop.f32.mrb[0].mxu0
        %v835 = vpop.f32.mrb[0].mxu0
        %836 = vdwg.mxu0
        %v837 = vunpack.c.l.b16 %v488
        %v838 = vpack.c.b16 %v837, %v837
        %839 = vrot.lane.b32.xlu0 %v838, 96
        %v840 = vpop.permute.xlu0 %839
        %v842 = vsel %vm492, %v488, 0
        %v845 = vsel %vm492, %v840, 0
        %847 = vmatprep.subr.bf16.mxu0 0
        %848 = vmatpush1.bf16.xpose.msra.mxu0 %v845
        %849 = vmatprep.subr.bf16.mxu0 0
        %850 = vmatpush1.bf16.xpose.msra.mxu0 0
        %851 = vmatprep.subr.bf16.mxu0 0
        %852 = vmatpush1.bf16.xpose.msra.mxu0 0
        %853 = vmatprep.subr.bf16.mxu0 0
        %854 = vmatpush1.bf16.xpose.msra.mxu0 0
        %855 = vmatprep.subr.bf16.mxu0 0
        %856 = vmatpush1.bf16.xpose.msra.mxu0 0
        %857 = vmatprep.subr.bf16.mxu0 0
        %858 = vmatpush1.bf16.xpose.msra.mxu0 0
        %859 = vmatprep.subr.bf16.mxu0 0
        %860 = vmatpush1.bf16.xpose.msra.mxu0 0
        %861 = vmatprep.subr.bf16.mxu0 0
        %862 = vmatpush1.bf16.xpose.msra.mxu0 0
        %863 = vmatprep.subr.bf16.mxu0 0
        %864 = vmatpush1.bf16.xpose.msra.mxu0 0
        %865 = vmatprep.subr.bf16.mxu0 0
        %866 = vmatpush1.bf16.xpose.msra.mxu0 0
        %867 = vmatprep.subr.bf16.mxu0 0
        %868 = vmatpush1.bf16.xpose.msra.mxu0 0
        %869 = vmatprep.subr.bf16.mxu0 0
        %870 = vmatpush1.bf16.xpose.msra.mxu0 0
        %871 = vmatprep.subr.bf16.mxu0 0
        %872 = vmatpush1.bf16.xpose.msra.mxu0 0
        %873 = vmatprep.subr.bf16.mxu0 0
        %874 = vmatpush1.bf16.xpose.msra.mxu0 0
        %875 = vmatprep.subr.bf16.mxu0 0
        %876 = vmatpush1.bf16.xpose.msra.mxu0 0
        %877 = vmatprep.subr.bf16.mxu0 0
        %878 = vmatpush1.bf16.xpose.msra.mxu0 0
        %879 = vmatprep.mubr.bf16.mxu0 0
        %880 = vmatmul.mubr.bf16.gmra.mrb[0].mxu0 %v842
        %v881 = vpop.f32.mrb[0].mxu0
        %v882 = vadd.f32 %v489, %v881
        %v883 = vpop.f32.mrb[0].mxu0
        %v884 = vpop.f32.mrb[0].mxu0
        %v885 = vpop.f32.mrb[0].mxu0
        %886 = vdwg.mxu0
        %v887 = vsel %vm492, %v534, -inf
        %888 = vmax.xlane.f32.xlu0 %v887
        %v889 = vpop.xlane.xlu0 %888
        %v890 = vsel %vm492, %v582, -inf
        %891 = vmax.xlane.f32.xlu0 %v890
        %v892 = vpop.xlane.xlu0 %891
        %v893 = vsel %vm492, %v632, -inf
        %894 = vmax.xlane.f32.xlu0 %v893
        %v895 = vpop.xlane.xlu0 %894
        %v896 = vsel %vm492, %v682, -inf
        %897 = vmax.xlane.f32.xlu0 %v896
        %v898 = vpop.xlane.xlu0 %897
        %v899 = vsel %vm492, %v732, -inf
        %900 = vmax.xlane.f32.xlu0 %v899
        %v901 = vpop.xlane.xlu0 %900
        %v902 = vsel %vm492, %v782, -inf
        %903 = vmax.xlane.f32.xlu0 %v902
        %v904 = vpop.xlane.xlu0 %903
        %v905 = vsel %vm492, %v832, -inf
        %906 = vmax.xlane.f32.xlu0 %v905
        %v907 = vpop.xlane.xlu0 %906
        %v908 = vsel %vm492, %v882, -inf
        %909 = vmax.xlane.f32.xlu0 %v908
        %v910 = vpop.xlane.xlu0 %909
        %v911 = vsub.f32 %v534, %v889
        %v912 = vsub.f32 %v582, %v892
        %v913 = vsub.f32 %v632, %v895
        %v914 = vsub.f32 %v682, %v898
        %v915 = vsub.f32 %v732, %v901
        %v916 = vsub.f32 %v782, %v904
        %v917 = vsub.f32 %v832, %v907
        %v918 = vsub.f32 %v882, %v910
        %v919 = vmul.f32 %v911, 1.442695
        %v920 = vpow.pop %v919
        %v921 = vmul.f32 %v912, 1.442695
        %v922 = vpow.pop %v921
        %v923 = vmul.f32 %v913, 1.442695
        %v924 = vpow.pop %v923
        %v925 = vmul.f32 %v914, 1.442695
        %v926 = vpow.pop %v925
        %v927 = vmul.f32 %v915, 1.442695
        %v928 = vpow.pop %v927
        %v929 = vmul.f32 %v916, 1.442695
        %v930 = vpow.pop %v929
        %v931 = vmul.f32 %v917, 1.442695
        %v932 = vpow.pop %v931
        %v933 = vmul.f32 %v918, 1.442695
        %v934 = vpow.pop %v933
        %v935 = vsel %vm492, %v920, 0.0
        %936 = vadd.xlane.f32.xlu0 %v935
        %v937 = vpop.xlane.xlu0 %936
        %v938 = vsel %vm492, %v922, 0.0
        %939 = vadd.xlane.f32.xlu0 %v938
        %v940 = vpop.xlane.xlu0 %939
        %v941 = vsel %vm492, %v924, 0.0
        %942 = vadd.xlane.f32.xlu0 %v941
        %v943 = vpop.xlane.xlu0 %942
        %v944 = vsel %vm492, %v926, 0.0
        %945 = vadd.xlane.f32.xlu0 %v944
        %v946 = vpop.xlane.xlu0 %945
        %v947 = vsel %vm492, %v928, 0.0
        %948 = vadd.xlane.f32.xlu0 %v947
        %v949 = vpop.xlane.xlu0 %948
        %v950 = vsel %vm492, %v930, 0.0
        %951 = vadd.xlane.f32.xlu0 %v950
        %v952 = vpop.xlane.xlu0 %951
        %v953 = vsel %vm492, %v932, 0.0
        %954 = vadd.xlane.f32.xlu0 %v953
        %v955 = vpop.xlane.xlu0 %954
        %v956 = vsel %vm492, %v934, 0.0
        %957 = vadd.xlane.f32.xlu0 %v956
        %v958 = vpop.xlane.xlu0 %957
        %v959 = vrcp.pop %v937
        %v960 = vrcp.pop %v940
        %v961 = vrcp.pop %v943
        %v962 = vrcp.pop %v946
        %v963 = vrcp.pop %v949
        %v964 = vrcp.pop %v952
        %v965 = vrcp.pop %v955
        %v966 = vrcp.pop %v958
        %v967 = vmul.f32 %v920, %v959
        %v968 = vmul.f32 %v922, %v960
        %v969 = vmul.f32 %v924, %v961
        %v970 = vmul.f32 %v926, %v962
        %v971 = vmul.f32 %v928, %v963
        %v972 = vmul.f32 %v930, %v964
        %v973 = vmul.f32 %v932, %v965
        %v974 = vmul.f32 %v934, %v966
        %v975 = vpack.c.bf16 %v967, %v967
        %v976 = vpack.c.bf16 %v968, %v968
        %v977 = vpack.c.bf16 %v969, %v969
        %v978 = vpack.c.bf16 %v970, %v970
        %v979 = vpack.c.bf16 %v971, %v971
        %v980 = vpack.c.bf16 %v972, %v972
        %v981 = vpack.c.bf16 %v973, %v973
        %v982 = vpack.c.bf16 %v974, %v974
        %983 = vrot.lane.b32.xlu0 %v475, 64
        %v984 = vpop.permute.xlu0 %983
        %v986 = vsel %vm492, %v975, 0
        %vm988 = vcmask 1043456
        %v990 = vsel %vm988, %v984, 0
        %992 = vmatprep.subr.bf16.mxu0 0
        %993 = vmatpush1.bf16.msra.mxu0 %v990
        %994 = vmatprep.subr.bf16.mxu0 0
        %995 = vmatpush1.bf16.msra.mxu0 0
        %996 = vmatprep.subr.bf16.mxu0 0
        %997 = vmatpush1.bf16.msra.mxu0 0
        %998 = vmatprep.subr.bf16.mxu0 0
        %999 = vmatpush1.bf16.msra.mxu0 0
        %1000 = vmatprep.subr.bf16.mxu0 0
        %1001 = vmatpush1.bf16.msra.mxu0 0
        %1002 = vmatprep.subr.bf16.mxu0 0
        %1003 = vmatpush1.bf16.msra.mxu0 0
        %1004 = vmatprep.subr.bf16.mxu0 0
        %1005 = vmatpush1.bf16.msra.mxu0 0
        %1006 = vmatprep.subr.bf16.mxu0 0
        %1007 = vmatpush1.bf16.msra.mxu0 0
        %1008 = vmatprep.subr.bf16.mxu0 0
        %1009 = vmatpush1.bf16.msra.mxu0 0
        %1010 = vmatprep.subr.bf16.mxu0 0
        %1011 = vmatpush1.bf16.msra.mxu0 0
        %1012 = vmatprep.subr.bf16.mxu0 0
        %1013 = vmatpush1.bf16.msra.mxu0 0
        %1014 = vmatprep.subr.bf16.mxu0 0
        %1015 = vmatpush1.bf16.msra.mxu0 0
        %1016 = vmatprep.subr.bf16.mxu0 0
        %1017 = vmatpush1.bf16.msra.mxu0 0
        %1018 = vmatprep.subr.bf16.mxu0 0
        %1019 = vmatpush1.bf16.msra.mxu0 0
        %1020 = vmatprep.subr.bf16.mxu0 0
        %1021 = vmatpush1.bf16.msra.mxu0 0
        %1022 = vmatprep.subr.bf16.mxu0 0
        %1023 = vmatpush1.bf16.msra.mxu0 0
        %1024 = vmatprep.mubr.bf16.mxu0 0
        %1025 = vmatmul.mubr.bf16.gmra.mrb[0].mxu0 %v986
        %v1026 = vpop.f32.mrb[0].mxu0
        %v1027 = vadd.f32 0.0, %v1026
        %v1028 = vpop.f32.mrb[0].mxu0
        %v1029 = vpop.f32.mrb[0].mxu0
        %v1030 = vpop.f32.mrb[0].mxu0
        %1031 = vdwg.mxu0
        %1032 = vrot.lane.b32.xlu0 %v476, 64
        %v1033 = vpop.permute.xlu0 %1032
        %v1035 = vsel %vm492, %v976, 0
        %v1038 = vsel %vm988, %v1033, 0
        %1040 = vmatprep.subr.bf16.mxu0 0
        %1041 = vmatpush1.bf16.msra.mxu0 %v1038
        %1042 = vmatprep.subr.bf16.mxu0 0
        %1043 = vmatpush1.bf16.msra.mxu0 0
        %1044 = vmatprep.subr.bf16.mxu0 0
        %1045 = vmatpush1.bf16.msra.mxu0 0
        %1046 = vmatprep.subr.bf16.mxu0 0
        %1047 = vmatpush1.bf16.msra.mxu0 0
        %1048 = vmatprep.subr.bf16.mxu0 0
        %1049 = vmatpush1.bf16.msra.mxu0 0
        %1050 = vmatprep.subr.bf16.mxu0 0
        %1051 = vmatpush1.bf16.msra.mxu0 0
        %1052 = vmatprep.subr.bf16.mxu0 0
        %1053 = vmatpush1.bf16.msra.mxu0 0
        %1054 = vmatprep.subr.bf16.mxu0 0
        %1055 = vmatpush1.bf16.msra.mxu0 0
        %1056 = vmatprep.subr.bf16.mxu0 0
        %1057 = vmatpush1.bf16.msra.mxu0 0
        %1058 = vmatprep.subr.bf16.mxu0 0
        %1059 = vmatpush1.bf16.msra.mxu0 0
        %1060 = vmatprep.subr.bf16.mxu0 0
        %1061 = vmatpush1.bf16.msra.mxu0 0
        %1062 = vmatprep.subr.bf16.mxu0 0
        %1063 = vmatpush1.bf16.msra.mxu0 0
        %1064 = vmatprep.subr.bf16.mxu0 0
        %1065 = vmatpush1.bf16.msra.mxu0 0
        %1066 = vmatprep.subr.bf16.mxu0 0
        %1067 = vmatpush1.bf16.msra.mxu0 0
        %1068 = vmatprep.subr.bf16.mxu0 0
        %1069 = vmatpush1.bf16.msra.mxu0 0
        %1070 = vmatprep.subr.bf16.mxu0 0
        %1071 = vmatpush1.bf16.msra.mxu0 0
        %1072 = vmatprep.mubr.bf16.mxu0 0
        %1073 = vmatmul.mubr.bf16.gmra.mrb[0].mxu0 %v1035
        %v1074 = vpop.f32.mrb[0].mxu0
        %v1075 = vadd.f32 0.0, %v1074
        %v1076 = vpop.f32.mrb[0].mxu0
        %v1077 = vpop.f32.mrb[0].mxu0
        %v1078 = vpop.f32.mrb[0].mxu0
        %1079 = vdwg.mxu0
        %1080 = vrot.lane.b32.xlu0 %v588, 64
        %v1081 = vpop.permute.xlu0 %1080
        %v1083 = vsel %vm492, %v977, 0
        %v1086 = vsel %vm988, %v1081, 0
        %1088 = vmatprep.subr.bf16.mxu0 0
        %1089 = vmatpush1.bf16.msra.mxu0 %v1086
        %1090 = vmatprep.subr.bf16.mxu0 0
        %1091 = vmatpush1.bf16.msra.mxu0 0
        %1092 = vmatprep.subr.bf16.mxu0 0
        %1093 = vmatpush1.bf16.msra.mxu0 0
        %1094 = vmatprep.subr.bf16.mxu0 0
        %1095 = vmatpush1.bf16.msra.mxu0 0
        %1096 = vmatprep.subr.bf16.mxu0 0
        %1097 = vmatpush1.bf16.msra.mxu0 0
        %1098 = vmatprep.subr.bf16.mxu0 0
        %1099 = vmatpush1.bf16.msra.mxu0 0
        %1100 = vmatprep.subr.bf16.mxu0 0
        %1101 = vmatpush1.bf16.msra.mxu0 0
        %1102 = vmatprep.subr.bf16.mxu0 0
        %1103 = vmatpush1.bf16.msra.mxu0 0
        %1104 = vmatprep.subr.bf16.mxu0 0
        %1105 = vmatpush1.bf16.msra.mxu0 0
        %1106 = vmatprep.subr.bf16.mxu0 0
        %1107 = vmatpush1.bf16.msra.mxu0 0
        %1108 = vmatprep.subr.bf16.mxu0 0
        %1109 = vmatpush1.bf16.msra.mxu0 0
        %1110 = vmatprep.subr.bf16.mxu0 0
        %1111 = vmatpush1.bf16.msra.mxu0 0
        %1112 = vmatprep.subr.bf16.mxu0 0
        %1113 = vmatpush1.bf16.msra.mxu0 0
        %1114 = vmatprep.subr.bf16.mxu0 0
        %1115 = vmatpush1.bf16.msra.mxu0 0
        %1116 = vmatprep.subr.bf16.mxu0 0
        %1117 = vmatpush1.bf16.msra.mxu0 0
        %1118 = vmatprep.subr.bf16.mxu0 0
        %1119 = vmatpush1.bf16.msra.mxu0 0
        %1120 = vmatprep.mubr.bf16.mxu0 0
        %1121 = vmatmul.mubr.bf16.gmra.mrb[0].mxu0 %v1083
        %v1122 = vpop.f32.mrb[0].mxu0
        %v1123 = vadd.f32 0.0, %v1122
        %v1124 = vpop.f32.mrb[0].mxu0
        %v1125 = vpop.f32.mrb[0].mxu0
        %v1126 = vpop.f32.mrb[0].mxu0
        %1127 = vdwg.mxu0
        %1128 = vrot.lane.b32.xlu0 %v638, 64
        %v1129 = vpop.permute.xlu0 %1128
        %v1131 = vsel %vm492, %v978, 0
        %v1134 = vsel %vm988, %v1129, 0
        %1136 = vmatprep.subr.bf16.mxu0 0
        %1137 = vmatpush1.bf16.msra.mxu0 %v1134
        %1138 = vmatprep.subr.bf16.mxu0 0
        %1139 = vmatpush1.bf16.msra.mxu0 0
        %1140 = vmatprep.subr.bf16.mxu0 0
        %1141 = vmatpush1.bf16.msra.mxu0 0
        %1142 = vmatprep.subr.bf16.mxu0 0
        %1143 = vmatpush1.bf16.msra.mxu0 0
        %1144 = vmatprep.subr.bf16.mxu0 0
        %1145 = vmatpush1.bf16.msra.mxu0 0
        %1146 = vmatprep.subr.bf16.mxu0 0
        %1147 = vmatpush1.bf16.msra.mxu0 0
        %1148 = vmatprep.subr.bf16.mxu0 0
        %1149 = vmatpush1.bf16.msra.mxu0 0
        %1150 = vmatprep.subr.bf16.mxu0 0
        %1151 = vmatpush1.bf16.msra.mxu0 0
        %1152 = vmatprep.subr.bf16.mxu0 0
        %1153 = vmatpush1.bf16.msra.mxu0 0
        %1154 = vmatprep.subr.bf16.mxu0 0
        %1155 = vmatpush1.bf16.msra.mxu0 0
        %1156 = vmatprep.subr.bf16.mxu0 0
        %1157 = vmatpush1.bf16.msra.mxu0 0
        %1158 = vmatprep.subr.bf16.mxu0 0
        %1159 = vmatpush1.bf16.msra.mxu0 0
        %1160 = vmatprep.subr.bf16.mxu0 0
        %1161 = vmatpush1.bf16.msra.mxu0 0
        %1162 = vmatprep.subr.bf16.mxu0 0
        %1163 = vmatpush1.bf16.msra.mxu0 0
        %1164 = vmatprep.subr.bf16.mxu0 0
        %1165 = vmatpush1.bf16.msra.mxu0 0
        %1166 = vmatprep.subr.bf16.mxu0 0
        %1167 = vmatpush1.bf16.msra.mxu0 0
        %1168 = vmatprep.mubr.bf16.mxu0 0
        %1169 = vmatmul.mubr.bf16.gmra.mrb[0].mxu0 %v1131
        %v1170 = vpop.f32.mrb[0].mxu0
        %v1171 = vadd.f32 0.0, %v1170
        %v1172 = vpop.f32.mrb[0].mxu0
        %v1173 = vpop.f32.mrb[0].mxu0
        %v1174 = vpop.f32.mrb[0].mxu0
        %1175 = vdwg.mxu0
        %1176 = vrot.lane.b32.xlu0 %v688, 64
        %v1177 = vpop.permute.xlu0 %1176
        %v1179 = vsel %vm492, %v979, 0
        %v1182 = vsel %vm988, %v1177, 0
        %1184 = vmatprep.subr.bf16.mxu0 0
        %1185 = vmatpush1.bf16.msra.mxu0 %v1182
        %1186 = vmatprep.subr.bf16.mxu0 0
        %1187 = vmatpush1.bf16.msra.mxu0 0
        %1188 = vmatprep.subr.bf16.mxu0 0
        %1189 = vmatpush1.bf16.msra.mxu0 0
        %1190 = vmatprep.subr.bf16.mxu0 0
        %1191 = vmatpush1.bf16.msra.mxu0 0
        %1192 = vmatprep.subr.bf16.mxu0 0
        %1193 = vmatpush1.bf16.msra.mxu0 0
        %1194 = vmatprep.subr.bf16.mxu0 0
        %1195 = vmatpush1.bf16.msra.mxu0 0
        %1196 = vmatprep.subr.bf16.mxu0 0
        %1197 = vmatpush1.bf16.msra.mxu0 0
        %1198 = vmatprep.subr.bf16.mxu0 0
        %1199 = vmatpush1.bf16.msra.mxu0 0
        %1200 = vmatprep.subr.bf16.mxu0 0
        %1201 = vmatpush1.bf16.msra.mxu0 0
        %1202 = vmatprep.subr.bf16.mxu0 0
        %1203 = vmatpush1.bf16.msra.mxu0 0
        %1204 = vmatprep.subr.bf16.mxu0 0
        %1205 = vmatpush1.bf16.msra.mxu0 0
        %1206 = vmatprep.subr.bf16.mxu0 0
        %1207 = vmatpush1.bf16.msra.mxu0 0
        %1208 = vmatprep.subr.bf16.mxu0 0
        %1209 = vmatpush1.bf16.msra.mxu0 0
        %1210 = vmatprep.subr.bf16.mxu0 0
        %1211 = vmatpush1.bf16.msra.mxu0 0
        %1212 = vmatprep.subr.bf16.mxu0 0
        %1213 = vmatpush1.bf16.msra.mxu0 0
        %1214 = vmatprep.subr.bf16.mxu0 0
        %1215 = vmatpush1.bf16.msra.mxu0 0
        %1216 = vmatprep.mubr.bf16.mxu0 0
        %1217 = vmatmul.mubr.bf16.gmra.mrb[0].mxu0 %v1179
        %v1218 = vpop.f32.mrb[0].mxu0
        %v1219 = vadd.f32 0.0, %v1218
        %v1220 = vpop.f32.mrb[0].mxu0
        %v1221 = vpop.f32.mrb[0].mxu0
        %v1222 = vpop.f32.mrb[0].mxu0
        %1223 = vdwg.mxu0
        %1224 = vrot.lane.b32.xlu0 %v738, 64
        %v1225 = vpop.permute.xlu0 %1224
        %v1227 = vsel %vm492, %v980, 0
        %v1230 = vsel %vm988, %v1225, 0
        %1232 = vmatprep.subr.bf16.mxu0 0
        %1233 = vmatpush1.bf16.msra.mxu0 %v1230
        %1234 = vmatprep.subr.bf16.mxu0 0
        %1235 = vmatpush1.bf16.msra.mxu0 0
        %1236 = vmatprep.subr.bf16.mxu0 0
        %1237 = vmatpush1.bf16.msra.mxu0 0
        %1238 = vmatprep.subr.bf16.mxu0 0
        %1239 = vmatpush1.bf16.msra.mxu0 0
        %1240 = vmatprep.subr.bf16.mxu0 0
        %1241 = vmatpush1.bf16.msra.mxu0 0
        %1242 = vmatprep.subr.bf16.mxu0 0
        %1243 = vmatpush1.bf16.msra.mxu0 0
        %1244 = vmatprep.subr.bf16.mxu0 0
        %1245 = vmatpush1.bf16.msra.mxu0 0
        %1246 = vmatprep.subr.bf16.mxu0 0
        %1247 = vmatpush1.bf16.msra.mxu0 0
        %1248 = vmatprep.subr.bf16.mxu0 0
        %1249 = vmatpush1.bf16.msra.mxu0 0
        %1250 = vmatprep.subr.bf16.mxu0 0
        %1251 = vmatpush1.bf16.msra.mxu0 0
        %1252 = vmatprep.subr.bf16.mxu0 0
        %1253 = vmatpush1.bf16.msra.mxu0 0
        %1254 = vmatprep.subr.bf16.mxu0 0
        %1255 = vmatpush1.bf16.msra.mxu0 0
        %1256 = vmatprep.subr.bf16.mxu0 0
        %1257 = vmatpush1.bf16.msra.mxu0 0
        %1258 = vmatprep.subr.bf16.mxu0 0
        %1259 = vmatpush1.bf16.msra.mxu0 0
        %1260 = vmatprep.subr.bf16.mxu0 0
        %1261 = vmatpush1.bf16.msra.mxu0 0
        %1262 = vmatprep.subr.bf16.mxu0 0
        %1263 = vmatpush1.bf16.msra.mxu0 0
        %1264 = vmatprep.mubr.bf16.mxu0 0
        %1265 = vmatmul.mubr.bf16.gmra.mrb[0].mxu0 %v1227
        %v1266 = vpop.f32.mrb[0].mxu0
        %v1267 = vadd.f32 0.0, %v1266
        %v1268 = vpop.f32.mrb[0].mxu0
        %v1269 = vpop.f32.mrb[0].mxu0
        %v1270 = vpop.f32.mrb[0].mxu0
        %1271 = vdwg.mxu0
        %1272 = vrot.lane.b32.xlu0 %v788, 64
        %v1273 = vpop.permute.xlu0 %1272
        %v1275 = vsel %vm492, %v981, 0
        %v1278 = vsel %vm988, %v1273, 0
        %1280 = vmatprep.subr.bf16.mxu0 0
        %1281 = vmatpush1.bf16.msra.mxu0 %v1278
        %1282 = vmatprep.subr.bf16.mxu0 0
        %1283 = vmatpush1.bf16.msra.mxu0 0
        %1284 = vmatprep.subr.bf16.mxu0 0
        %1285 = vmatpush1.bf16.msra.mxu0 0
        %1286 = vmatprep.subr.bf16.mxu0 0
        %1287 = vmatpush1.bf16.msra.mxu0 0
        %1288 = vmatprep.subr.bf16.mxu0 0
        %1289 = vmatpush1.bf16.msra.mxu0 0
        %1290 = vmatprep.subr.bf16.mxu0 0
        %1291 = vmatpush1.bf16.msra.mxu0 0
        %1292 = vmatprep.subr.bf16.mxu0 0
        %1293 = vmatpush1.bf16.msra.mxu0 0
        %1294 = vmatprep.subr.bf16.mxu0 0
        %1295 = vmatpush1.bf16.msra.mxu0 0
        %1296 = vmatprep.subr.bf16.mxu0 0
        %1297 = vmatpush1.bf16.msra.mxu0 0
        %1298 = vmatprep.subr.bf16.mxu0 0
        %1299 = vmatpush1.bf16.msra.mxu0 0
        %1300 = vmatprep.subr.bf16.mxu0 0
        %1301 = vmatpush1.bf16.msra.mxu0 0
        %1302 = vmatprep.subr.bf16.mxu0 0
        %1303 = vmatpush1.bf16.msra.mxu0 0
        %1304 = vmatprep.subr.bf16.mxu0 0
        %1305 = vmatpush1.bf16.msra.mxu0 0
        %1306 = vmatprep.subr.bf16.mxu0 0
        %1307 = vmatpush1.bf16.msra.mxu0 0
        %1308 = vmatprep.subr.bf16.mxu0 0
        %1309 = vmatpush1.bf16.msra.mxu0 0
        %1310 = vmatprep.subr.bf16.mxu0 0
        %1311 = vmatpush1.bf16.msra.mxu0 0
        %1312 = vmatprep.mubr.bf16.mxu0 0
        %1313 = vmatmul.mubr.bf16.gmra.mrb[0].mxu0 %v1275
        %v1314 = vpop.f32.mrb[0].mxu0
        %v1315 = vadd.f32 0.0, %v1314
        %v1316 = vpop.f32.mrb[0].mxu0
        %v1317 = vpop.f32.mrb[0].mxu0
        %v1318 = vpop.f32.mrb[0].mxu0
        %1319 = vdwg.mxu0
        %1320 = vrot.lane.b32.xlu0 %v838, 64
        %v1321 = vpop.permute.xlu0 %1320
        %v1323 = vsel %vm492, %v982, 0
        %v1326 = vsel %vm988, %v1321, 0
        %1328 = vmatprep.subr.bf16.mxu0 0
        %1329 = vmatpush1.bf16.msra.mxu0 %v1326
        %1330 = vmatprep.subr.bf16.mxu0 0
        %1331 = vmatpush1.bf16.msra.mxu0 0
        %1332 = vmatprep.subr.bf16.mxu0 0
        %1333 = vmatpush1.bf16.msra.mxu0 0
        %1334 = vmatprep.subr.bf16.mxu0 0
        %1335 = vmatpush1.bf16.msra.mxu0 0
        %1336 = vmatprep.subr.bf16.mxu0 0
        %1337 = vmatpush1.bf16.msra.mxu0 0
        %1338 = vmatprep.subr.bf16.mxu0 0
        %1339 = vmatpush1.bf16.msra.mxu0 0
        %1340 = vmatprep.subr.bf16.mxu0 0
        %1341 = vmatpush1.bf16.msra.mxu0 0
        %1342 = vmatprep.subr.bf16.mxu0 0
        %1343 = vmatpush1.bf16.msra.mxu0 0
        %1344 = vmatprep.subr.bf16.mxu0 0
        %1345 = vmatpush1.bf16.msra.mxu0 0
        %1346 = vmatprep.subr.bf16.mxu0 0
        %1347 = vmatpush1.bf16.msra.mxu0 0
        %1348 = vmatprep.subr.bf16.mxu0 0
        %1349 = vmatpush1.bf16.msra.mxu0 0
        %1350 = vmatprep.subr.bf16.mxu0 0
        %1351 = vmatpush1.bf16.msra.mxu0 0
        %1352 = vmatprep.subr.bf16.mxu0 0
        %1353 = vmatpush1.bf16.msra.mxu0 0
        %1354 = vmatprep.subr.bf16.mxu0 0
        %1355 = vmatpush1.bf16.msra.mxu0 0
        %1356 = vmatprep.subr.bf16.mxu0 0
        %1357 = vmatpush1.bf16.msra.mxu0 0
        %1358 = vmatprep.subr.bf16.mxu0 0
        %1359 = vmatpush1.bf16.msra.mxu0 0
        %1360 = vmatprep.mubr.bf16.mxu0 0
        %1361 = vmatmul.mubr.bf16.gmra.mrb[0].mxu0 %v1323
        %v1362 = vpop.f32.mrb[0].mxu0
        %v1363 = vadd.f32 0.0, %v1362
        %v1364 = vpop.f32.mrb[0].mxu0
        %v1365 = vpop.f32.mrb[0].mxu0
        %v1366 = vpop.f32.mrb[0].mxu0
        %1367 = vdwg.mxu0
        %1370 = vrot.lane.b32.xlu0 %v1123, 8
        %v1371 = vpop.permute.xlu0 %1370
        %1372 = vrot.lane.b32.xlu0 %v1171, 8
        %v1373 = vpop.permute.xlu0 %1372
        %1378 = vrot.lane.b32.xlu0 %v1219, 16
        %v1379 = vpop.permute.xlu0 %1378
        %1380 = vrot.lane.b32.xlu0 %v1267, 16
        %v1381 = vpop.permute.xlu0 %1380
        %1386 = vrot.lane.b32.xlu0 %v1315, 24
        %v1387 = vpop.permute.xlu0 %1386
        %1388 = vrot.lane.b32.xlu0 %v1363, 24
        %v1389 = vpop.permute.xlu0 %1388
        %v1392 = vsel %vm492, %v1027, %v1371
        %v1393 = vsel %vm492, %v1075, %v1373
        %vm1394 = vcmask 130048
        %v1395 = vsel %vm1394, %v1392, %v1379
        %v1396 = vsel %vm1394, %v1393, %v1381
        %vm1397 = vcmask 195584
        %v1398 = vsel %vm1397, %v1395, %v1387
        %v1399 = vsel %vm1397, %v1396, %v1389
        %v1400 = vpack.c.bf16 %v1399, %v1398
        %v1401 = vld [vmem:[%s319 + $0x4] sm:$0xf]
        %v1402 = vld [vmem:[%s319 + $0x4c] sm:$0xf]
        %v1403 = vld [vmem:[%s319 + $0x94] sm:$0xf]
        %v1404 = vld [vmem:[%s319 + $0xdc] sm:$0xf]
        %v1405 = vld [vmem:[%s328 + $0x1] sm:$0x1]
        %v1407 = vlaneseq
        %v1408 = vshrl.u32 %v1407, 7
        %v1409 = vsub.s32 0, %v1408
        %v1410 = vrot.slane %v1405, %v1409
        %v1416 = vunpack.c.l.b16 %v1401
        %v1417 = vunpack.c.l.b16 %v1402
        %v1418 = vunpack.c.l.b16 %v1403
        %v1419 = vunpack.c.l.b16 %v1404
        %v1420 = vpack.c.b16 %v1417, %v1416
        %v1421 = vpack.c.b16 %v1419, %v1418
        %v1425 = vsel %vm426, %v1400, 0
        %1427 = vmatprep.subr.bf16.mxu0 0
        %1428 = vmatpush1.bf16.msra.mxu0 %v1420
        %1429 = vmatprep.subr.bf16.mxu0 0
        %1430 = vmatpush1.bf16.msra.mxu0 %v1421
        %1431 = vmatprep.subr.bf16.mxu0 0
        %1432 = vmatpush1.bf16.msra.mxu0 0
        %1433 = vmatprep.subr.bf16.mxu0 0
        %1434 = vmatpush1.bf16.msra.mxu0 0
        %1435 = vmatprep.subr.bf16.mxu0 0
        %1436 = vmatpush1.bf16.msra.mxu0 0
        %1437 = vmatprep.subr.bf16.mxu0 0
        %1438 = vmatpush1.bf16.msra.mxu0 0
        %1439 = vmatprep.subr.bf16.mxu0 0
        %1440 = vmatpush1.bf16.msra.mxu0 0
        %1441 = vmatprep.subr.bf16.mxu0 0
        %1442 = vmatpush1.bf16.msra.mxu0 0
        %1443 = vmatprep.subr.bf16.mxu0 0
        %1444 = vmatpush1.bf16.msra.mxu0 0
        %1445 = vmatprep.subr.bf16.mxu0 0
        %1446 = vmatpush1.bf16.msra.mxu0 0
        %1447 = vmatprep.subr.bf16.mxu0 0
        %1448 = vmatpush1.bf16.msra.mxu0 0
        %1449 = vmatprep.subr.bf16.mxu0 0
        %1450 = vmatpush1.bf16.msra.mxu0 0
        %1451 = vmatprep.subr.bf16.mxu0 0
        %1452 = vmatpush1.bf16.msra.mxu0 0
        %1453 = vmatprep.subr.bf16.mxu0 0
        %1454 = vmatpush1.bf16.msra.mxu0 0
        %1455 = vmatprep.subr.bf16.mxu0 0
        %1456 = vmatpush1.bf16.msra.mxu0 0
        %1457 = vmatprep.subr.bf16.mxu0 0
        %1458 = vmatpush1.bf16.msra.mxu0 0
        %1459 = vmatprep.mubr.bf16.mxu0 0
        %1460 = vmatmul.mubr.bf16.gmra.mrb[0].mxu0 %v1425
        %v1461 = vpop.f32.mrb[0].mxu0
        %v1462 = vadd.f32 %v1410, %v1461
        %v1463 = vpop.f32.mrb[0].mxu0
        %v1464 = vpop.f32.mrb[0].mxu0
        %v1465 = vadd.f32 %v1410, %v1464
        %v1466 = vpop.f32.mrb[0].mxu0
        %1467 = vdwg.mxu0
        %v1468 = vadd.f32 %v400, %v1462
        %v1469 = vadd.f32 %v401, %v1465
        %v1470 = vld [vmem:[%s328 + $0x2] sm:$0x1]
        %v1471 = vld [vmem:[%s328 + $0x3] sm:$0x1]
        %v1472 = vsel %vm426, %v1468, 0.0
        %1473 = vadd.xlane.f32.xlu0 %v1472
        %v1474 = vpop.xlane.xlu0 %1473
        %v1475 = vsel %vm426, %v1469, 0.0
        %1476 = vadd.xlane.f32.xlu0 %v1475
        %v1477 = vpop.xlane.xlu0 %1476
        %v1478 = vrcp.pop 32.0
        %v1479 = vmul.f32 %v1474, %v1478
        %v1480 = vmul.f32 %v1477, %v1478
        %v1481 = vsub.f32 %v1468, %v1479
        %v1482 = vsub.f32 %v1469, %v1480
        %v1483 = vmul.f32 %v1481, %v1481
        %v1484 = vmul.f32 %v1482, %v1482
        %v1485 = vsel %vm426, %v1483, 0.0
        %1486 = vadd.xlane.f32.xlu0 %v1485
        %v1487 = vpop.xlane.xlu0 %1486
        %v1488 = vsel %vm426, %v1484, 0.0
        %1489 = vadd.xlane.f32.xlu0 %v1488
        %v1490 = vpop.xlane.xlu0 %1489
        %v1491 = vmul.f32 %v1487, %v1478
        %v1492 = vmul.f32 %v1490, %v1478
        %v1493 = vadd.f32 %v1491, 1e-05
        %v1494 = vadd.f32 %v1492, 1e-05
        %v1495 = vrsqrt.pop %v1493
        %v1496 = vrsqrt.pop %v1494
        %v1497 = vmul.f32 %v1481, %v1495
        %v1498 = vmul.f32 %v1482, %v1496
        %v1500 = vlaneseq
        %v1501 = vshrl.u32 %v1500, 7
        %v1502 = vsub.s32 0, %v1501
        %v1503 = vrot.slane %v1470, %v1502
        %v1505 = vmul.f32 %v1497, %v1503
        %v1506 = vmul.f32 %v1498, %v1503
        %v1508 = vlaneseq
        %v1509 = vshrl.u32 %v1508, 7
        %v1510 = vsub.s32 0, %v1509
        %v1511 = vrot.slane %v1471, %v1510
        %v1513 = vadd.f32 %v1505, %v1511
        %v1514 = vadd.f32 %v1506, %v1511
        %v1515 = vpack.c.bf16 %v1514, %v1513
        %v1516 = vld [vmem:[%s319 + $0x8] sm:$0xff]
        %v1517 = vld [vmem:[%s319 + $0x10] sm:$0xff]
        %v1518 = vld [vmem:[%s319 + $0x18] sm:$0xff]
        %v1519 = vld [vmem:[%s319 + $0x20] sm:$0xff]
        %v1520 = vld [vmem:[%s319 + $0x28] sm:$0xff]
        %v1521 = vld [vmem:[%s319 + $0x30] sm:$0xff]
        %v1522 = vld [vmem:[%s319 + $0x38] sm:$0xff]
        %v1523 = vld [vmem:[%s319 + $0x40] sm:$0xff]
        %v1524 = vld [vmem:[%s319 + $0x50] sm:$0xff]
        %v1525 = vld [vmem:[%s319 + $0x58] sm:$0xff]
        %v1526 = vld [vmem:[%s319 + $0x60] sm:$0xff]
        %v1527 = vld [vmem:[%s319 + $0x68] sm:$0xff]
        %v1528 = vld [vmem:[%s319 + $0x70] sm:$0xff]
        %v1529 = vld [vmem:[%s319 + $0x78] sm:$0xff]
        %v1530 = vld [vmem:[%s319 + $0x80] sm:$0xff]
        %v1531 = vld [vmem:[%s319 + $0x88] sm:$0xff]
        %v1532 = vld [vmem:[%s319 + $0x98] sm:$0xff]
        %v1533 = vld [vmem:[%s319 + $0xa0] sm:$0xff]
        %v1534 = vld [vmem:[%s319 + $0xa8] sm:$0xff]
        %v1535 = vld [vmem:[%s319 + $0xb0] sm:$0xff]
        %v1536 = vld [vmem:[%s319 + $0xb8] sm:$0xff]
        %v1537 = vld [vmem:[%s319 + $0xc0] sm:$0xff]
        %v1538 = vld [vmem:[%s319 + $0xc8] sm:$0xff]
        %v1539 = vld [vmem:[%s319 + $0xd0] sm:$0xff]
        %v1540 = vld [vmem:[%s319 + $0xe0] sm:$0xff]
        %v1541 = vld [vmem:[%s319 + $0xe8] sm:$0xff]
        %v1542 = vld [vmem:[%s319 + $0xf0] sm:$0xff]
        %v1543 = vld [vmem:[%s319 + $0xf8] sm:$0xff]
        %v1544 = vld [vmem:[%s319 + $0x100] sm:$0xff]
        %v1545 = vld [vmem:[%s319 + $0x108] sm:$0xff]
        %v1546 = vld [vmem:[%s319 + $0x110] sm:$0xff]
        %v1547 = vld [vmem:[%s319 + $0x118] sm:$0xff]
        %v1548 = vld [vmem:[%s328 + $0x4] sm:$0xff]
        %v1549 = vld [vmem:[%s328 + $0xc] sm:$0xff]
        %v1552 = vlaneseq
        %v1553 = vshrl.u32 %v1552, 7
        %v1554 = vsub.s32 0, %v1553
        %v1555 = vrot.slane %v1548, %v1554
        %v1556 = vlaneseq
        %v1557 = vshrl.u32 %v1556, 7
        %v1558 = vsub.s32 1, %v1557
        %v1559 = vrot.slane %v1548, %v1558
        %v1560 = vlaneseq
        %v1561 = vshrl.u32 %v1560, 7
        %v1562 = vsub.s32 2, %v1561
        %v1563 = vrot.slane %v1548, %v1562
        %v1564 = vlaneseq
        %v1565 = vshrl.u32 %v1564, 7
        %v1566 = vsub.s32 3, %v1565
        %v1567 = vrot.slane %v1548, %v1566
        %v1568 = vlaneseq
        %v1569 = vshrl.u32 %v1568, 7
        %v1570 = vsub.s32 4, %v1569
        %v1571 = vrot.slane %v1548, %v1570
        %v1572 = vlaneseq
        %v1573 = vshrl.u32 %v1572, 7
        %v1574 = vsub.s32 5, %v1573
        %v1575 = vrot.slane %v1548, %v1574
        %v1576 = vlaneseq
        %v1577 = vshrl.u32 %v1576, 7
        %v1578 = vsub.s32 6, %v1577
        %v1579 = vrot.slane %v1548, %v1578
        %v1580 = vlaneseq
        %v1581 = vshrl.u32 %v1580, 7
        %v1582 = vsub.s32 7, %v1581
        %v1583 = vrot.slane %v1548, %v1582
        %v1584 = vlaneseq
        %v1585 = vshrl.u32 %v1584, 7
        %v1586 = vsub.s32 0, %v1585
        %v1587 = vrot.slane %v1549, %v1586
        %v1588 = vlaneseq
        %v1589 = vshrl.u32 %v1588, 7
        %v1590 = vsub.s32 1, %v1589
        %v1591 = vrot.slane %v1549, %v1590
        %v1592 = vlaneseq
        %v1593 = vshrl.u32 %v1592, 7
        %v1594 = vsub.s32 2, %v1593
        %v1595 = vrot.slane %v1549, %v1594
        %v1596 = vlaneseq
        %v1597 = vshrl.u32 %v1596, 7
        %v1598 = vsub.s32 3, %v1597
        %v1599 = vrot.slane %v1549, %v1598
        %v1600 = vlaneseq
        %v1601 = vshrl.u32 %v1600, 7
        %v1602 = vsub.s32 4, %v1601
        %v1603 = vrot.slane %v1549, %v1602
        %v1604 = vlaneseq
        %v1605 = vshrl.u32 %v1604, 7
        %v1606 = vsub.s32 5, %v1605
        %v1607 = vrot.slane %v1549, %v1606
        %v1608 = vlaneseq
        %v1609 = vshrl.u32 %v1608, 7
        %v1610 = vsub.s32 6, %v1609
        %v1611 = vrot.slane %v1549, %v1610
        %v1612 = vlaneseq
        %v1613 = vshrl.u32 %v1612, 7
        %v1614 = vsub.s32 7, %v1613
        %v1615 = vrot.slane %v1549, %v1614
        %v1664 = vunpack.c.l.b16 %v1516
        %v1665 = vunpack.c.h.b16 %v1516
        %v1666 = vunpack.c.l.b16 %v1517
        %v1667 = vunpack.c.h.b16 %v1517
        %v1668 = vunpack.c.l.b16 %v1518
        %v1669 = vunpack.c.h.b16 %v1518
        %v1670 = vunpack.c.l.b16 %v1519
        %v1671 = vunpack.c.h.b16 %v1519
        %v1672 = vunpack.c.l.b16 %v1520
        %v1673 = vunpack.c.h.b16 %v1520
        %v1674 = vunpack.c.l.b16 %v1521
        %v1675 = vunpack.c.h.b16 %v1521
        %v1676 = vunpack.c.l.b16 %v1522
        %v1677 = vunpack.c.h.b16 %v1522
        %v1678 = vunpack.c.l.b16 %v1523
        %v1679 = vunpack.c.h.b16 %v1523
        %v1680 = vunpack.c.l.b16 %v1524
        %v1681 = vunpack.c.h.b16 %v1524
        %v1682 = vunpack.c.l.b16 %v1525
        %v1683 = vunpack.c.h.b16 %v1525
        %v1684 = vunpack.c.l.b16 %v1526
        %v1685 = vunpack.c.h.b16 %v1526
        %v1686 = vunpack.c.l.b16 %v1527
        %v1687 = vunpack.c.h.b16 %v1527
        %v1688 = vunpack.c.l.b16 %v1528
        %v1689 = vunpack.c.h.b16 %v1528
        %v1690 = vunpack.c.l.b16 %v1529
        %v1691 = vunpack.c.h.b16 %v1529
        %v1692 = vunpack.c.l.b16 %v1530
        %v1693 = vunpack.c.h.b16 %v1530
        %v1694 = vunpack.c.l.b16 %v1531
        %v1695 = vunpack.c.h.b16 %v1531
        %v1696 = vunpack.c.l.b16 %v1532
        %v1697 = vunpack.c.h.b16 %v1532
        %v1698 = vunpack.c.l.b16 %v1533
        %v1699 = vunpack.c.h.b16 %v1533
        %v1700 = vunpack.c.l.b16 %v1534
        %v1701 = vunpack.c.h.b16 %v1534
        %v1702 = vunpack.c.l.b16 %v1535
        %v1703 = vunpack.c.h.b16 %v1535
        %v1704 = vunpack.c.l.b16 %v1536
        %v1705 = vunpack.c.h.b16 %v1536
        %v1706 = vunpack.c.l.b16 %v1537
        %v1707 = vunpack.c.h.b16 %v1537
        %v1708 = vunpack.c.l.b16 %v1538
        %v1709 = vunpack.c.h.b16 %v1538
        %v1710 = vunpack.c.l.b16 %v1539
        %v1711 = vunpack.c.h.b16 %v1539
        %v1712 = vunpack.c.l.b16 %v1540
        %v1713 = vunpack.c.h.b16 %v1540
        %v1714 = vunpack.c.l.b16 %v1541
        %v1715 = vunpack.c.h.b16 %v1541
        %v1716 = vunpack.c.l.b16 %v1542
        %v1717 = vunpack.c.h.b16 %v1542
        %v1718 = vunpack.c.l.b16 %v1543
        %v1719 = vunpack.c.h.b16 %v1543
        %v1720 = vunpack.c.l.b16 %v1544
        %v1721 = vunpack.c.h.b16 %v1544
        %v1722 = vunpack.c.l.b16 %v1545
        %v1723 = vunpack.c.h.b16 %v1545
        %v1724 = vunpack.c.l.b16 %v1546
        %v1725 = vunpack.c.h.b16 %v1546
        %v1726 = vunpack.c.l.b16 %v1547
        %v1727 = vunpack.c.h.b16 %v1547
        %v1728 = vpack.c.b16 %v1680, %v1664
        %v1729 = vpack.c.b16 %v1681, %v1665
        %v1730 = vpack.c.b16 %v1682, %v1666
        %v1731 = vpack.c.b16 %v1683, %v1667
        %v1732 = vpack.c.b16 %v1684, %v1668
        %v1733 = vpack.c.b16 %v1685, %v1669
        %v1734 = vpack.c.b16 %v1686, %v1670
        %v1735 = vpack.c.b16 %v1687, %v1671
        %v1736 = vpack.c.b16 %v1688, %v1672
        %v1737 = vpack.c.b16 %v1689, %v1673
        %v1738 = vpack.c.b16 %v1690, %v1674
        %v1739 = vpack.c.b16 %v1691, %v1675
        %v1740 = vpack.c.b16 %v1692, %v1676
        %v1741 = vpack.c.b16 %v1693, %v1677
        %v1742 = vpack.c.b16 %v1694, %v1678
        %v1743 = vpack.c.b16 %v1695, %v1679
        %v1744 = vpack.c.b16 %v1712, %v1696
        %v1745 = vpack.c.b16 %v1713, %v1697
        %v1746 = vpack.c.b16 %v1714, %v1698
        %v1747 = vpack.c.b16 %v1715, %v1699
        %v1748 = vpack.c.b16 %v1716, %v1700
        %v1749 = vpack.c.b16 %v1717, %v1701
        %v1750 = vpack.c.b16 %v1718, %v1702
        %v1751 = vpack.c.b16 %v1719, %v1703
        %v1752 = vpack.c.b16 %v1720, %v1704
        %v1753 = vpack.c.b16 %v1721, %v1705
        %v1754 = vpack.c.b16 %v1722, %v1706
        %v1755 = vpack.c.b16 %v1723, %v1707
        %v1756 = vpack.c.b16 %v1724, %v1708
        %v1757 = vpack.c.b16 %v1725, %v1709
        %v1758 = vpack.c.b16 %v1726, %v1710
        %v1759 = vpack.c.b16 %v1727, %v1711
        %v1793 = vsel %vm426, %v1515, 0
        %1795 = vmatprep.subr.bf16.mxu0 %v1729
        %1796 = vmatpush1.bf16.msra.mxu0 %v1728
        %1797 = vmatprep.subr.bf16.mxu0 %v1745
        %1798 = vmatpush1.bf16.msra.mxu0 %v1744
        %1799 = vmatprep.subr.bf16.mxu0 0
        %1800 = vmatpush1.bf16.msra.mxu0 0
        %1801 = vmatprep.subr.bf16.mxu0 0
        %1802 = vmatpush1.bf16.msra.mxu0 0
        %1803 = vmatprep.subr.bf16.mxu0 0
        %1804 = vmatpush1.bf16.msra.mxu0 0
        %1805 = vmatprep.subr.bf16.mxu0 0
        %1806 = vmatpush1.bf16.msra.mxu0 0
        %1807 = vmatprep.subr.bf16.mxu0 0
        %1808 = vmatpush1.bf16.msra.mxu0 0
        %1809 = vmatprep.subr.bf16.mxu0 0
        %1810 = vmatpush1.bf16.msra.mxu0 0
        %1811 = vmatprep.subr.bf16.mxu0 0
        %1812 = vmatpush1.bf16.msra.mxu0 0
        %1813 = vmatprep.subr.bf16.mxu0 0
        %1814 = vmatpush1.bf16.msra.mxu0 0
        %1815 = vmatprep.subr.bf16.mxu0 0
        %1816 = vmatpush1.bf16.msra.mxu0 0
        %1817 = vmatprep.subr.bf16.mxu0 0
        %1818 = vmatpush1.bf16.msra.mxu0 0
        %1819 = vmatprep.subr.bf16.mxu0 0
        %1820 = vmatpush1.bf16.msra.mxu0 0
        %1821 = vmatprep.subr.bf16.mxu0 0
        %1822 = vmatpush1.bf16.msra.mxu0 0
        %1823 = vmatprep.subr.bf16.mxu0 0
        %1824 = vmatpush1.bf16.msra.mxu0 0
        %1825 = vmatprep.subr.bf16.mxu0 0
        %1826 = vmatpush1.bf16.msra.mxu0 0
        %1827 = vmatprep.mubr.bf16.mxu0 0
        %1828 = vmatmul.mubr.bf16.gmra.mrb[0].mxu0 %v1793
        %v1829 = vpop.f32.mrb[0].mxu0
        %v1830 = vadd.f32 %v1555, %v1829
        %v1831 = vpop.f32.mrb[0].mxu0
        %v1832 = vadd.f32 %v1559, %v1831
        %v1833 = vpop.f32.mrb[0].mxu0
        %v1834 = vadd.f32 %v1555, %v1833
        %v1835 = vpop.f32.mrb[0].mxu0
        %v1836 = vadd.f32 %v1559, %v1835
        %1837 = vdwg.mxu0
        %1838 = vmatprep.subr.bf16.mxu0 %v1731
        %1839 = vmatpush1.bf16.msra.mxu0 %v1730
        %1840 = vmatprep.subr.bf16.mxu0 %v1747
        %1841 = vmatpush1.bf16.msra.mxu0 %v1746
        %1842 = vmatprep.subr.bf16.mxu0 0
        %1843 = vmatpush1.bf16.msra.mxu0 0
        %1844 = vmatprep.subr.bf16.mxu0 0
        %1845 = vmatpush1.bf16.msra.mxu0 0
        %1846 = vmatprep.subr.bf16.mxu0 0
        %1847 = vmatpush1.bf16.msra.mxu0 0
        %1848 = vmatprep.subr.bf16.mxu0 0
        %1849 = vmatpush1.bf16.msra.mxu0 0
        %1850 = vmatprep.subr.bf16.mxu0 0
        %1851 = vmatpush1.bf16.msra.mxu0 0
        %1852 = vmatprep.subr.bf16.mxu0 0
        %1853 = vmatpush1.bf16.msra.mxu0 0
        %1854 = vmatprep.subr.bf16.mxu0 0
        %1855 = vmatpush1.bf16.msra.mxu0 0
        %1856 = vmatprep.subr.bf16.mxu0 0
        %1857 = vmatpush1.bf16.msra.mxu0 0
        %1858 = vmatprep.subr.bf16.mxu0 0
        %1859 = vmatpush1.bf16.msra.mxu0 0
        %1860 = vmatprep.subr.bf16.mxu0 0
        %1861 = vmatpush1.bf16.msra.mxu0 0
        %1862 = vmatprep.subr.bf16.mxu0 0
        %1863 = vmatpush1.bf16.msra.mxu0 0
        %1864 = vmatprep.subr.bf16.mxu0 0
        %1865 = vmatpush1.bf16.msra.mxu0 0
        %1866 = vmatprep.subr.bf16.mxu0 0
        %1867 = vmatpush1.bf16.msra.mxu0 0
        %1868 = vmatprep.subr.bf16.mxu0 0
        %1869 = vmatpush1.bf16.msra.mxu0 0
        %1870 = vmatprep.mubr.bf16.mxu0 0
        %1871 = vmatmul.mubr.bf16.gmra.mrb[0].mxu0 %v1793
        %v1872 = vpop.f32.mrb[0].mxu0
        %v1873 = vadd.f32 %v1563, %v1872
        %v1874 = vpop.f32.mrb[0].mxu0
        %v1875 = vadd.f32 %v1567, %v1874
        %v1876 = vpop.f32.mrb[0].mxu0
        %v1877 = vadd.f32 %v1563, %v1876
        %v1878 = vpop.f32.mrb[0].mxu0
        %v1879 = vadd.f32 %v1567, %v1878
        %1880 = vdwg.mxu0
        %1881 = vmatprep.subr.bf16.mxu0 %v1733
        %1882 = vmatpush1.bf16.msra.mxu0 %v1732
        %1883 = vmatprep.subr.bf16.mxu0 %v1749
        %1884 = vmatpush1.bf16.msra.mxu0 %v1748
        %1885 = vmatprep.subr.bf16.mxu0 0
        %1886 = vmatpush1.bf16.msra.mxu0 0
        %1887 = vmatprep.subr.bf16.mxu0 0
        %1888 = vmatpush1.bf16.msra.mxu0 0
        %1889 = vmatprep.subr.bf16.mxu0 0
        %1890 = vmatpush1.bf16.msra.mxu0 0
        %1891 = vmatprep.subr.bf16.mxu0 0
        %1892 = vmatpush1.bf16.msra.mxu0 0
        %1893 = vmatprep.subr.bf16.mxu0 0
        %1894 = vmatpush1.bf16.msra.mxu0 0
        %1895 = vmatprep.subr.bf16.mxu0 0
        %1896 = vmatpush1.bf16.msra.mxu0 0
        %1897 = vmatprep.subr.bf16.mxu0 0
        %1898 = vmatpush1.bf16.msra.mxu0 0
        %1899 = vmatprep.subr.bf16.mxu0 0
        %1900 = vmatpush1.bf16.msra.mxu0 0
        %1901 = vmatprep.subr.bf16.mxu0 0
        %1902 = vmatpush1.bf16.msra.mxu0 0
        %1903 = vmatprep.subr.bf16.mxu0 0
        %1904 = vmatpush1.bf16.msra.mxu0 0
        %1905 = vmatprep.subr.bf16.mxu0 0
        %1906 = vmatpush1.bf16.msra.mxu0 0
        %1907 = vmatprep.subr.bf16.mxu0 0
        %1908 = vmatpush1.bf16.msra.mxu0 0
        %1909 = vmatprep.subr.bf16.mxu0 0
        %1910 = vmatpush1.bf16.msra.mxu0 0
        %1911 = vmatprep.subr.bf16.mxu0 0
        %1912 = vmatpush1.bf16.msra.mxu0 0
        %1913 = vmatprep.mubr.bf16.mxu0 0
        %1914 = vmatmul.mubr.bf16.gmra.mrb[0].mxu0 %v1793
        %v1915 = vpop.f32.mrb[0].mxu0
        %v1916 = vadd.f32 %v1571, %v1915
        %v1917 = vpop.f32.mrb[0].mxu0
        %v1918 = vadd.f32 %v1575, %v1917
        %v1919 = vpop.f32.mrb[0].mxu0
        %v1920 = vadd.f32 %v1571, %v1919
        %v1921 = vpop.f32.mrb[0].mxu0
        %v1922 = vadd.f32 %v1575, %v1921
        %1923 = vdwg.mxu0
        %1924 = vmatprep.subr.bf16.mxu0 %v1735
        %1925 = vmatpush1.bf16.msra.mxu0 %v1734
        %1926 = vmatprep.subr.bf16.mxu0 %v1751
        %1927 = vmatpush1.bf16.msra.mxu0 %v1750
        %1928 = vmatprep.subr.bf16.mxu0 0
        %1929 = vmatpush1.bf16.msra.mxu0 0
        %1930 = vmatprep.subr.bf16.mxu0 0
        %1931 = vmatpush1.bf16.msra.mxu0 0
        %1932 = vmatprep.subr.bf16.mxu0 0
        %1933 = vmatpush1.bf16.msra.mxu0 0
        %1934 = vmatprep.subr.bf16.mxu0 0
        %1935 = vmatpush1.bf16.msra.mxu0 0
        %1936 = vmatprep.subr.bf16.mxu0 0
        %1937 = vmatpush1.bf16.msra.mxu0 0
        %1938 = vmatprep.subr.bf16.mxu0 0
        %1939 = vmatpush1.bf16.msra.mxu0 0
        %1940 = vmatprep.subr.bf16.mxu0 0
        %1941 = vmatpush1.bf16.msra.mxu0 0
        %1942 = vmatprep.subr.bf16.mxu0 0
        %1943 = vmatpush1.bf16.msra.mxu0 0
        %1944 = vmatprep.subr.bf16.mxu0 0
        %1945 = vmatpush1.bf16.msra.mxu0 0
        %1946 = vmatprep.subr.bf16.mxu0 0
        %1947 = vmatpush1.bf16.msra.mxu0 0
        %1948 = vmatprep.subr.bf16.mxu0 0
        %1949 = vmatpush1.bf16.msra.mxu0 0
        %1950 = vmatprep.subr.bf16.mxu0 0
        %1951 = vmatpush1.bf16.msra.mxu0 0
        %1952 = vmatprep.subr.bf16.mxu0 0
        %1953 = vmatpush1.bf16.msra.mxu0 0
        %1954 = vmatprep.subr.bf16.mxu0 0
        %1955 = vmatpush1.bf16.msra.mxu0 0
        %1956 = vmatprep.mubr.bf16.mxu0 0
        %1957 = vmatmul.mubr.bf16.gmra.mrb[0].mxu0 %v1793
        %v1958 = vpop.f32.mrb[0].mxu0
        %v1959 = vadd.f32 %v1579, %v1958
        %v1960 = vpop.f32.mrb[0].mxu0
        %v1961 = vadd.f32 %v1583, %v1960
        %v1962 = vpop.f32.mrb[0].mxu0
        %v1963 = vadd.f32 %v1579, %v1962
        %v1964 = vpop.f32.mrb[0].mxu0
        %v1965 = vadd.f32 %v1583, %v1964
        %1966 = vdwg.mxu0
        %1967 = vmatprep.subr.bf16.mxu0 %v1737
        %1968 = vmatpush1.bf16.msra.mxu0 %v1736
        %1969 = vmatprep.subr.bf16.mxu0 %v1753
        %1970 = vmatpush1.bf16.msra.mxu0 %v1752
        %1971 = vmatprep.subr.bf16.mxu0 0
        %1972 = vmatpush1.bf16.msra.mxu0 0
        %1973 = vmatprep.subr.bf16.mxu0 0
        %1974 = vmatpush1.bf16.msra.mxu0 0
        %1975 = vmatprep.subr.bf16.mxu0 0
        %1976 = vmatpush1.bf16.msra.mxu0 0
        %1977 = vmatprep.subr.bf16.mxu0 0
        %1978 = vmatpush1.bf16.msra.mxu0 0
        %1979 = vmatprep.subr.bf16.mxu0 0
        %1980 = vmatpush1.bf16.msra.mxu0 0
        %1981 = vmatprep.subr.bf16.mxu0 0
        %1982 = vmatpush1.bf16.msra.mxu0 0
        %1983 = vmatprep.subr.bf16.mxu0 0
        %1984 = vmatpush1.bf16.msra.mxu0 0
        %1985 = vmatprep.subr.bf16.mxu0 0
        %1986 = vmatpush1.bf16.msra.mxu0 0
        %1987 = vmatprep.subr.bf16.mxu0 0
        %1988 = vmatpush1.bf16.msra.mxu0 0
        %1989 = vmatprep.subr.bf16.mxu0 0
        %1990 = vmatpush1.bf16.msra.mxu0 0
        %1991 = vmatprep.subr.bf16.mxu0 0
        %1992 = vmatpush1.bf16.msra.mxu0 0
        %1993 = vmatprep.subr.bf16.mxu0 0
        %1994 = vmatpush1.bf16.msra.mxu0 0
        %1995 = vmatprep.subr.bf16.mxu0 0
        %1996 = vmatpush1.bf16.msra.mxu0 0
        %1997 = vmatprep.subr.bf16.mxu0 0
        %1998 = vmatpush1.bf16.msra.mxu0 0
        %1999 = vmatprep.mubr.bf16.mxu0 0
        %2000 = vmatmul.mubr.bf16.gmra.mrb[0].mxu0 %v1793
        %v2001 = vpop.f32.mrb[0].mxu0
        %v2002 = vadd.f32 %v1587, %v2001
        %v2003 = vpop.f32.mrb[0].mxu0
        %v2004 = vadd.f32 %v1591, %v2003
        %v2005 = vpop.f32.mrb[0].mxu0
        %v2006 = vadd.f32 %v1587, %v2005
        %v2007 = vpop.f32.mrb[0].mxu0
        %v2008 = vadd.f32 %v1591, %v2007
        %2009 = vdwg.mxu0
        %2010 = vmatprep.subr.bf16.mxu0 %v1739
        %2011 = vmatpush1.bf16.msra.mxu0 %v1738
        %2012 = vmatprep.subr.bf16.mxu0 %v1755
        %2013 = vmatpush1.bf16.msra.mxu0 %v1754
        %2014 = vmatprep.subr.bf16.mxu0 0
        %2015 = vmatpush1.bf16.msra.mxu0 0
        %2016 = vmatprep.subr.bf16.mxu0 0
        %2017 = vmatpush1.bf16.msra.mxu0 0
        %2018 = vmatprep.subr.bf16.mxu0 0
        %2019 = vmatpush1.bf16.msra.mxu0 0
        %2020 = vmatprep.subr.bf16.mxu0 0
        %2021 = vmatpush1.bf16.msra.mxu0 0
        %2022 = vmatprep.subr.bf16.mxu0 0
        %2023 = vmatpush1.bf16.msra.mxu0 0
        %2024 = vmatprep.subr.bf16.mxu0 0
        %2025 = vmatpush1.bf16.msra.mxu0 0
        %2026 = vmatprep.subr.bf16.mxu0 0
        %2027 = vmatpush1.bf16.msra.mxu0 0
        %2028 = vmatprep.subr.bf16.mxu0 0
        %2029 = vmatpush1.bf16.msra.mxu0 0
        %2030 = vmatprep.subr.bf16.mxu0 0
        %2031 = vmatpush1.bf16.msra.mxu0 0
        %2032 = vmatprep.subr.bf16.mxu0 0
        %2033 = vmatpush1.bf16.msra.mxu0 0
        %2034 = vmatprep.subr.bf16.mxu0 0
        %2035 = vmatpush1.bf16.msra.mxu0 0
        %2036 = vmatprep.subr.bf16.mxu0 0
        %2037 = vmatpush1.bf16.msra.mxu0 0
        %2038 = vmatprep.subr.bf16.mxu0 0
        %2039 = vmatpush1.bf16.msra.mxu0 0
        %2040 = vmatprep.subr.bf16.mxu0 0
        %2041 = vmatpush1.bf16.msra.mxu0 0
        %2042 = vmatprep.mubr.bf16.mxu0 0
        %2043 = vmatmul.mubr.bf16.gmra.mrb[0].mxu0 %v1793
        %v2044 = vpop.f32.mrb[0].mxu0
        %v2045 = vadd.f32 %v1595, %v2044
        %v2046 = vpop.f32.mrb[0].mxu0
        %v2047 = vadd.f32 %v1599, %v2046
        %v2048 = vpop.f32.mrb[0].mxu0
        %v2049 = vadd.f32 %v1595, %v2048
        %v2050 = vpop.f32.mrb[0].mxu0
        %v2051 = vadd.f32 %v1599, %v2050
        %2052 = vdwg.mxu0
        %2053 = vmatprep.subr.bf16.mxu0 %v1741
        %2054 = vmatpush1.bf16.msra.mxu0 %v1740
        %2055 = vmatprep.subr.bf16.mxu0 %v1757
        %2056 = vmatpush1.bf16.msra.mxu0 %v1756
        %2057 = vmatprep.subr.bf16.mxu0 0
        %2058 = vmatpush1.bf16.msra.mxu0 0
        %2059 = vmatprep.subr.bf16.mxu0 0
        %2060 = vmatpush1.bf16.msra.mxu0 0
        %2061 = vmatprep.subr.bf16.mxu0 0
        %2062 = vmatpush1.bf16.msra.mxu0 0
        %2063 = vmatprep.subr.bf16.mxu0 0
        %2064 = vmatpush1.bf16.msra.mxu0 0
        %2065 = vmatprep.subr.bf16.mxu0 0
        %2066 = vmatpush1.bf16.msra.mxu0 0
        %2067 = vmatprep.subr.bf16.mxu0 0
        %2068 = vmatpush1.bf16.msra.mxu0 0
        %2069 = vmatprep.subr.bf16.mxu0 0
        %2070 = vmatpush1.bf16.msra.mxu0 0
        %2071 = vmatprep.subr.bf16.mxu0 0
        %2072 = vmatpush1.bf16.msra.mxu0 0
        %2073 = vmatprep.subr.bf16.mxu0 0
        %2074 = vmatpush1.bf16.msra.mxu0 0
        %2075 = vmatprep.subr.bf16.mxu0 0
        %2076 = vmatpush1.bf16.msra.mxu0 0
        %2077 = vmatprep.subr.bf16.mxu0 0
        %2078 = vmatpush1.bf16.msra.mxu0 0
        %2079 = vmatprep.subr.bf16.mxu0 0
        %2080 = vmatpush1.bf16.msra.mxu0 0
        %2081 = vmatprep.subr.bf16.mxu0 0
        %2082 = vmatpush1.bf16.msra.mxu0 0
        %2083 = vmatprep.subr.bf16.mxu0 0
        %2084 = vmatpush1.bf16.msra.mxu0 0
        %2085 = vmatprep.mubr.bf16.mxu0 0
        %2086 = vmatmul.mubr.bf16.gmra.mrb[0].mxu0 %v1793
        %v2087 = vpop.f32.mrb[0].mxu0
        %v2088 = vadd.f32 %v1603, %v2087
        %v2089 = vpop.f32.mrb[0].mxu0
        %v2090 = vadd.f32 %v1607, %v2089
        %v2091 = vpop.f32.mrb[0].mxu0
        %v2092 = vadd.f32 %v1603, %v2091
        %v2093 = vpop.f32.mrb[0].mxu0
        %v2094 = vadd.f32 %v1607, %v2093
        %2095 = vdwg.mxu0
        %2096 = vmatprep.subr.bf16.mxu0 %v1743
        %2097 = vmatpush1.bf16.msra.mxu0 %v1742
        %2098 = vmatprep.subr.bf16.mxu0 %v1759
        %2099 = vmatpush1.bf16.msra.mxu0 %v1758
        %2100 = vmatprep.subr.bf16.mxu0 0
        %2101 = vmatpush1.bf16.msra.mxu0 0
        %2102 = vmatprep.subr.bf16.mxu0 0
        %2103 = vmatpush1.bf16.msra.mxu0 0
        %2104 = vmatprep.subr.bf16.mxu0 0
        %2105 = vmatpush1.bf16.msra.mxu0 0
        %2106 = vmatprep.subr.bf16.mxu0 0
        %2107 = vmatpush1.bf16.msra.mxu0 0
        %2108 = vmatprep.subr.bf16.mxu0 0
        %2109 = vmatpush1.bf16.msra.mxu0 0
        %2110 = vmatprep.subr.bf16.mxu0 0
        %2111 = vmatpush1.bf16.msra.mxu0 0
        %2112 = vmatprep.subr.bf16.mxu0 0
        %2113 = vmatpush1.bf16.msra.mxu0 0
        %2114 = vmatprep.subr.bf16.mxu0 0
        %2115 = vmatpush1.bf16.msra.mxu0 0
        %2116 = vmatprep.subr.bf16.mxu0 0
        %2117 = vmatpush1.bf16.msra.mxu0 0
        %2118 = vmatprep.subr.bf16.mxu0 0
        %2119 = vmatpush1.bf16.msra.mxu0 0
        %2120 = vmatprep.subr.bf16.mxu0 0
        %2121 = vmatpush1.bf16.msra.mxu0 0
        %2122 = vmatprep.subr.bf16.mxu0 0
        %2123 = vmatpush1.bf16.msra.mxu0 0
        %2124 = vmatprep.subr.bf16.mxu0 0
        %2125 = vmatpush1.bf16.msra.mxu0 0
        %2126 = vmatprep.subr.bf16.mxu0 0
        %2127 = vmatpush1.bf16.msra.mxu0 0
        %2128 = vmatprep.mubr.bf16.mxu0 0
        %2129 = vmatmul.mubr.bf16.gmra.mrb[0].mxu0 %v1793
        %v2130 = vpop.f32.mrb[0].mxu0
        %v2131 = vadd.f32 %v1611, %v2130
        %v2132 = vpop.f32.mrb[0].mxu0
        %v2133 = vadd.f32 %v1615, %v2132
        %v2134 = vpop.f32.mrb[0].mxu0
        %v2135 = vadd.f32 %v1611, %v2134
        %v2136 = vpop.f32.mrb[0].mxu0
        %v2137 = vadd.f32 %v1615, %v2136
        %2138 = vdwg.mxu0
        %v2139 = vmax.f32 %v1830, 0.0
        %v2140 = vmax.f32 %v1832, 0.0
        %v2141 = vmax.f32 %v1873, 0.0
        %v2142 = vmax.f32 %v1875, 0.0
        %v2143 = vmax.f32 %v1916, 0.0
        %v2144 = vmax.f32 %v1918, 0.0
        %v2145 = vmax.f32 %v1959, 0.0
        %v2146 = vmax.f32 %v1961, 0.0
        %v2147 = vmax.f32 %v2002, 0.0
        %v2148 = vmax.f32 %v2004, 0.0
        %v2149 = vmax.f32 %v2045, 0.0
        %v2150 = vmax.f32 %v2047, 0.0
        %v2151 = vmax.f32 %v2088, 0.0
        %v2152 = vmax.f32 %v2090, 0.0
        %v2153 = vmax.f32 %v2131, 0.0
        %v2154 = vmax.f32 %v2133, 0.0
        %v2155 = vmax.f32 %v1834, 0.0
        %v2156 = vmax.f32 %v1836, 0.0
        %v2157 = vmax.f32 %v1877, 0.0
        %v2158 = vmax.f32 %v1879, 0.0
        %v2159 = vmax.f32 %v1920, 0.0
        %v2160 = vmax.f32 %v1922, 0.0
        %v2161 = vmax.f32 %v1963, 0.0
        %v2162 = vmax.f32 %v1965, 0.0
        %v2163 = vmax.f32 %v2006, 0.0
        %v2164 = vmax.f32 %v2008, 0.0
        %v2165 = vmax.f32 %v2049, 0.0
        %v2166 = vmax.f32 %v2051, 0.0
        %v2167 = vmax.f32 %v2092, 0.0
        %v2168 = vmax.f32 %v2094, 0.0
        %v2169 = vmax.f32 %v2135, 0.0
        %v2170 = vmax.f32 %v2137, 0.0
        %v2171 = vpack.c.bf16 %v2155, %v2139
        %v2172 = vpack.c.bf16 %v2156, %v2140
        %v2173 = vpack.c.bf16 %v2157, %v2141
        %v2174 = vpack.c.bf16 %v2158, %v2142
        %v2175 = vpack.c.bf16 %v2159, %v2143
        %v2176 = vpack.c.bf16 %v2160, %v2144
        %v2177 = vpack.c.bf16 %v2161, %v2145
        %v2178 = vpack.c.bf16 %v2162, %v2146
        %v2179 = vpack.c.bf16 %v2163, %v2147
        %v2180 = vpack.c.bf16 %v2164, %v2148
        %v2181 = vpack.c.bf16 %v2165, %v2149
        %v2182 = vpack.c.bf16 %v2166, %v2150
        %v2183 = vpack.c.bf16 %v2167, %v2151
        %v2184 = vpack.c.bf16 %v2168, %v2152
        %v2185 = vpack.c.bf16 %v2169, %v2153
        %v2186 = vpack.c.bf16 %v2170, %v2154
        %v2187 = vld [vmem:[%s324] sm:$0xf]
        %v2188 = vld [vmem:[%s324 + $0x4] sm:$0xf]
        %v2189 = vld [vmem:[%s324 + $0x8] sm:$0xf]
        %v2190 = vld [vmem:[%s324 + $0xc] sm:$0xf]
        %v2191 = vld [vmem:[%s324 + $0x10] sm:$0xf]
        %v2192 = vld [vmem:[%s324 + $0x14] sm:$0xf]
        %v2193 = vld [vmem:[%s324 + $0x18] sm:$0xf]
        %v2194 = vld [vmem:[%s324 + $0x1c] sm:$0xf]
        %v2195 = vld [vmem:[%s324 + $0x20] sm:$0xf]
        %v2196 = vld [vmem:[%s324 + $0x24] sm:$0xf]
        %v2197 = vld [vmem:[%s324 + $0x28] sm:$0xf]
        %v2198 = vld [vmem:[%s324 + $0x2c] sm:$0xf]
        %v2199 = vld [vmem:[%s324 + $0x30] sm:$0xf]
        %v2200 = vld [vmem:[%s324 + $0x34] sm:$0xf]
        %v2201 = vld [vmem:[%s324 + $0x38] sm:$0xf]
        %v2202 = vld [vmem:[%s324 + $0x3c] sm:$0xf]
        %v2203 = vld [vmem:[%s324 + $0x40] sm:$0xf]
        %v2204 = vld [vmem:[%s324 + $0x44] sm:$0xf]
        %v2205 = vld [vmem:[%s324 + $0x48] sm:$0xf]
        %v2206 = vld [vmem:[%s324 + $0x4c] sm:$0xf]
        %v2207 = vld [vmem:[%s324 + $0x50] sm:$0xf]
        %v2208 = vld [vmem:[%s324 + $0x54] sm:$0xf]
        %v2209 = vld [vmem:[%s324 + $0x58] sm:$0xf]
        %v2210 = vld [vmem:[%s324 + $0x5c] sm:$0xf]
        %v2211 = vld [vmem:[%s324 + $0x60] sm:$0xf]
        %v2212 = vld [vmem:[%s324 + $0x64] sm:$0xf]
        %v2213 = vld [vmem:[%s324 + $0x68] sm:$0xf]
        %v2214 = vld [vmem:[%s324 + $0x6c] sm:$0xf]
        %v2215 = vld [vmem:[%s324 + $0x70] sm:$0xf]
        %v2216 = vld [vmem:[%s324 + $0x74] sm:$0xf]
        %v2217 = vld [vmem:[%s324 + $0x78] sm:$0xf]
        %v2218 = vld [vmem:[%s324 + $0x7c] sm:$0xf]
        %v2219 = vld [vmem:[%s324 + $0x80] sm:$0xf]
        %v2220 = vld [vmem:[%s324 + $0x84] sm:$0xf]
        %v2221 = vld [vmem:[%s324 + $0x88] sm:$0xf]
        %v2222 = vld [vmem:[%s324 + $0x8c] sm:$0xf]
        %v2223 = vld [vmem:[%s324 + $0x90] sm:$0xf]
        %v2224 = vld [vmem:[%s324 + $0x94] sm:$0xf]
        %v2225 = vld [vmem:[%s324 + $0x98] sm:$0xf]
        %v2226 = vld [vmem:[%s324 + $0x9c] sm:$0xf]
        %v2227 = vld [vmem:[%s324 + $0xa0] sm:$0xf]
        %v2228 = vld [vmem:[%s324 + $0xa4] sm:$0xf]
        %v2229 = vld [vmem:[%s324 + $0xa8] sm:$0xf]
        %v2230 = vld [vmem:[%s324 + $0xac] sm:$0xf]
        %v2231 = vld [vmem:[%s324 + $0xb0] sm:$0xf]
        %v2232 = vld [vmem:[%s324 + $0xb4] sm:$0xf]
        %v2233 = vld [vmem:[%s324 + $0xb8] sm:$0xf]
        %v2234 = vld [vmem:[%s324 + $0xbc] sm:$0xf]
        %v2235 = vld [vmem:[%s324 + $0xc0] sm:$0xf]
        %v2236 = vld [vmem:[%s324 + $0xc4] sm:$0xf]
        %v2237 = vld [vmem:[%s324 + $0xc8] sm:$0xf]
        %v2238 = vld [vmem:[%s324 + $0xcc] sm:$0xf]
        %v2239 = vld [vmem:[%s324 + $0xd0] sm:$0xf]
        %v2240 = vld [vmem:[%s324 + $0xd4] sm:$0xf]
        %v2241 = vld [vmem:[%s324 + $0xd8] sm:$0xf]
        %v2242 = vld [vmem:[%s324 + $0xdc] sm:$0xf]
        %v2243 = vld [vmem:[%s324 + $0xe0] sm:$0xf]
        %v2244 = vld [vmem:[%s324 + $0xe4] sm:$0xf]
        %v2245 = vld [vmem:[%s324 + $0xe8] sm:$0xf]
        %v2246 = vld [vmem:[%s324 + $0xec] sm:$0xf]
        %v2247 = vld [vmem:[%s324 + $0xf0] sm:$0xf]
        %v2248 = vld [vmem:[%s324 + $0xf4] sm:$0xf]
        %v2249 = vld [vmem:[%s324 + $0xf8] sm:$0xf]
        %v2250 = vld [vmem:[%s324 + $0xfc] sm:$0xf]
        %v2251 = vld [vmem:[%s324 + $0x100] sm:$0xf]
        %v2252 = vld [vmem:[%s324 + $0x104] sm:$0xf]
        %v2253 = vld [vmem:[%s324 + $0x108] sm:$0xf]
        %v2254 = vld [vmem:[%s324 + $0x10c] sm:$0xf]
        %v2255 = vld [vmem:[%s324 + $0x110] sm:$0xf]
        %v2256 = vld [vmem:[%s324 + $0x114] sm:$0xf]
        %v2257 = vld [vmem:[%s324 + $0x118] sm:$0xf]
        %v2258 = vld [vmem:[%s324 + $0x11c] sm:$0xf]
        %v2259 = vld [vmem:[%s324 + $0x120] sm:$0xf]
        %v2260 = vld [vmem:[%s324 + $0x124] sm:$0xf]
        %v2261 = vld [vmem:[%s324 + $0x128] sm:$0xf]
        %v2262 = vld [vmem:[%s324 + $0x12c] sm:$0xf]
        %v2263 = vld [vmem:[%s324 + $0x130] sm:$0xf]
        %v2264 = vld [vmem:[%s324 + $0x134] sm:$0xf]
        %v2265 = vld [vmem:[%s324 + $0x138] sm:$0xf]
        %v2266 = vld [vmem:[%s324 + $0x13c] sm:$0xf]
        %v2267 = vld [vmem:[%s324 + $0x140] sm:$0xf]
        %v2268 = vld [vmem:[%s324 + $0x144] sm:$0xf]
        %v2269 = vld [vmem:[%s324 + $0x148] sm:$0xf]
        %v2270 = vld [vmem:[%s324 + $0x14c] sm:$0xf]
        %v2271 = vld [vmem:[%s324 + $0x150] sm:$0xf]
        %v2272 = vld [vmem:[%s324 + $0x154] sm:$0xf]
        %v2273 = vld [vmem:[%s324 + $0x158] sm:$0xf]
        %v2274 = vld [vmem:[%s324 + $0x15c] sm:$0xf]
        %v2275 = vld [vmem:[%s324 + $0x160] sm:$0xf]
        %v2276 = vld [vmem:[%s324 + $0x164] sm:$0xf]
        %v2277 = vld [vmem:[%s324 + $0x168] sm:$0xf]
        %v2278 = vld [vmem:[%s324 + $0x16c] sm:$0xf]
        %v2279 = vld [vmem:[%s324 + $0x170] sm:$0xf]
        %v2280 = vld [vmem:[%s324 + $0x174] sm:$0xf]
        %v2281 = vld [vmem:[%s324 + $0x178] sm:$0xf]
        %v2282 = vld [vmem:[%s324 + $0x17c] sm:$0xf]
        %v2283 = vld [vmem:[%s324 + $0x180] sm:$0xf]
        %v2284 = vld [vmem:[%s324 + $0x184] sm:$0xf]
        %v2285 = vld [vmem:[%s324 + $0x188] sm:$0xf]
        %v2286 = vld [vmem:[%s324 + $0x18c] sm:$0xf]
        %v2287 = vld [vmem:[%s324 + $0x190] sm:$0xf]
        %v2288 = vld [vmem:[%s324 + $0x194] sm:$0xf]
        %v2289 = vld [vmem:[%s324 + $0x198] sm:$0xf]
        %v2290 = vld [vmem:[%s324 + $0x19c] sm:$0xf]
        %v2291 = vld [vmem:[%s324 + $0x1a0] sm:$0xf]
        %v2292 = vld [vmem:[%s324 + $0x1a4] sm:$0xf]
        %v2293 = vld [vmem:[%s324 + $0x1a8] sm:$0xf]
        %v2294 = vld [vmem:[%s324 + $0x1ac] sm:$0xf]
        %v2295 = vld [vmem:[%s324 + $0x1b0] sm:$0xf]
        %v2296 = vld [vmem:[%s324 + $0x1b4] sm:$0xf]
        %v2297 = vld [vmem:[%s324 + $0x1b8] sm:$0xf]
        %v2298 = vld [vmem:[%s324 + $0x1bc] sm:$0xf]
        %v2299 = vld [vmem:[%s324 + $0x1c0] sm:$0xf]
        %v2300 = vld [vmem:[%s324 + $0x1c4] sm:$0xf]
        %v2301 = vld [vmem:[%s324 + $0x1c8] sm:$0xf]
        %v2302 = vld [vmem:[%s324 + $0x1cc] sm:$0xf]
        %v2303 = vld [vmem:[%s324 + $0x1d0] sm:$0xf]
        %v2304 = vld [vmem:[%s324 + $0x1d4] sm:$0xf]
        %v2305 = vld [vmem:[%s324 + $0x1d8] sm:$0xf]
        %v2306 = vld [vmem:[%s324 + $0x1dc] sm:$0xf]
        %v2307 = vld [vmem:[%s324 + $0x1e0] sm:$0xf]
        %v2308 = vld [vmem:[%s324 + $0x1e4] sm:$0xf]
        %v2309 = vld [vmem:[%s324 + $0x1e8] sm:$0xf]
        %v2310 = vld [vmem:[%s324 + $0x1ec] sm:$0xf]
        %v2311 = vld [vmem:[%s324 + $0x1f0] sm:$0xf]
        %v2312 = vld [vmem:[%s324 + $0x1f4] sm:$0xf]
        %v2313 = vld [vmem:[%s324 + $0x1f8] sm:$0xf]
        %v2314 = vld [vmem:[%s324 + $0x1fc] sm:$0xf]
        %v2315 = vld [vmem:[%s324 + $0x200] sm:$0xf]
        %v2316 = vld [vmem:[%s324 + $0x204] sm:$0xf]
        %v2317 = vld [vmem:[%s324 + $0x208] sm:$0xf]
        %v2318 = vld [vmem:[%s324 + $0x20c] sm:$0xf]
        %v2319 = vld [vmem:[%s324 + $0x210] sm:$0xf]
        %v2320 = vld [vmem:[%s324 + $0x214] sm:$0xf]
        %v2321 = vld [vmem:[%s324 + $0x218] sm:$0xf]
        %v2322 = vld [vmem:[%s324 + $0x21c] sm:$0xf]
        %v2323 = vld [vmem:[%s324 + $0x220] sm:$0xf]
        %v2324 = vld [vmem:[%s324 + $0x224] sm:$0xf]
        %v2325 = vld [vmem:[%s324 + $0x228] sm:$0xf]
        %v2326 = vld [vmem:[%s324 + $0x22c] sm:$0xf]
        %v2327 = vld [vmem:[%s324 + $0x230] sm:$0xf]
        %v2328 = vld [vmem:[%s324 + $0x234] sm:$0xf]
        %v2329 = vld [vmem:[%s324 + $0x238] sm:$0xf]
        %v2330 = vld [vmem:[%s324 + $0x23c] sm:$0xf]
        %v2331 = vld [vmem:[%s324 + $0x240] sm:$0xf]
        %v2332 = vld [vmem:[%s324 + $0x244] sm:$0xf]
        %v2333 = vld [vmem:[%s324 + $0x248] sm:$0xf]
        %v2334 = vld [vmem:[%s324 + $0x24c] sm:$0xf]
        %v2335 = vld [vmem:[%s324 + $0x250] sm:$0xf]
        %v2336 = vld [vmem:[%s324 + $0x254] sm:$0xf]
        %v2337 = vld [vmem:[%s324 + $0x258] sm:$0xf]
        %v2338 = vld [vmem:[%s324 + $0x25c] sm:$0xf]
        %v2339 = vld [vmem:[%s324 + $0x260] sm:$0xf]
        %v2340 = vld [vmem:[%s324 + $0x264] sm:$0xf]
        %v2341 = vld [vmem:[%s324 + $0x268] sm:$0xf]
        %v2342 = vld [vmem:[%s324 + $0x26c] sm:$0xf]
        %v2343 = vld [vmem:[%s324 + $0x270] sm:$0xf]
        %v2344 = vld [vmem:[%s324 + $0x274] sm:$0xf]
        %v2345 = vld [vmem:[%s324 + $0x278] sm:$0xf]
        %v2346 = vld [vmem:[%s324 + $0x27c] sm:$0xf]
        %v2347 = vld [vmem:[%s324 + $0x280] sm:$0xf]
        %v2348 = vld [vmem:[%s324 + $0x284] sm:$0xf]
        %v2349 = vld [vmem:[%s324 + $0x288] sm:$0xf]
        %v2350 = vld [vmem:[%s324 + $0x28c] sm:$0xf]
        %v2351 = vld [vmem:[%s324 + $0x290] sm:$0xf]
        %v2352 = vld [vmem:[%s324 + $0x294] sm:$0xf]
        %v2353 = vld [vmem:[%s324 + $0x298] sm:$0xf]
        %v2354 = vld [vmem:[%s324 + $0x29c] sm:$0xf]
        %v2355 = vld [vmem:[%s324 + $0x2a0] sm:$0xf]
        %v2356 = vld [vmem:[%s324 + $0x2a4] sm:$0xf]
        %v2357 = vld [vmem:[%s324 + $0x2a8] sm:$0xf]
        %v2358 = vld [vmem:[%s324 + $0x2ac] sm:$0xf]
        %v2359 = vld [vmem:[%s324 + $0x2b0] sm:$0xf]
        %v2360 = vld [vmem:[%s324 + $0x2b4] sm:$0xf]
        %v2361 = vld [vmem:[%s324 + $0x2b8] sm:$0xf]
        %v2362 = vld [vmem:[%s324 + $0x2bc] sm:$0xf]
        %v2363 = vld [vmem:[%s324 + $0x2c0] sm:$0xf]
        %v2364 = vld [vmem:[%s324 + $0x2c4] sm:$0xf]
        %v2365 = vld [vmem:[%s324 + $0x2c8] sm:$0xf]
        %v2366 = vld [vmem:[%s324 + $0x2cc] sm:$0xf]
        %v2367 = vld [vmem:[%s324 + $0x2d0] sm:$0xf]
        %v2368 = vld [vmem:[%s324 + $0x2d4] sm:$0xf]
        %v2369 = vld [vmem:[%s324 + $0x2d8] sm:$0xf]
        %v2370 = vld [vmem:[%s324 + $0x2dc] sm:$0xf]
        %v2371 = vld [vmem:[%s324 + $0x2e0] sm:$0xf]
        %v2372 = vld [vmem:[%s324 + $0x2e4] sm:$0xf]
        %v2373 = vld [vmem:[%s324 + $0x2e8] sm:$0xf]
        %v2374 = vld [vmem:[%s324 + $0x2ec] sm:$0xf]
        %v2375 = vld [vmem:[%s324 + $0x2f0] sm:$0xf]
        %v2376 = vld [vmem:[%s324 + $0x2f4] sm:$0xf]
        %v2377 = vld [vmem:[%s324 + $0x2f8] sm:$0xf]
        %v2378 = vld [vmem:[%s324 + $0x2fc] sm:$0xf]
        %v2379 = vld [vmem:[%s324 + $0x300] sm:$0xf]
        %v2380 = vld [vmem:[%s324 + $0x304] sm:$0xf]
        %v2381 = vld [vmem:[%s324 + $0x308] sm:$0xf]
        %v2382 = vld [vmem:[%s324 + $0x30c] sm:$0xf]
        %v2383 = vld [vmem:[%s324 + $0x310] sm:$0xf]
        %v2384 = vld [vmem:[%s324 + $0x314] sm:$0xf]
        %v2385 = vld [vmem:[%s324 + $0x318] sm:$0xf]
        %v2386 = vld [vmem:[%s324 + $0x31c] sm:$0xf]
        %v2387 = vld [vmem:[%s324 + $0x320] sm:$0xf]
        %v2388 = vld [vmem:[%s324 + $0x324] sm:$0xf]
        %v2389 = vld [vmem:[%s324 + $0x328] sm:$0xf]
        %v2390 = vld [vmem:[%s324 + $0x32c] sm:$0xf]
        %v2391 = vld [vmem:[%s324 + $0x330] sm:$0xf]
        %v2392 = vld [vmem:[%s324 + $0x334] sm:$0xf]
        %v2393 = vld [vmem:[%s324 + $0x338] sm:$0xf]
        %v2394 = vld [vmem:[%s324 + $0x33c] sm:$0xf]
        %v2395 = vld [vmem:[%s324 + $0x340] sm:$0xf]
        %v2396 = vld [vmem:[%s324 + $0x344] sm:$0xf]
        %v2397 = vld [vmem:[%s324 + $0x348] sm:$0xf]
        %v2398 = vld [vmem:[%s324 + $0x34c] sm:$0xf]
        %v2399 = vld [vmem:[%s324 + $0x350] sm:$0xf]
        %v2400 = vld [vmem:[%s324 + $0x354] sm:$0xf]
        %v2401 = vld [vmem:[%s324 + $0x358] sm:$0xf]
        %v2402 = vld [vmem:[%s324 + $0x35c] sm:$0xf]
        %v2403 = vld [vmem:[%s324 + $0x360] sm:$0xf]
        %v2404 = vld [vmem:[%s324 + $0x364] sm:$0xf]
        %v2405 = vld [vmem:[%s324 + $0x368] sm:$0xf]
        %v2406 = vld [vmem:[%s324 + $0x36c] sm:$0xf]
        %v2407 = vld [vmem:[%s324 + $0x370] sm:$0xf]
        %v2408 = vld [vmem:[%s324 + $0x374] sm:$0xf]
        %v2409 = vld [vmem:[%s324 + $0x378] sm:$0xf]
        %v2410 = vld [vmem:[%s324 + $0x37c] sm:$0xf]
        %v2411 = vld [vmem:[%s324 + $0x380] sm:$0xf]
        %v2412 = vld [vmem:[%s324 + $0x384] sm:$0xf]
        %v2413 = vld [vmem:[%s324 + $0x388] sm:$0xf]
        %v2414 = vld [vmem:[%s324 + $0x38c] sm:$0xf]
        %v2415 = vld [vmem:[%s324 + $0x390] sm:$0xf]
        %v2416 = vld [vmem:[%s324 + $0x394] sm:$0xf]
        %v2417 = vld [vmem:[%s324 + $0x398] sm:$0xf]
        %v2418 = vld [vmem:[%s324 + $0x39c] sm:$0xf]
        %v2419 = vld [vmem:[%s324 + $0x3a0] sm:$0xf]
        %v2420 = vld [vmem:[%s324 + $0x3a4] sm:$0xf]
        %v2421 = vld [vmem:[%s324 + $0x3a8] sm:$0xf]
        %v2422 = vld [vmem:[%s324 + $0x3ac] sm:$0xf]
        %v2423 = vld [vmem:[%s324 + $0x3b0] sm:$0xf]
        %v2424 = vld [vmem:[%s324 + $0x3b4] sm:$0xf]
        %v2425 = vld [vmem:[%s324 + $0x3b8] sm:$0xf]
        %v2426 = vld [vmem:[%s324 + $0x3bc] sm:$0xf]
        %v2427 = vld [vmem:[%s324 + $0x3c0] sm:$0xf]
        %v2428 = vld [vmem:[%s324 + $0x3c4] sm:$0xf]
        %v2429 = vld [vmem:[%s324 + $0x3c8] sm:$0xf]
        %v2430 = vld [vmem:[%s324 + $0x3cc] sm:$0xf]
        %v2431 = vld [vmem:[%s324 + $0x3d0] sm:$0xf]
        %v2432 = vld [vmem:[%s324 + $0x3d4] sm:$0xf]
        %v2433 = vld [vmem:[%s324 + $0x3d8] sm:$0xf]
        %v2434 = vld [vmem:[%s324 + $0x3dc] sm:$0xf]
        %v2435 = vld [vmem:[%s324 + $0x3e0] sm:$0xf]
        %v2436 = vld [vmem:[%s324 + $0x3e4] sm:$0xf]
        %v2437 = vld [vmem:[%s324 + $0x3e8] sm:$0xf]
        %v2438 = vld [vmem:[%s324 + $0x3ec] sm:$0xf]
        %v2439 = vld [vmem:[%s324 + $0x3f0] sm:$0xf]
        %v2440 = vld [vmem:[%s324 + $0x3f4] sm:$0xf]
        %v2441 = vld [vmem:[%s324 + $0x3f8] sm:$0xf]
        %v2442 = vld [vmem:[%s324 + $0x3fc] sm:$0xf]
        %v2443 = vld [vmem:[%s328 + $0x14] sm:$0x1]
        %v2445 = vlaneseq
        %v2446 = vshrl.u32 %v2445, 7
        %v2447 = vsub.s32 0, %v2446
        %v2448 = vrot.slane %v2443, %v2447
        %v2706 = vunpack.c.l.b16 %v2187
        %v2707 = vunpack.c.l.b16 %v2188
        %v2708 = vunpack.c.l.b16 %v2189
        %v2709 = vunpack.c.l.b16 %v2190
        %v2710 = vunpack.c.l.b16 %v2191
        %v2711 = vunpack.c.l.b16 %v2192
        %v2712 = vunpack.c.l.b16 %v2193
        %v2713 = vunpack.c.l.b16 %v2194
        %v2714 = vunpack.c.l.b16 %v2195
        %v2715 = vunpack.c.l.b16 %v2196
        %v2716 = vunpack.c.l.b16 %v2197
        %v2717 = vunpack.c.l.b16 %v2198
        %v2718 = vunpack.c.l.b16 %v2199
        %v2719 = vunpack.c.l.b16 %v2200
        %v2720 = vunpack.c.l.b16 %v2201
        %v2721 = vunpack.c.l.b16 %v2202
        %v2722 = vunpack.c.l.b16 %v2203
        %v2723 = vunpack.c.l.b16 %v2204
        %v2724 = vunpack.c.l.b16 %v2205
        %v2725 = vunpack.c.l.b16 %v2206
        %v2726 = vunpack.c.l.b16 %v2207
        %v2727 = vunpack.c.l.b16 %v2208
        %v2728 = vunpack.c.l.b16 %v2209
        %v2729 = vunpack.c.l.b16 %v2210
        %v2730 = vunpack.c.l.b16 %v2211
        %v2731 = vunpack.c.l.b16 %v2212
        %v2732 = vunpack.c.l.b16 %v2213
        %v2733 = vunpack.c.l.b16 %v2214
        %v2734 = vunpack.c.l.b16 %v2215
        %v2735 = vunpack.c.l.b16 %v2216
        %v2736 = vunpack.c.l.b16 %v2217
        %v2737 = vunpack.c.l.b16 %v2218
        %v2738 = vunpack.c.l.b16 %v2219
        %v2739 = vunpack.c.l.b16 %v2220
        %v2740 = vunpack.c.l.b16 %v2221
        %v2741 = vunpack.c.l.b16 %v2222
        %v2742 = vunpack.c.l.b16 %v2223
        %v2743 = vunpack.c.l.b16 %v2224
        %v2744 = vunpack.c.l.b16 %v2225
        %v2745 = vunpack.c.l.b16 %v2226
        %v2746 = vunpack.c.l.b16 %v2227
        %v2747 = vunpack.c.l.b16 %v2228
        %v2748 = vunpack.c.l.b16 %v2229
        %v2749 = vunpack.c.l.b16 %v2230
        %v2750 = vunpack.c.l.b16 %v2231
        %v2751 = vunpack.c.l.b16 %v2232
        %v2752 = vunpack.c.l.b16 %v2233
        %v2753 = vunpack.c.l.b16 %v2234
        %v2754 = vunpack.c.l.b16 %v2235
        %v2755 = vunpack.c.l.b16 %v2236
        %v2756 = vunpack.c.l.b16 %v2237
        %v2757 = vunpack.c.l.b16 %v2238
        %v2758 = vunpack.c.l.b16 %v2239
        %v2759 = vunpack.c.l.b16 %v2240
        %v2760 = vunpack.c.l.b16 %v2241
        %v2761 = vunpack.c.l.b16 %v2242
        %v2762 = vunpack.c.l.b16 %v2243
        %v2763 = vunpack.c.l.b16 %v2244
        %v2764 = vunpack.c.l.b16 %v2245
        %v2765 = vunpack.c.l.b16 %v2246
        %v2766 = vunpack.c.l.b16 %v2247
        %v2767 = vunpack.c.l.b16 %v2248
        %v2768 = vunpack.c.l.b16 %v2249
        %v2769 = vunpack.c.l.b16 %v2250
        %v2770 = vunpack.c.l.b16 %v2251
        %v2771 = vunpack.c.l.b16 %v2252
        %v2772 = vunpack.c.l.b16 %v2253
        %v2773 = vunpack.c.l.b16 %v2254
        %v2774 = vunpack.c.l.b16 %v2255
        %v2775 = vunpack.c.l.b16 %v2256
        %v2776 = vunpack.c.l.b16 %v2257
        %v2777 = vunpack.c.l.b16 %v2258
        %v2778 = vunpack.c.l.b16 %v2259
        %v2779 = vunpack.c.l.b16 %v2260
        %v2780 = vunpack.c.l.b16 %v2261
        %v2781 = vunpack.c.l.b16 %v2262
        %v2782 = vunpack.c.l.b16 %v2263
        %v2783 = vunpack.c.l.b16 %v2264
        %v2784 = vunpack.c.l.b16 %v2265
        %v2785 = vunpack.c.l.b16 %v2266
        %v2786 = vunpack.c.l.b16 %v2267
        %v2787 = vunpack.c.l.b16 %v2268
        %v2788 = vunpack.c.l.b16 %v2269
        %v2789 = vunpack.c.l.b16 %v2270
        %v2790 = vunpack.c.l.b16 %v2271
        %v2791 = vunpack.c.l.b16 %v2272
        %v2792 = vunpack.c.l.b16 %v2273
        %v2793 = vunpack.c.l.b16 %v2274
        %v2794 = vunpack.c.l.b16 %v2275
        %v2795 = vunpack.c.l.b16 %v2276
        %v2796 = vunpack.c.l.b16 %v2277
        %v2797 = vunpack.c.l.b16 %v2278
        %v2798 = vunpack.c.l.b16 %v2279
        %v2799 = vunpack.c.l.b16 %v2280
        %v2800 = vunpack.c.l.b16 %v2281
        %v2801 = vunpack.c.l.b16 %v2282
        %v2802 = vunpack.c.l.b16 %v2283
        %v2803 = vunpack.c.l.b16 %v2284
        %v2804 = vunpack.c.l.b16 %v2285
        %v2805 = vunpack.c.l.b16 %v2286
        %v2806 = vunpack.c.l.b16 %v2287
        %v2807 = vunpack.c.l.b16 %v2288
        %v2808 = vunpack.c.l.b16 %v2289
        %v2809 = vunpack.c.l.b16 %v2290
        %v2810 = vunpack.c.l.b16 %v2291
        %v2811 = vunpack.c.l.b16 %v2292
        %v2812 = vunpack.c.l.b16 %v2293
        %v2813 = vunpack.c.l.b16 %v2294
        %v2814 = vunpack.c.l.b16 %v2295
        %v2815 = vunpack.c.l.b16 %v2296
        %v2816 = vunpack.c.l.b16 %v2297
        %v2817 = vunpack.c.l.b16 %v2298
        %v2818 = vunpack.c.l.b16 %v2299
        %v2819 = vunpack.c.l.b16 %v2300
        %v2820 = vunpack.c.l.b16 %v2301
        %v2821 = vunpack.c.l.b16 %v2302
        %v2822 = vunpack.c.l.b16 %v2303
        %v2823 = vunpack.c.l.b16 %v2304
        %v2824 = vunpack.c.l.b16 %v2305
        %v2825 = vunpack.c.l.b16 %v2306
        %v2826 = vunpack.c.l.b16 %v2307
        %v2827 = vunpack.c.l.b16 %v2308
        %v2828 = vunpack.c.l.b16 %v2309
        %v2829 = vunpack.c.l.b16 %v2310
        %v2830 = vunpack.c.l.b16 %v2311
        %v2831 = vunpack.c.l.b16 %v2312
        %v2832 = vunpack.c.l.b16 %v2313
        %v2833 = vunpack.c.l.b16 %v2314
        %v2834 = vunpack.c.l.b16 %v2315
        %v2835 = vunpack.c.l.b16 %v2316
        %v2836 = vunpack.c.l.b16 %v2317
        %v2837 = vunpack.c.l.b16 %v2318
        %v2838 = vunpack.c.l.b16 %v2319
        %v2839 = vunpack.c.l.b16 %v2320
        %v2840 = vunpack.c.l.b16 %v2321
        %v2841 = vunpack.c.l.b16 %v2322
        %v2842 = vunpack.c.l.b16 %v2323
        %v2843 = vunpack.c.l.b16 %v2324
        %v2844 = vunpack.c.l.b16 %v2325
        %v2845 = vunpack.c.l.b16 %v2326
        %v2846 = vunpack.c.l.b16 %v2327
        %v2847 = vunpack.c.l.b16 %v2328
        %v2848 = vunpack.c.l.b16 %v2329
        %v2849 = vunpack.c.l.b16 %v2330
        %v2850 = vunpack.c.l.b16 %v2331
        %v2851 = vunpack.c.l.b16 %v2332
        %v2852 = vunpack.c.l.b16 %v2333
        %v2853 = vunpack.c.l.b16 %v2334
        %v2854 = vunpack.c.l.b16 %v2335
        %v2855 = vunpack.c.l.b16 %v2336
        %v2856 = vunpack.c.l.b16 %v2337
        %v2857 = vunpack.c.l.b16 %v2338
        %v2858 = vunpack.c.l.b16 %v2339
        %v2859 = vunpack.c.l.b16 %v2340
        %v2860 = vunpack.c.l.b16 %v2341
        %v2861 = vunpack.c.l.b16 %v2342
        %v2862 = vunpack.c.l.b16 %v2343
        %v2863 = vunpack.c.l.b16 %v2344
        %v2864 = vunpack.c.l.b16 %v2345
        %v2865 = vunpack.c.l.b16 %v2346
        %v2866 = vunpack.c.l.b16 %v2347
        %v2867 = vunpack.c.l.b16 %v2348
        %v2868 = vunpack.c.l.b16 %v2349
        %v2869 = vunpack.c.l.b16 %v2350
        %v2870 = vunpack.c.l.b16 %v2351
        %v2871 = vunpack.c.l.b16 %v2352
        %v2872 = vunpack.c.l.b16 %v2353
        %v2873 = vunpack.c.l.b16 %v2354
        %v2874 = vunpack.c.l.b16 %v2355
        %v2875 = vunpack.c.l.b16 %v2356
        %v2876 = vunpack.c.l.b16 %v2357
        %v2877 = vunpack.c.l.b16 %v2358
        %v2878 = vunpack.c.l.b16 %v2359
        %v2879 = vunpack.c.l.b16 %v2360
        %v2880 = vunpack.c.l.b16 %v2361
        %v2881 = vunpack.c.l.b16 %v2362
        %v2882 = vunpack.c.l.b16 %v2363
        %v2883 = vunpack.c.l.b16 %v2364
        %v2884 = vunpack.c.l.b16 %v2365
        %v2885 = vunpack.c.l.b16 %v2366
        %v2886 = vunpack.c.l.b16 %v2367
        %v2887 = vunpack.c.l.b16 %v2368
        %v2888 = vunpack.c.l.b16 %v2369
        %v2889 = vunpack.c.l.b16 %v2370
        %v2890 = vunpack.c.l.b16 %v2371
        %v2891 = vunpack.c.l.b16 %v2372
        %v2892 = vunpack.c.l.b16 %v2373
        %v2893 = vunpack.c.l.b16 %v2374
        %v2894 = vunpack.c.l.b16 %v2375
        %v2895 = vunpack.c.l.b16 %v2376
        %v2896 = vunpack.c.l.b16 %v2377
        %v2897 = vunpack.c.l.b16 %v2378
        %v2898 = vunpack.c.l.b16 %v2379
        %v2899 = vunpack.c.l.b16 %v2380
        %v2900 = vunpack.c.l.b16 %v2381
        %v2901 = vunpack.c.l.b16 %v2382
        %v2902 = vunpack.c.l.b16 %v2383
        %v2903 = vunpack.c.l.b16 %v2384
        %v2904 = vunpack.c.l.b16 %v2385
        %v2905 = vunpack.c.l.b16 %v2386
        %v2906 = vunpack.c.l.b16 %v2387
        %v2907 = vunpack.c.l.b16 %v2388
        %v2908 = vunpack.c.l.b16 %v2389
        %v2909 = vunpack.c.l.b16 %v2390
        %v2910 = vunpack.c.l.b16 %v2391
        %v2911 = vunpack.c.l.b16 %v2392
        %v2912 = vunpack.c.l.b16 %v2393
        %v2913 = vunpack.c.l.b16 %v2394
        %v2914 = vunpack.c.l.b16 %v2395
        %v2915 = vunpack.c.l.b16 %v2396
        %v2916 = vunpack.c.l.b16 %v2397
        %v2917 = vunpack.c.l.b16 %v2398
        %v2918 = vunpack.c.l.b16 %v2399
        %v2919 = vunpack.c.l.b16 %v2400
        %v2920 = vunpack.c.l.b16 %v2401
        %v2921 = vunpack.c.l.b16 %v2402
        %v2922 = vunpack.c.l.b16 %v2403
        %v2923 = vunpack.c.l.b16 %v2404
        %v2924 = vunpack.c.l.b16 %v2405
        %v2925 = vunpack.c.l.b16 %v2406
        %v2926 = vunpack.c.l.b16 %v2407
        %v2927 = vunpack.c.l.b16 %v2408
        %v2928 = vunpack.c.l.b16 %v2409
        %v2929 = vunpack.c.l.b16 %v2410
        %v2930 = vunpack.c.l.b16 %v2411
        %v2931 = vunpack.c.l.b16 %v2412
        %v2932 = vunpack.c.l.b16 %v2413
        %v2933 = vunpack.c.l.b16 %v2414
        %v2934 = vunpack.c.l.b16 %v2415
        %v2935 = vunpack.c.l.b16 %v2416
        %v2936 = vunpack.c.l.b16 %v2417
        %v2937 = vunpack.c.l.b16 %v2418
        %v2938 = vunpack.c.l.b16 %v2419
        %v2939 = vunpack.c.l.b16 %v2420
        %v2940 = vunpack.c.l.b16 %v2421
        %v2941 = vunpack.c.l.b16 %v2422
        %v2942 = vunpack.c.l.b16 %v2423
        %v2943 = vunpack.c.l.b16 %v2424
        %v2944 = vunpack.c.l.b16 %v2425
        %v2945 = vunpack.c.l.b16 %v2426
        %v2946 = vunpack.c.l.b16 %v2427
        %v2947 = vunpack.c.l.b16 %v2428
        %v2948 = vunpack.c.l.b16 %v2429
        %v2949 = vunpack.c.l.b16 %v2430
        %v2950 = vunpack.c.l.b16 %v2431
        %v2951 = vunpack.c.l.b16 %v2432
        %v2952 = vunpack.c.l.b16 %v2433
        %v2953 = vunpack.c.l.b16 %v2434
        %v2954 = vunpack.c.l.b16 %v2435
        %v2955 = vunpack.c.l.b16 %v2436
        %v2956 = vunpack.c.l.b16 %v2437
        %v2957 = vunpack.c.l.b16 %v2438
        %v2958 = vunpack.c.l.b16 %v2439
        %v2959 = vunpack.c.l.b16 %v2440
        %v2960 = vunpack.c.l.b16 %v2441
        %v2961 = vunpack.c.l.b16 %v2442
        %v2962 = vpack.c.b16 %v2707, %v2706
        %v2963 = vpack.c.b16 %v2709, %v2708
        %v2964 = vpack.c.b16 %v2711, %v2710
        %v2965 = vpack.c.b16 %v2713, %v2712
        %v2966 = vpack.c.b16 %v2715, %v2714
        %v2967 = vpack.c.b16 %v2717, %v2716
        %v2968 = vpack.c.b16 %v2719, %v2718
        %v2969 = vpack.c.b16 %v2721, %v2720
        %v2970 = vpack.c.b16 %v2723, %v2722
        %v2971 = vpack.c.b16 %v2725, %v2724
        %v2972 = vpack.c.b16 %v2727, %v2726
        %v2973 = vpack.c.b16 %v2729, %v2728
        %v2974 = vpack.c.b16 %v2731, %v2730
        %v2975 = vpack.c.b16 %v2733, %v2732
        %v2976 = vpack.c.b16 %v2735, %v2734
        %v2977 = vpack.c.b16 %v2737, %v2736
        %v2978 = vpack.c.b16 %v2739, %v2738
        %v2979 = vpack.c.b16 %v2741, %v2740
        %v2980 = vpack.c.b16 %v2743, %v2742
        %v2981 = vpack.c.b16 %v2745, %v2744
        %v2982 = vpack.c.b16 %v2747, %v2746
        %v2983 = vpack.c.b16 %v2749, %v2748
        %v2984 = vpack.c.b16 %v2751, %v2750
        %v2985 = vpack.c.b16 %v2753, %v2752
        %v2986 = vpack.c.b16 %v2755, %v2754
        %v2987 = vpack.c.b16 %v2757, %v2756
        %v2988 = vpack.c.b16 %v2759, %v2758
        %v2989 = vpack.c.b16 %v2761, %v2760
        %v2990 = vpack.c.b16 %v2763, %v2762
        %v2991 = vpack.c.b16 %v2765, %v2764
        %v2992 = vpack.c.b16 %v2767, %v2766
        %v2993 = vpack.c.b16 %v2769, %v2768
        %v2994 = vpack.c.b16 %v2771, %v2770
        %v2995 = vpack.c.b16 %v2773, %v2772
        %v2996 = vpack.c.b16 %v2775, %v2774
        %v2997 = vpack.c.b16 %v2777, %v2776
        %v2998 = vpack.c.b16 %v2779, %v2778
        %v2999 = vpack.c.b16 %v2781, %v2780
        %v3000 = vpack.c.b16 %v2783, %v2782
        %v3001 = vpack.c.b16 %v2785, %v2784
        %v3002 = vpack.c.b16 %v2787, %v2786
        %v3003 = vpack.c.b16 %v2789, %v2788
        %v3004 = vpack.c.b16 %v2791, %v2790
        %v3005 = vpack.c.b16 %v2793, %v2792
        %v3006 = vpack.c.b16 %v2795, %v2794
        %v3007 = vpack.c.b16 %v2797, %v2796
        %v3008 = vpack.c.b16 %v2799, %v2798
        %v3009 = vpack.c.b16 %v2801, %v2800
        %v3010 = vpack.c.b16 %v2803, %v2802
        %v3011 = vpack.c.b16 %v2805, %v2804
        %v3012 = vpack.c.b16 %v2807, %v2806
        %v3013 = vpack.c.b16 %v2809, %v2808
        %v3014 = vpack.c.b16 %v2811, %v2810
        %v3015 = vpack.c.b16 %v2813, %v2812
        %v3016 = vpack.c.b16 %v2815, %v2814
        %v3017 = vpack.c.b16 %v2817, %v2816
        %v3018 = vpack.c.b16 %v2819, %v2818
        %v3019 = vpack.c.b16 %v2821, %v2820
        %v3020 = vpack.c.b16 %v2823, %v2822
        %v3021 = vpack.c.b16 %v2825, %v2824
        %v3022 = vpack.c.b16 %v2827, %v2826
        %v3023 = vpack.c.b16 %v2829, %v2828
        %v3024 = vpack.c.b16 %v2831, %v2830
        %v3025 = vpack.c.b16 %v2833, %v2832
        %v3026 = vpack.c.b16 %v2835, %v2834
        %v3027 = vpack.c.b16 %v2837, %v2836
        %v3028 = vpack.c.b16 %v2839, %v2838
        %v3029 = vpack.c.b16 %v2841, %v2840
        %v3030 = vpack.c.b16 %v2843, %v2842
        %v3031 = vpack.c.b16 %v2845, %v2844
        %v3032 = vpack.c.b16 %v2847, %v2846
        %v3033 = vpack.c.b16 %v2849, %v2848
        %v3034 = vpack.c.b16 %v2851, %v2850
        %v3035 = vpack.c.b16 %v2853, %v2852
        %v3036 = vpack.c.b16 %v2855, %v2854
        %v3037 = vpack.c.b16 %v2857, %v2856
        %v3038 = vpack.c.b16 %v2859, %v2858
        %v3039 = vpack.c.b16 %v2861, %v2860
        %v3040 = vpack.c.b16 %v2863, %v2862
        %v3041 = vpack.c.b16 %v2865, %v2864
        %v3042 = vpack.c.b16 %v2867, %v2866
        %v3043 = vpack.c.b16 %v2869, %v2868
        %v3044 = vpack.c.b16 %v2871, %v2870
        %v3045 = vpack.c.b16 %v2873, %v2872
        %v3046 = vpack.c.b16 %v2875, %v2874
        %v3047 = vpack.c.b16 %v2877, %v2876
        %v3048 = vpack.c.b16 %v2879, %v2878
        %v3049 = vpack.c.b16 %v2881, %v2880
        %v3050 = vpack.c.b16 %v2883, %v2882
        %v3051 = vpack.c.b16 %v2885, %v2884
        %v3052 = vpack.c.b16 %v2887, %v2886
        %v3053 = vpack.c.b16 %v2889, %v2888
        %v3054 = vpack.c.b16 %v2891, %v2890
        %v3055 = vpack.c.b16 %v2893, %v2892
        %v3056 = vpack.c.b16 %v2895, %v2894
        %v3057 = vpack.c.b16 %v2897, %v2896
        %v3058 = vpack.c.b16 %v2899, %v2898
        %v3059 = vpack.c.b16 %v2901, %v2900
        %v3060 = vpack.c.b16 %v2903, %v2902
        %v3061 = vpack.c.b16 %v2905, %v2904
        %v3062 = vpack.c.b16 %v2907, %v2906
        %v3063 = vpack.c.b16 %v2909, %v2908
        %v3064 = vpack.c.b16 %v2911, %v2910
        %v3065 = vpack.c.b16 %v2913, %v2912
        %v3066 = vpack.c.b16 %v2915, %v2914
        %v3067 = vpack.c.b16 %v2917, %v2916
        %v3068 = vpack.c.b16 %v2919, %v2918
        %v3069 = vpack.c.b16 %v2921, %v2920
        %v3070 = vpack.c.b16 %v2923, %v2922
        %v3071 = vpack.c.b16 %v2925, %v2924
        %v3072 = vpack.c.b16 %v2927, %v2926
        %v3073 = vpack.c.b16 %v2929, %v2928
        %v3074 = vpack.c.b16 %v2931, %v2930
        %v3075 = vpack.c.b16 %v2933, %v2932
        %v3076 = vpack.c.b16 %v2935, %v2934
        %v3077 = vpack.c.b16 %v2937, %v2936
        %v3078 = vpack.c.b16 %v2939, %v2938
        %v3079 = vpack.c.b16 %v2941, %v2940
        %v3080 = vpack.c.b16 %v2943, %v2942
        %v3081 = vpack.c.b16 %v2945, %v2944
        %v3082 = vpack.c.b16 %v2947, %v2946
        %v3083 = vpack.c.b16 %v2949, %v2948
        %v3084 = vpack.c.b16 %v2951, %v2950
        %v3085 = vpack.c.b16 %v2953, %v2952
        %v3086 = vpack.c.b16 %v2955, %v2954
        %v3087 = vpack.c.b16 %v2957, %v2956
        %v3088 = vpack.c.b16 %v2959, %v2958
        %v3089 = vpack.c.b16 %v2961, %v2960
        %3218 = vmatprep.subr.bf16.mxu0 0
        %3219 = vmatpush1.bf16.msra.mxu0 %v2962
        %3220 = vmatprep.subr.bf16.mxu0 0
        %3221 = vmatpush1.bf16.msra.mxu0 %v2963
        %3222 = vmatprep.subr.bf16.mxu0 0
        %3223 = vmatpush1.bf16.msra.mxu0 %v2964
        %3224 = vmatprep.subr.bf16.mxu0 0
        %3225 = vmatpush1.bf16.msra.mxu0 %v2965
        %3226 = vmatprep.subr.bf16.mxu0 0
        %3227 = vmatpush1.bf16.msra.mxu0 %v2966
        %3228 = vmatprep.subr.bf16.mxu0 0
        %3229 = vmatpush1.bf16.msra.mxu0 %v2967
        %3230 = vmatprep.subr.bf16.mxu0 0
        %3231 = vmatpush1.bf16.msra.mxu0 %v2968
        %3232 = vmatprep.subr.bf16.mxu0 0
        %3233 = vmatpush1.bf16.msra.mxu0 %v2969
        %3234 = vmatprep.subr.bf16.mxu0 0
        %3235 = vmatpush1.bf16.msra.mxu0 %v2970
        %3236 = vmatprep.subr.bf16.mxu0 0
        %3237 = vmatpush1.bf16.msra.mxu0 %v2971
        %3238 = vmatprep.subr.bf16.mxu0 0
        %3239 = vmatpush1.bf16.msra.mxu0 %v2972
        %3240 = vmatprep.subr.bf16.mxu0 0
        %3241 = vmatpush1.bf16.msra.mxu0 %v2973
        %3242 = vmatprep.subr.bf16.mxu0 0
        %3243 = vmatpush1.bf16.msra.mxu0 %v2974
        %3244 = vmatprep.subr.bf16.mxu0 0
        %3245 = vmatpush1.bf16.msra.mxu0 %v2975
        %3246 = vmatprep.subr.bf16.mxu0 0
        %3247 = vmatpush1.bf16.msra.mxu0 %v2976
        %3248 = vmatprep.subr.bf16.mxu0 0
        %3249 = vmatpush1.bf16.msra.mxu0 %v2977
        %3250 = vmatprep.mubr.bf16.mxu0 %v2172
        %3251 = vmatmul.mubr.bf16.gmra.mrb[0].mxu0 %v2171
        %v3252 = vpop.f32.mrb[0].mxu0
        %v3253 = vadd.f32 %v2448, %v3252
        %v3254 = vpop.f32.mrb[0].mxu0
        %v3255 = vpop.f32.mrb[0].mxu0
        %v3256 = vadd.f32 %v2448, %v3255
        %v3257 = vpop.f32.mrb[0].mxu0
        %3258 = vdwg.mxu0
        %3259 = vmatprep.subr.bf16.mxu0 0
        %3260 = vmatpush1.bf16.msra.mxu0 %v2978
        %3261 = vmatprep.subr.bf16.mxu0 0
        %3262 = vmatpush1.bf16.msra.mxu0 %v2979
        %3263 = vmatprep.subr.bf16.mxu0 0
        %3264 = vmatpush1.bf16.msra.mxu0 %v2980
        %3265 = vmatprep.subr.bf16.mxu0 0
        %3266 = vmatpush1.bf16.msra.mxu0 %v2981
        %3267 = vmatprep.subr.bf16.mxu0 0
        %3268 = vmatpush1.bf16.msra.mxu0 %v2982
        %3269 = vmatprep.subr.bf16.mxu0 0
        %3270 = vmatpush1.bf16.msra.mxu0 %v2983
        %3271 = vmatprep.subr.bf16.mxu0 0
        %3272 = vmatpush1.bf16.msra.mxu0 %v2984
        %3273 = vmatprep.subr.bf16.mxu0 0
        %3274 = vmatpush1.bf16.msra.mxu0 %v2985
        %3275 = vmatprep.subr.bf16.mxu0 0
        %3276 = vmatpush1.bf16.msra.mxu0 %v2986
        %3277 = vmatprep.subr.bf16.mxu0 0
        %3278 = vmatpush1.bf16.msra.mxu0 %v2987
        %3279 = vmatprep.subr.bf16.mxu0 0
        %3280 = vmatpush1.bf16.msra.mxu0 %v2988
        %3281 = vmatprep.subr.bf16.mxu0 0
        %3282 = vmatpush1.bf16.msra.mxu0 %v2989
        %3283 = vmatprep.subr.bf16.mxu0 0
        %3284 = vmatpush1.bf16.msra.mxu0 %v2990
        %3285 = vmatprep.subr.bf16.mxu0 0
        %3286 = vmatpush1.bf16.msra.mxu0 %v2991
        %3287 = vmatprep.subr.bf16.mxu0 0
        %3288 = vmatpush1.bf16.msra.mxu0 %v2992
        %3289 = vmatprep.subr.bf16.mxu0 0
        %3290 = vmatpush1.bf16.msra.mxu0 %v2993
        %3291 = vmatprep.mubr.bf16.mxu0 %v2174
        %3292 = vmatmul.mubr.bf16.gmra.mrb[0].mxu0 %v2173
        %v3293 = vpop.f32.mrb[0].mxu0
        %v3294 = vadd.f32 %v3253, %v3293
        %v3295 = vpop.f32.mrb[0].mxu0
        %v3296 = vpop.f32.mrb[0].mxu0
        %v3297 = vadd.f32 %v3256, %v3296
        %v3298 = vpop.f32.mrb[0].mxu0
        %3299 = vdwg.mxu0
        %3300 = vmatprep.subr.bf16.mxu0 0
        %3301 = vmatpush1.bf16.msra.mxu0 %v2994
        %3302 = vmatprep.subr.bf16.mxu0 0
        %3303 = vmatpush1.bf16.msra.mxu0 %v2995
        %3304 = vmatprep.subr.bf16.mxu0 0
        %3305 = vmatpush1.bf16.msra.mxu0 %v2996
        %3306 = vmatprep.subr.bf16.mxu0 0
        %3307 = vmatpush1.bf16.msra.mxu0 %v2997
        %3308 = vmatprep.subr.bf16.mxu0 0
        %3309 = vmatpush1.bf16.msra.mxu0 %v2998
        %3310 = vmatprep.subr.bf16.mxu0 0
        %3311 = vmatpush1.bf16.msra.mxu0 %v2999
        %3312 = vmatprep.subr.bf16.mxu0 0
        %3313 = vmatpush1.bf16.msra.mxu0 %v3000
        %3314 = vmatprep.subr.bf16.mxu0 0
        %3315 = vmatpush1.bf16.msra.mxu0 %v3001
        %3316 = vmatprep.subr.bf16.mxu0 0
        %3317 = vmatpush1.bf16.msra.mxu0 %v3002
        %3318 = vmatprep.subr.bf16.mxu0 0
        %3319 = vmatpush1.bf16.msra.mxu0 %v3003
        %3320 = vmatprep.subr.bf16.mxu0 0
        %3321 = vmatpush1.bf16.msra.mxu0 %v3004
        %3322 = vmatprep.subr.bf16.mxu0 0
        %3323 = vmatpush1.bf16.msra.mxu0 %v3005
        %3324 = vmatprep.subr.bf16.mxu0 0
        %3325 = vmatpush1.bf16.msra.mxu0 %v3006
        %3326 = vmatprep.subr.bf16.mxu0 0
        %3327 = vmatpush1.bf16.msra.mxu0 %v3007
        %3328 = vmatprep.subr.bf16.mxu0 0
        %3329 = vmatpush1.bf16.msra.mxu0 %v3008
        %3330 = vmatprep.subr.bf16.mxu0 0
        %3331 = vmatpush1.bf16.msra.mxu0 %v3009
        %3332 = vmatprep.mubr.bf16.mxu0 %v2176
        %3333 = vmatmul.mubr.bf16.gmra.mrb[0].mxu0 %v2175
        %v3334 = vpop.f32.mrb[0].mxu0
        %v3335 = vadd.f32 %v3294, %v3334
        %v3336 = vpop.f32.mrb[0].mxu0
        %v3337 = vpop.f32.mrb[0].mxu0
        %v3338 = vadd.f32 %v3297, %v3337
        %v3339 = vpop.f32.mrb[0].mxu0
        %3340 = vdwg.mxu0
        %3341 = vmatprep.subr.bf16.mxu0 0
        %3342 = vmatpush1.bf16.msra.mxu0 %v3010
        %3343 = vmatprep.subr.bf16.mxu0 0
        %3344 = vmatpush1.bf16.msra.mxu0 %v3011
        %3345 = vmatprep.subr.bf16.mxu0 0
        %3346 = vmatpush1.bf16.msra.mxu0 %v3012
        %3347 = vmatprep.subr.bf16.mxu0 0
        %3348 = vmatpush1.bf16.msra.mxu0 %v3013
        %3349 = vmatprep.subr.bf16.mxu0 0
        %3350 = vmatpush1.bf16.msra.mxu0 %v3014
        %3351 = vmatprep.subr.bf16.mxu0 0
        %3352 = vmatpush1.bf16.msra.mxu0 %v3015
        %3353 = vmatprep.subr.bf16.mxu0 0
        %3354 = vmatpush1.bf16.msra.mxu0 %v3016
        %3355 = vmatprep.subr.bf16.mxu0 0
        %3356 = vmatpush1.bf16.msra.mxu0 %v3017
        %3357 = vmatprep.subr.bf16.mxu0 0
        %3358 = vmatpush1.bf16.msra.mxu0 %v3018
        %3359 = vmatprep.subr.bf16.mxu0 0
        %3360 = vmatpush1.bf16.msra.mxu0 %v3019
        %3361 = vmatprep.subr.bf16.mxu0 0
        %3362 = vmatpush1.bf16.msra.mxu0 %v3020
        %3363 = vmatprep.subr.bf16.mxu0 0
        %3364 = vmatpush1.bf16.msra.mxu0 %v3021
        %3365 = vmatprep.subr.bf16.mxu0 0
        %3366 = vmatpush1.bf16.msra.mxu0 %v3022
        %3367 = vmatprep.subr.bf16.mxu0 0
        %3368 = vmatpush1.bf16.msra.mxu0 %v3023
        %3369 = vmatprep.subr.bf16.mxu0 0
        %3370 = vmatpush1.bf16.msra.mxu0 %v3024
        %3371 = vmatprep.subr.bf16.mxu0 0
        %3372 = vmatpush1.bf16.msra.mxu0 %v3025
        %3373 = vmatprep.mubr.bf16.mxu0 %v2178
        %3374 = vmatmul.mubr.bf16.gmra.mrb[0].mxu0 %v2177
        %v3375 = vpop.f32.mrb[0].mxu0
        %v3376 = vadd.f32 %v3335, %v3375
        %v3377 = vpop.f32.mrb[0].mxu0
        %v3378 = vpop.f32.mrb[0].mxu0
        %v3379 = vadd.f32 %v3338, %v3378
        %v3380 = vpop.f32.mrb[0].mxu0
        %3381 = vdwg.mxu0
        %3382 = vmatprep.subr.bf16.mxu0 0
        %3383 = vmatpush1.bf16.msra.mxu0 %v3026
        %3384 = vmatprep.subr.bf16.mxu0 0
        %3385 = vmatpush1.bf16.msra.mxu0 %v3027
        %3386 = vmatprep.subr.bf16.mxu0 0
        %3387 = vmatpush1.bf16.msra.mxu0 %v3028
        %3388 = vmatprep.subr.bf16.mxu0 0
        %3389 = vmatpush1.bf16.msra.mxu0 %v3029
        %3390 = vmatprep.subr.bf16.mxu0 0
        %3391 = vmatpush1.bf16.msra.mxu0 %v3030
        %3392 = vmatprep.subr.bf16.mxu0 0
        %3393 = vmatpush1.bf16.msra.mxu0 %v3031
        %3394 = vmatprep.subr.bf16.mxu0 0
        %3395 = vmatpush1.bf16.msra.mxu0 %v3032
        %3396 = vmatprep.subr.bf16.mxu0 0
        %3397 = vmatpush1.bf16.msra.mxu0 %v3033
        %3398 = vmatprep.subr.bf16.mxu0 0
        %3399 = vmatpush1.bf16.msra.mxu0 %v3034
        %3400 = vmatprep.subr.bf16.mxu0 0
        %3401 = vmatpush1.bf16.msra.mxu0 %v3035
        %3402 = vmatprep.subr.bf16.mxu0 0
        %3403 = vmatpush1.bf16.msra.mxu0 %v3036
        %3404 = vmatprep.subr.bf16.mxu0 0
        %3405 = vmatpush1.bf16.msra.mxu0 %v3037
        %3406 = vmatprep.subr.bf16.mxu0 0
        %3407 = vmatpush1.bf16.msra.mxu0 %v3038
        %3408 = vmatprep.subr.bf16.mxu0 0
        %3409 = vmatpush1.bf16.msra.mxu0 %v3039
        %3410 = vmatprep.subr.bf16.mxu0 0
        %3411 = vmatpush1.bf16.msra.mxu0 %v3040
        %3412 = vmatprep.subr.bf16.mxu0 0
        %3413 = vmatpush1.bf16.msra.mxu0 %v3041
        %3414 = vmatprep.mubr.bf16.mxu0 %v2180
        %3415 = vmatmul.mubr.bf16.gmra.mrb[0].mxu0 %v2179
        %v3416 = vpop.f32.mrb[0].mxu0
        %v3417 = vadd.f32 %v3376, %v3416
        %v3418 = vpop.f32.mrb[0].mxu0
        %v3419 = vpop.f32.mrb[0].mxu0
        %v3420 = vadd.f32 %v3379, %v3419
        %v3421 = vpop.f32.mrb[0].mxu0
        %3422 = vdwg.mxu0
        %3423 = vmatprep.subr.bf16.mxu0 0
        %3424 = vmatpush1.bf16.msra.mxu0 %v3042
        %3425 = vmatprep.subr.bf16.mxu0 0
        %3426 = vmatpush1.bf16.msra.mxu0 %v3043
        %3427 = vmatprep.subr.bf16.mxu0 0
        %3428 = vmatpush1.bf16.msra.mxu0 %v3044
        %3429 = vmatprep.subr.bf16.mxu0 0
        %3430 = vmatpush1.bf16.msra.mxu0 %v3045
        %3431 = vmatprep.subr.bf16.mxu0 0
        %3432 = vmatpush1.bf16.msra.mxu0 %v3046
        %3433 = vmatprep.subr.bf16.mxu0 0
        %3434 = vmatpush1.bf16.msra.mxu0 %v3047
        %3435 = vmatprep.subr.bf16.mxu0 0
        %3436 = vmatpush1.bf16.msra.mxu0 %v3048
        %3437 = vmatprep.subr.bf16.mxu0 0
        %3438 = vmatpush1.bf16.msra.mxu0 %v3049
        %3439 = vmatprep.subr.bf16.mxu0 0
        %3440 = vmatpush1.bf16.msra.mxu0 %v3050
        %3441 = vmatprep.subr.bf16.mxu0 0
        %3442 = vmatpush1.bf16.msra.mxu0 %v3051
        %3443 = vmatprep.subr.bf16.mxu0 0
        %3444 = vmatpush1.bf16.msra.mxu0 %v3052
        %3445 = vmatprep.subr.bf16.mxu0 0
        %3446 = vmatpush1.bf16.msra.mxu0 %v3053
        %3447 = vmatprep.subr.bf16.mxu0 0
        %3448 = vmatpush1.bf16.msra.mxu0 %v3054
        %3449 = vmatprep.subr.bf16.mxu0 0
        %3450 = vmatpush1.bf16.msra.mxu0 %v3055
        %3451 = vmatprep.subr.bf16.mxu0 0
        %3452 = vmatpush1.bf16.msra.mxu0 %v3056
        %3453 = vmatprep.subr.bf16.mxu0 0
        %3454 = vmatpush1.bf16.msra.mxu0 %v3057
        %3455 = vmatprep.mubr.bf16.mxu0 %v2182
        %3456 = vmatmul.mubr.bf16.gmra.mrb[0].mxu0 %v2181
        %v3457 = vpop.f32.mrb[0].mxu0
        %v3458 = vadd.f32 %v3417, %v3457
        %v3459 = vpop.f32.mrb[0].mxu0
        %v3460 = vpop.f32.mrb[0].mxu0
        %v3461 = vadd.f32 %v3420, %v3460
        %v3462 = vpop.f32.mrb[0].mxu0
        %3463 = vdwg.mxu0
        %3464 = vmatprep.subr.bf16.mxu0 0
        %3465 = vmatpush1.bf16.msra.mxu0 %v3058
        %3466 = vmatprep.subr.bf16.mxu0 0
        %3467 = vmatpush1.bf16.msra.mxu0 %v3059
        %3468 = vmatprep.subr.bf16.mxu0 0
        %3469 = vmatpush1.bf16.msra.mxu0 %v3060
        %3470 = vmatprep.subr.bf16.mxu0 0
        %3471 = vmatpush1.bf16.msra.mxu0 %v3061
        %3472 = vmatprep.subr.bf16.mxu0 0
        %3473 = vmatpush1.bf16.msra.mxu0 %v3062
        %3474 = vmatprep.subr.bf16.mxu0 0
        %3475 = vmatpush1.bf16.msra.mxu0 %v3063
        %3476 = vmatprep.subr.bf16.mxu0 0
        %3477 = vmatpush1.bf16.msra.mxu0 %v3064
        %3478 = vmatprep.subr.bf16.mxu0 0
        %3479 = vmatpush1.bf16.msra.mxu0 %v3065
        %3480 = vmatprep.subr.bf16.mxu0 0
        %3481 = vmatpush1.bf16.msra.mxu0 %v3066
        %3482 = vmatprep.subr.bf16.mxu0 0
        %3483 = vmatpush1.bf16.msra.mxu0 %v3067
        %3484 = vmatprep.subr.bf16.mxu0 0
        %3485 = vmatpush1.bf16.msra.mxu0 %v3068
        %3486 = vmatprep.subr.bf16.mxu0 0
        %3487 = vmatpush1.bf16.msra.mxu0 %v3069
        %3488 = vmatprep.subr.bf16.mxu0 0
        %3489 = vmatpush1.bf16.msra.mxu0 %v3070
        %3490 = vmatprep.subr.bf16.mxu0 0
        %3491 = vmatpush1.bf16.msra.mxu0 %v3071
        %3492 = vmatprep.subr.bf16.mxu0 0
        %3493 = vmatpush1.bf16.msra.mxu0 %v3072
        %3494 = vmatprep.subr.bf16.mxu0 0
        %3495 = vmatpush1.bf16.msra.mxu0 %v3073
        %3496 = vmatprep.mubr.bf16.mxu0 %v2184
        %3497 = vmatmul.mubr.bf16.gmra.mrb[0].mxu0 %v2183
        %v3498 = vpop.f32.mrb[0].mxu0
        %v3499 = vadd.f32 %v3458, %v3498
        %v3500 = vpop.f32.mrb[0].mxu0
        %v3501 = vpop.f32.mrb[0].mxu0
        %v3502 = vadd.f32 %v3461, %v3501
        %v3503 = vpop.f32.mrb[0].mxu0
        %3504 = vdwg.mxu0
        %3505 = vmatprep.subr.bf16.mxu0 0
        %3506 = vmatpush1.bf16.msra.mxu0 %v3074
        %3507 = vmatprep.subr.bf16.mxu0 0
        %3508 = vmatpush1.bf16.msra.mxu0 %v3075
        %3509 = vmatprep.subr.bf16.mxu0 0
        %3510 = vmatpush1.bf16.msra.mxu0 %v3076
        %3511 = vmatprep.subr.bf16.mxu0 0
        %3512 = vmatpush1.bf16.msra.mxu0 %v3077
        %3513 = vmatprep.subr.bf16.mxu0 0
        %3514 = vmatpush1.bf16.msra.mxu0 %v3078
        %3515 = vmatprep.subr.bf16.mxu0 0
        %3516 = vmatpush1.bf16.msra.mxu0 %v3079
        %3517 = vmatprep.subr.bf16.mxu0 0
        %3518 = vmatpush1.bf16.msra.mxu0 %v3080
        %3519 = vmatprep.subr.bf16.mxu0 0
        %3520 = vmatpush1.bf16.msra.mxu0 %v3081
        %3521 = vmatprep.subr.bf16.mxu0 0
        %3522 = vmatpush1.bf16.msra.mxu0 %v3082
        %3523 = vmatprep.subr.bf16.mxu0 0
        %3524 = vmatpush1.bf16.msra.mxu0 %v3083
        %3525 = vmatprep.subr.bf16.mxu0 0
        %3526 = vmatpush1.bf16.msra.mxu0 %v3084
        %3527 = vmatprep.subr.bf16.mxu0 0
        %3528 = vmatpush1.bf16.msra.mxu0 %v3085
        %3529 = vmatprep.subr.bf16.mxu0 0
        %3530 = vmatpush1.bf16.msra.mxu0 %v3086
        %3531 = vmatprep.subr.bf16.mxu0 0
        %3532 = vmatpush1.bf16.msra.mxu0 %v3087
        %3533 = vmatprep.subr.bf16.mxu0 0
        %3534 = vmatpush1.bf16.msra.mxu0 %v3088
        %3535 = vmatprep.subr.bf16.mxu0 0
        %3536 = vmatpush1.bf16.msra.mxu0 %v3089
        %3537 = vmatprep.mubr.bf16.mxu0 %v2186
        %3538 = vmatmul.mubr.bf16.gmra.mrb[0].mxu0 %v2185
        %v3539 = vpop.f32.mrb[0].mxu0
        %v3540 = vadd.f32 %v3499, %v3539
        %v3541 = vpop.f32.mrb[0].mxu0
        %v3542 = vpop.f32.mrb[0].mxu0
        %v3543 = vadd.f32 %v3502, %v3542
        %v3544 = vpop.f32.mrb[0].mxu0
        %3545 = vdwg.mxu0
        %v3546 = vadd.f32 %v1513, %v3540
        %v3547 = vadd.f32 %v1514, %v3543
        %v3548 = vld [vmem:[%s328 + $0x15] sm:$0x1]
        %v3549 = vld [vmem:[%s328 + $0x16] sm:$0x1]
        %v3550 = vsel %vm426, %v3546, 0.0
        %3551 = vadd.xlane.f32.xlu0 %v3550
        %v3552 = vpop.xlane.xlu0 %3551
        %v3553 = vsel %vm426, %v3547, 0.0
        %3554 = vadd.xlane.f32.xlu0 %v3553
        %v3555 = vpop.xlane.xlu0 %3554
        %v3556 = vmul.f32 %v3552, %v1478
        %v3557 = vmul.f32 %v3555, %v1478
        %v3558 = vsub.f32 %v3546, %v3556
        %v3559 = vsub.f32 %v3547, %v3557
        %v3560 = vmul.f32 %v3558, %v3558
        %v3561 = vmul.f32 %v3559, %v3559
        %v3562 = vsel %vm426, %v3560, 0.0
        %3563 = vadd.xlane.f32.xlu0 %v3562
        %v3564 = vpop.xlane.xlu0 %3563
        %v3565 = vsel %vm426, %v3561, 0.0
        %3566 = vadd.xlane.f32.xlu0 %v3565
        %v3567 = vpop.xlane.xlu0 %3566
        %v3568 = vmul.f32 %v3564, %v1478
        %v3569 = vmul.f32 %v3567, %v1478
        %v3570 = vadd.f32 %v3568, 1e-05
        %v3571 = vadd.f32 %v3569, 1e-05
        %v3572 = vrsqrt.pop %v3570
        %v3573 = vrsqrt.pop %v3571
        %v3574 = vmul.f32 %v3558, %v3572
        %v3575 = vmul.f32 %v3559, %v3573
        %v3577 = vlaneseq
        %v3578 = vshrl.u32 %v3577, 7
        %v3579 = vsub.s32 0, %v3578
        %v3580 = vrot.slane %v3548, %v3579
        %v3582 = vmul.f32 %v3574, %v3580
        %v3583 = vmul.f32 %v3575, %v3580
        %v3585 = vlaneseq
        %v3586 = vshrl.u32 %v3585, 7
        %v3587 = vsub.s32 0, %v3586
        %v3588 = vrot.slane %v3549, %v3587
        %v3590 = vadd.f32 %v3582, %v3588
        %v3591 = vadd.f32 %v3583, %v3588
        %3592 = vst.msk [vmem:[#allocation2] sm:$0xff] %vm426, %v3590
        %3593 = vst.msk [vmem:[#allocation2 + $0x8] sm:$0xff] %vm426, %v3591
        // Predicated region
        $region57: #{tpu_custom_call.1} parent=51 // pred_check
          %p3594 = pneg %p216
        $region58: #{tpu_custom_call.1} parent=51 // pred_check_branch
          %3596 = sbr.rel (%p3594) target = $region60
        $region59: #{tpu_custom_call.1} parent=51 // pred_region
          %s3598 = ssub.s32 256, 256
          %3599 = vsyncadd [#allocation3], %s3598
          %s3600 = sshll.u32 [#allocation2], 4
          %s3601 = int_to_ptr.vmem [resolvable:$true] %s3600
          %3606 = dma.vmem_to_hbm [thread:$0]  %s3601, 256, %s8, [#allocation3], 128, 128, 8
        $region60: #{tpu_custom_call.1} parent=51 // pred_fallthru
          _
        // Predicated region
        $region61: #{tpu_custom_call.1} parent=51 // pred_check
          %p3607 = pneg %p216
        $region62: #{tpu_custom_call.1} parent=51 // pred_check_branch
          %3609 = sbr.rel (%p3607) target = $region64
        $region63: #{tpu_custom_call.1} parent=51 // pred_region
          %3610 = dma.done [#allocation3], 256
        $region64: #{tpu_custom_call.1} parent=51 // pred_fallthru
          _
      $region52: #{tpu_custom_call.1} parent=5 // pred_fallthru
        _
      %p3611 = scmp.le.s32.totalorder 2, %s15
      // Predicated region
      $region65: #{tpu_custom_call.1} parent=5 // pred_check
        %p3612 = pneg %p3611
      $region66: #{tpu_custom_call.1} parent=5 // pred_check_branch
        %3614 = sbr.rel (%p3612) target = $region68
      $region67: #{tpu_custom_call.1} parent=5 // pred_region
        %s3615 = ssub.s32 %s15, 2
      $region68: #{tpu_custom_call.1} parent=5 // pred_fallthru
        _
    $region6: #{tpu_custom_call.1} parent=1 // loop_footer
      %s19 = sadd.s32 1, %s15
    $region7: #{tpu_custom_call.1} parent=1 // loop_footer_branch
      %14 = sbr.rel target = $region3
    $region8: #{tpu_custom_call.1} parent=1 // loop_exit
      _
    %3616 = vsyncpa [#allocation3], 1
    %s3617 = scalar_lea.sflag [#allocation3], 1
    %3618 = vsyncpa %s3617, 1

</llo_original>
